<compile_context>
chip_gen: v7x
topology: tpu7x:2x2x1
jax: 0.10.0
libtpu: 0.0.40
codegen_flags: <defaults>
</compile_context>

<pallas_src>
import math

import jax
import jax.numpy as jnp
from jax.experimental import pallas as pl
from jax.experimental.pallas import tpu as pltpu

LN_EPS = 1e-5  # matches torch.nn.LayerNorm default


def encoder_block_kernel(
    zrow_ref,          # [TS, D] f32  query rows / residual stream for this tile
    zall_ref,          # [S,  D] f32  full sequence (for K/V projection)
    wq_ref, bq_ref,    # [D, H*dk] bf16 (pre-scaled by 1/sqrt(dk)), [1, H*dk] f32
    wkv_ref, bkv_ref,  # [D, H*dk + H*dv] bf16, [1, H*dk + H*dv] f32
    wo_ref, bo_ref,    # [H, dv, D] bf16, [1, D] f32
    g1_ref, be1_ref,   # LayerNorm1 gamma/beta: [1, D] f32
    w1_ref, bf1_ref,   # FFN linear1: [D, dff] bf16, [1, dff] f32
    w2_ref, bf2_ref,   # FFN linear2: [dff, D] bf16, [1, D] f32
    g2_ref, be2_ref,   # LayerNorm2 gamma/beta: [1, D] f32
    out_ref,           # [TS, D]
):
    f32 = jnp.float32
    bf16 = jnp.bfloat16

    n_heads, d_v, _ = wo_ref.shape
    d_k = wq_ref.shape[1] // n_heads
    hk = n_heads * d_k

    z_row = zrow_ref[...].astype(f32)   # [TS, D]
    z_all = zall_ref[...].astype(f32)   # [S, D]

    # ---- Fused, lane-dense projections (bf16 operands, f32 accumulate) ----
    # Q already scaled by 1/sqrt(d_k) via weight/bias folding at pack time.
    q_all = jnp.dot(z_row.astype(bf16), wq_ref[...],
                    preferred_element_type=f32) + bq_ref[...]        # [TS, H*dk]
    kv_all = jnp.dot(z_all.astype(bf16), wkv_ref[...],
                     preferred_element_type=f32) + bkv_ref[...]      # [S, H*dk + H*dv]

    # ---- Attention + output projection, accumulated over heads (no concat) ----
    acc = jnp.zeros_like(z_row)                                      # [TS, D] f32
    for h in range(n_heads):
        qh = q_all[:, h * d_k:(h + 1) * d_k].astype(bf16)            # [TS, dk]
        kh = kv_all[:, h * d_k:(h + 1) * d_k].astype(bf16)           # [S, dk]
        vh = kv_all[:, hk + h * d_v: hk + (h + 1) * d_v].astype(bf16)  # [S, dv]

        # q @ k^T without materializing k.T (contract last dims of both).
        s = jax.lax.dot_general(qh, kh, (((1,), (1,)), ((), ())),
                                preferred_element_type=f32)          # [TS, S]
        m = jnp.max(s, axis=-1, keepdims=True)
        p = jnp.exp(s - m)
        p = p * pl.reciprocal(jnp.sum(p, axis=-1, keepdims=True), approx=True)

        oh = jnp.dot(p.astype(bf16), vh, preferred_element_type=f32)  # [TS, dv]
        # Fold the "concat + W_O" into a per-head contraction with wo[h]: [dv, D].
        acc = acc + jnp.dot(oh.astype(bf16), wo_ref[h],
                            preferred_element_type=f32)               # [TS, D]
    mha = acc + bo_ref[...]

    # ---- Residual + LayerNorm 1 (f32) ----
    x1 = z_row + mha
    mu1 = jnp.mean(x1, axis=-1, keepdims=True)
    xc1 = x1 - mu1
    var1 = jnp.mean(xc1 * xc1, axis=-1, keepdims=True)
    ln1 = xc1 * jax.lax.rsqrt(var1 + LN_EPS) * g1_ref[...] + be1_ref[...]

    # ---- Feed-forward network (bf16 matmul operands, f32 accumulate) ----
    h1 = jnp.dot(ln1.astype(bf16), w1_ref[...],
                 preferred_element_type=f32) + bf1_ref[...]
    h1 = jnp.maximum(h1, 0.0)
    ffn = jnp.dot(h1.astype(bf16), w2_ref[...],
                  preferred_element_type=f32) + bf2_ref[...]

    # ---- Residual + LayerNorm 2 (f32) ----
    x2 = ln1 + ffn
    mu2 = jnp.mean(x2, axis=-1, keepdims=True)
    xc2 = x2 - mu2
    var2 = jnp.mean(xc2 * xc2, axis=-1, keepdims=True)
    ln2 = xc2 * jax.lax.rsqrt(var2 + LN_EPS) * g2_ref[...] + be2_ref[...]

    out_ref[...] = ln2.astype(out_ref.dtype)


def encoder_block(z, kp, *, row_tile=None):
    """z: [seq_len, d_model] float32.  kp: packed kernel params (pack_params)."""
    S, D = z.shape

    # Row tile for the (optionally) parallel sequence grid.  At S=32 this is a
    # single tile; for large S it shards rows across TensorCores (v7x).
    if row_tile is None:
        row_tile = 128 if (S % 128 == 0) else S
    assert S % row_tile == 0 and (row_tile % 8 == 0 or row_tile == S)
    grid = (S // row_tile,)

    rows = lambda i: (i, 0)
    pin2 = lambda i: (0, 0)
    pin3 = lambda i: (0, 0, 0)
    full = lambda a, m: pl.BlockSpec(a.shape, m)   # whole (pinned) operand

    in_specs = [
        pl.BlockSpec((row_tile, D), rows),   # z: query rows / residual stream
        pl.BlockSpec((S, D), pin2),          # z: full sequence for K/V projection
        full(kp["wq"], pin2), full(kp["bq"], pin2),
        full(kp["wkv"], pin2), full(kp["bkv"], pin2),
        full(kp["wo"], pin3), full(kp["bo"], pin2),
        full(kp["ln1_g"], pin2), full(kp["ln1_b"], pin2),
        full(kp["w1"], pin2), full(kp["b1"], pin2),
        full(kp["w2"], pin2), full(kp["b2"], pin2),
        full(kp["ln2_g"], pin2), full(kp["ln2_b"], pin2),
    ]

    return pl.pallas_call(
        encoder_block_kernel,
        out_shape=jax.ShapeDtypeStruct((S, D), z.dtype),
        grid=grid,
        in_specs=in_specs,
        out_specs=pl.BlockSpec((row_tile, D), rows),
        compiler_params=pltpu.CompilerParams(dimension_semantics=("parallel",)),
    )(z, z, kp["wq"], kp["bq"], kp["wkv"], kp["bkv"], kp["wo"], kp["bo"],
      kp["ln1_g"], kp["ln1_b"], kp["w1"], kp["b1"], kp["w2"], kp["b2"],
      kp["ln2_g"], kp["ln2_b"])


def init_params(key, d_model, n_heads, d_k, d_v, d_ff):
    """Deterministic synthetic parameters in the module's per-head layout.
    Linear layers are stored as [in, out] matrices (y = x @ W + b)."""
    keys = jax.random.split(key, 12)
    s = 0.02
    return {
        "wq": s * jax.random.normal(keys[0], (n_heads, d_model, d_k), jnp.float32),
        "bq": s * jax.random.normal(keys[1], (n_heads, 1, d_k), jnp.float32),
        "wk": s * jax.random.normal(keys[2], (n_heads, d_model, d_k), jnp.float32),
        "bk": s * jax.random.normal(keys[3], (n_heads, 1, d_k), jnp.float32),
        "wv": s * jax.random.normal(keys[4], (n_heads, d_model, d_v), jnp.float32),
        "bv": s * jax.random.normal(keys[5], (n_heads, 1, d_v), jnp.float32),
        "wo": s * jax.random.normal(keys[6], (n_heads * d_v, d_model), jnp.float32),
        "bo": s * jax.random.normal(keys[7], (1, d_model), jnp.float32),
        "ln1_g": jnp.ones((1, d_model), jnp.float32),
        "ln1_b": jnp.zeros((1, d_model), jnp.float32),
        "w1": s * jax.random.normal(keys[8], (d_model, d_ff), jnp.float32),
        "b1": s * jax.random.normal(keys[9], (1, d_ff), jnp.float32),
        "w2": s * jax.random.normal(keys[10], (d_ff, d_model), jnp.float32),
        "b2": s * jax.random.normal(keys[11], (1, d_model), jnp.float32),
        "ln2_g": jnp.ones((1, d_model), jnp.float32),
        "ln2_b": jnp.zeros((1, d_model), jnp.float32),
    }


def pack_params(p):
    """Re-layout the per-head params into the fused, MXU-friendly kernel layout:
    fused Q / fused K|V weights (bf16, 1/sqrt(dk) folded into Q), fused biases
    (f32), W_O as [H, dv, D] (bf16), FFN weights bf16, all norm/bias params f32."""
    H, D, d_k = p["wq"].shape
    d_v = p["wv"].shape[2]
    inv = 1.0 / math.sqrt(d_k)
    bf16 = jnp.bfloat16

    wq = (jnp.transpose(p["wq"], (1, 0, 2)).reshape(D, H * d_k) * inv).astype(bf16)
    bq = (p["bq"].reshape(1, H * d_k) * inv).astype(jnp.float32)
    wk = jnp.transpose(p["wk"], (1, 0, 2)).reshape(D, H * d_k)
    wv = jnp.transpose(p["wv"], (1, 0, 2)).reshape(D, H * d_v)
    wkv = jnp.concatenate([wk, wv], axis=1).astype(bf16)
    bkv = jnp.concatenate([p["bk"].reshape(1, H * d_k),
                           p["bv"].reshape(1, H * d_v)], axis=1).astype(jnp.float32)
    wo = p["wo"].reshape(H, d_v, D).astype(bf16)

    return {
        "wq": wq, "bq": bq, "wkv": wkv, "bkv": bkv,
        "wo": wo, "bo": p["bo"],
        "ln1_g": p["ln1_g"], "ln1_b": p["ln1_b"],
        "w1": p["w1"].astype(bf16), "b1": p["b1"],
        "w2": p["w2"].astype(bf16), "b2": p["b2"],
        "ln2_g": p["ln2_g"], "ln2_b": p["ln2_b"],
    }


def encoder_block_ref(z, p):
    """Pure-JAX f32 reference matching the PyTorch EncoderBlock.forward semantics."""
    n_heads = p["wq"].shape[0]
    d_k = p["wq"].shape[2]
    outs = []
    for h in range(n_heads):
        q = z @ p["wq"][h] + p["bq"][h]
        k = z @ p["wk"][h] + p["bk"][h]
        v = z @ p["wv"][h] + p["bv"][h]
        s = (q @ k.T) / math.sqrt(d_k)
        a = jax.nn.softmax(s, axis=-1)
        outs.append(a @ v)
    mha = jnp.concatenate(outs, axis=-1) @ p["wo"] + p["bo"]

    def ln(x, g, b):
        mu = jnp.mean(x, axis=-1, keepdims=True)
        var = jnp.mean((x - mu) ** 2, axis=-1, keepdims=True)
        return (x - mu) * jax.lax.rsqrt(var + LN_EPS) * g + b

    ln1 = ln(z + mha, p["ln1_g"], p["ln1_b"])
    ffn = jnp.maximum(ln1 @ p["w1"] + p["b1"], 0.0) @ p["w2"] + p["b2"]
    return ln(ln1 + ffn, p["ln2_g"], p["ln2_b"])


if __name__ == "__main__":
    # Small shapes consistent with the module's [seq_len, d_model] convention.
    seq_len, d_model, n_heads, d_ff = 32, 128, 8, 256
    d_k = d_v = d_model // n_heads

    key = jax.random.PRNGKey(0)
    k_z, k_p = jax.random.split(key)
    z = jax.random.normal(k_z, (seq_len, d_model), jnp.float32)
    params = init_params(k_p, d_model, n_heads, d_k, d_v, d_ff)
    kparams = pack_params(params)

    out = jax.block_until_ready(encoder_block(z, kparams))

    ref = encoder_block_ref(z, params)
    assert out.shape == (seq_len, d_model)
    # bf16 matmul operands + approx reciprocal vs. the full-f32 reference:
    # loosened tolerance (errors observed well below this).
    assert jnp.allclose(out, ref, atol=3e-2, rtol=3e-2), float(jnp.max(jnp.abs(out - ref)))

    print("KERNEL_OK")
</pallas_src>

<mosaic_0001>
module attributes {stable_mosaic.version = 11 : i64} {
  func.func @encoder_block_kernel(%arg0: i32, %arg1: memref<32x128xf32, #tpu.memory_space<vmem>>, %arg2: memref<32x128xf32, #tpu.memory_space<vmem>>, %arg3: memref<128x128xbf16, #tpu.memory_space<vmem>>, %arg4: memref<1x128xf32, #tpu.memory_space<vmem>>, %arg5: memref<128x256xbf16, #tpu.memory_space<vmem>>, %arg6: memref<1x256xf32, #tpu.memory_space<vmem>>, %arg7: memref<8x16x128xbf16, #tpu.memory_space<vmem>>, %arg8: memref<1x128xf32, #tpu.memory_space<vmem>>, %arg9: memref<1x128xf32, #tpu.memory_space<vmem>>, %arg10: memref<1x128xf32, #tpu.memory_space<vmem>>, %arg11: memref<128x256xbf16, #tpu.memory_space<vmem>>, %arg12: memref<1x256xf32, #tpu.memory_space<vmem>>, %arg13: memref<256x128xbf16, #tpu.memory_space<vmem>>, %arg14: memref<1x128xf32, #tpu.memory_space<vmem>>, %arg15: memref<1x128xf32, #tpu.memory_space<vmem>>, %arg16: memref<1x128xf32, #tpu.memory_space<vmem>>, %arg17: memref<32x128xf32, #tpu.memory_space<vmem>>) attributes {dimension_semantics = [#tpu.dimension_semantics<parallel>], iteration_bounds = array<i64: 1>, scalar_prefetch = 0 : i64, scratch_operands = 0 : i64, tpu.core_type = #tpu.core_type<tc>, window_params = [{transform_indices = @transform_0, window_bounds = array<i64: 32, 128>}, {pipeline_mode = #tpu.pipeline_mode<synchronous>, transform_indices = @transform_1, window_bounds = array<i64: 32, 128>}, {pipeline_mode = #tpu.pipeline_mode<synchronous>, transform_indices = @transform_2, window_bounds = array<i64: 128, 128>}, {pipeline_mode = #tpu.pipeline_mode<synchronous>, transform_indices = @transform_3, window_bounds = array<i64: 1, 128>}, {pipeline_mode = #tpu.pipeline_mode<synchronous>, transform_indices = @transform_4, window_bounds = array<i64: 128, 256>}, {pipeline_mode = #tpu.pipeline_mode<synchronous>, transform_indices = @transform_5, window_bounds = array<i64: 1, 256>}, {pipeline_mode = #tpu.pipeline_mode<synchronous>, transform_indices = @transform_6, window_bounds = array<i64: 8, 16, 128>}, {pipeline_mode = #tpu.pipeline_mode<synchronous>, transform_indices = @transform_7, window_bounds = array<i64: 1, 128>}, {pipeline_mode = #tpu.pipeline_mode<synchronous>, transform_indices = @transform_8, window_bounds = array<i64: 1, 128>}, {pipeline_mode = #tpu.pipeline_mode<synchronous>, transform_indices = @transform_9, window_bounds = array<i64: 1, 128>}, {pipeline_mode = #tpu.pipeline_mode<synchronous>, transform_indices = @transform_10, window_bounds = array<i64: 128, 256>}, {pipeline_mode = #tpu.pipeline_mode<synchronous>, transform_indices = @transform_11, window_bounds = array<i64: 1, 256>}, {pipeline_mode = #tpu.pipeline_mode<synchronous>, transform_indices = @transform_12, window_bounds = array<i64: 256, 128>}, {pipeline_mode = #tpu.pipeline_mode<synchronous>, transform_indices = @transform_13, window_bounds = array<i64: 1, 128>}, {pipeline_mode = #tpu.pipeline_mode<synchronous>, transform_indices = @transform_14, window_bounds = array<i64: 1, 128>}, {pipeline_mode = #tpu.pipeline_mode<synchronous>, transform_indices = @transform_15, window_bounds = array<i64: 1, 128>}, {transform_indices = @transform_16, window_bounds = array<i64: 32, 128>}]} {
    %c0 = arith.constant 0 : index
    %c0_0 = arith.constant 0 : index
    %0 = vector.load %arg1[%c0, %c0_0] : memref<32x128xf32, #tpu.memory_space<vmem>>, vector<32x128xf32>
    %c0_1 = arith.constant 0 : index
    %c0_2 = arith.constant 0 : index
    %1 = vector.load %arg2[%c0_1, %c0_2] : memref<32x128xf32, #tpu.memory_space<vmem>>, vector<32x128xf32>
    %2 = arith.truncf %0 : vector<32x128xf32> to vector<32x128xbf16>
    %c0_3 = arith.constant 0 : index
    %c0_4 = arith.constant 0 : index
    %3 = vector.load %arg3[%c0_3, %c0_4] : memref<128x128xbf16, #tpu.memory_space<vmem>>, vector<128x128xbf16>
    %cst = arith.constant dense<0.000000e+00> : vector<32x128xf32>
    %4 = tpu.matmul %2, %3, %cst {dimension_numbers = #tpu.dot_dimension_numbers<[1], [0], [0], [1], [0, 0, 1, 1], [], []>} : vector<32x128xbf16>, vector<128x128xbf16>, vector<32x128xf32> -> vector<32x128xf32>
    %c0_5 = arith.constant 0 : index
    %c0_6 = arith.constant 0 : index
    %5 = vector.load %arg4[%c0_5, %c0_6] : memref<1x128xf32, #tpu.memory_space<vmem>>, vector<1x128xf32>
    %6 = vector.broadcast %5 : vector<1x128xf32> to vector<32x128xf32>
    %7 = arith.addf %4, %6 : vector<32x128xf32>
    %8 = arith.truncf %1 : vector<32x128xf32> to vector<32x128xbf16>
    %c0_7 = arith.constant 0 : index
    %c0_8 = arith.constant 0 : index
    %9 = vector.load %arg5[%c0_7, %c0_8] : memref<128x256xbf16, #tpu.memory_space<vmem>>, vector<128x256xbf16>
    %cst_9 = arith.constant dense<0.000000e+00> : vector<32x256xf32>
    %10 = tpu.matmul %8, %9, %cst_9 {dimension_numbers = #tpu.dot_dimension_numbers<[1], [0], [0], [1], [0, 0, 1, 1], [], []>} : vector<32x128xbf16>, vector<128x256xbf16>, vector<32x256xf32> -> vector<32x256xf32>
    %c0_10 = arith.constant 0 : index
    %c0_11 = arith.constant 0 : index
    %11 = vector.load %arg6[%c0_10, %c0_11] : memref<1x256xf32, #tpu.memory_space<vmem>>, vector<1x256xf32>
    %12 = vector.broadcast %11 : vector<1x256xf32> to vector<32x256xf32>
    %13 = arith.addf %10, %12 : vector<32x256xf32>
    %cst_12 = arith.constant 0.000000e+00 : f32
    %14 = vector.broadcast %cst_12 : f32 to vector<32x128xf32>
    %15 = vector.extract_strided_slice %7 {offsets = [0, 0], sizes = [32, 16], strides = [1, 1]} : vector<32x128xf32> to vector<32x16xf32>
    %16 = arith.truncf %15 : vector<32x16xf32> to vector<32x16xbf16>
    %17 = vector.extract_strided_slice %13 {offsets = [0, 0], sizes = [32, 16], strides = [1, 1]} : vector<32x256xf32> to vector<32x16xf32>
    %18 = arith.truncf %17 : vector<32x16xf32> to vector<32x16xbf16>
    %19 = vector.extract_strided_slice %13 {offsets = [0, 128], sizes = [32, 16], strides = [1, 1]} : vector<32x256xf32> to vector<32x16xf32>
    %20 = arith.truncf %19 : vector<32x16xf32> to vector<32x16xbf16>
    %cst_13 = arith.constant dense<0.000000e+00> : vector<32x32xf32>
    %21 = tpu.matmul %16, %18, %cst_13 {dimension_numbers = #tpu.dot_dimension_numbers<[1], [1], [0], [0], [0, 0, 1, 0], [], []>} : vector<32x16xbf16>, vector<32x16xbf16>, vector<32x32xf32> -> vector<32x32xf32>
    %cst_14 = arith.constant dense<0xFF800000> : vector<32xf32>
    %22 = vector.multi_reduction <maximumf>, %21, %cst_14 [1] : vector<32x32xf32> to vector<32xf32>
    %23 = vector.shape_cast %22 : vector<32xf32> to vector<32x1xf32>
    %24 = vector.broadcast %23 : vector<32x1xf32> to vector<32x32xf32>
    %25 = arith.subf %21, %24 : vector<32x32xf32>
    %26 = math.exp %25 : vector<32x32xf32>
    %cst_15 = arith.constant dense<0.000000e+00> : vector<32xf32>
    %27 = vector.multi_reduction <add>, %26, %cst_15 [1] : vector<32x32xf32> to vector<32xf32>
    %28 = vector.shape_cast %27 : vector<32xf32> to vector<32x1xf32>
    %29 = tpu.reciprocal %28 {approx = true} : vector<32x1xf32> -> vector<32x1xf32>
    %30 = vector.broadcast %29 : vector<32x1xf32> to vector<32x32xf32>
    %31 = arith.mulf %26, %30 : vector<32x32xf32>
    %32 = arith.truncf %31 : vector<32x32xf32> to vector<32x32xbf16>
    %cst_16 = arith.constant dense<0.000000e+00> : vector<32x16xf32>
    %33 = tpu.matmul %32, %20, %cst_16 {dimension_numbers = #tpu.dot_dimension_numbers<[1], [0], [0], [1], [0, 0, 1, 1], [], []>} : vector<32x32xbf16>, vector<32x16xbf16>, vector<32x16xf32> -> vector<32x16xf32>
    %34 = arith.truncf %33 : vector<32x16xf32> to vector<32x16xbf16>
    %c0_17 = arith.constant 0 : index
    %c0_18 = arith.constant 0 : index
    %c0_19 = arith.constant 0 : index
    %35 = vector.load %arg7[%c0_17, %c0_18, %c0_19] : memref<8x16x128xbf16, #tpu.memory_space<vmem>>, vector<1x16x128xbf16>
    %36 = vector.shape_cast %35 : vector<1x16x128xbf16> to vector<16x128xbf16>
    %cst_20 = arith.constant dense<0.000000e+00> : vector<32x128xf32>
    %37 = tpu.matmul %34, %36, %cst_20 {dimension_numbers = #tpu.dot_dimension_numbers<[1], [0], [0], [1], [0, 0, 1, 1], [], []>} : vector<32x16xbf16>, vector<16x128xbf16>, vector<32x128xf32> -> vector<32x128xf32>
    %38 = arith.addf %14, %37 : vector<32x128xf32>
    %39 = vector.extract_strided_slice %7 {offsets = [0, 16], sizes = [32, 16], strides = [1, 1]} : vector<32x128xf32> to vector<32x16xf32>
    %40 = arith.truncf %39 : vector<32x16xf32> to vector<32x16xbf16>
    %41 = vector.extract_strided_slice %13 {offsets = [0, 16], sizes = [32, 16], strides = [1, 1]} : vector<32x256xf32> to vector<32x16xf32>
    %42 = arith.truncf %41 : vector<32x16xf32> to vector<32x16xbf16>
    %43 = vector.extract_strided_slice %13 {offsets = [0, 144], sizes = [32, 16], strides = [1, 1]} : vector<32x256xf32> to vector<32x16xf32>
    %44 = arith.truncf %43 : vector<32x16xf32> to vector<32x16xbf16>
    %cst_21 = arith.constant dense<0.000000e+00> : vector<32x32xf32>
    %45 = tpu.matmul %40, %42, %cst_21 {dimension_numbers = #tpu.dot_dimension_numbers<[1], [1], [0], [0], [0, 0, 1, 0], [], []>} : vector<32x16xbf16>, vector<32x16xbf16>, vector<32x32xf32> -> vector<32x32xf32>
    %cst_22 = arith.constant dense<0xFF800000> : vector<32xf32>
    %46 = vector.multi_reduction <maximumf>, %45, %cst_22 [1] : vector<32x32xf32> to vector<32xf32>
    %47 = vector.shape_cast %46 : vector<32xf32> to vector<32x1xf32>
    %48 = vector.broadcast %47 : vector<32x1xf32> to vector<32x32xf32>
    %49 = arith.subf %45, %48 : vector<32x32xf32>
    %50 = math.exp %49 : vector<32x32xf32>
    %cst_23 = arith.constant dense<0.000000e+00> : vector<32xf32>
    %51 = vector.multi_reduction <add>, %50, %cst_23 [1] : vector<32x32xf32> to vector<32xf32>
    %52 = vector.shape_cast %51 : vector<32xf32> to vector<32x1xf32>
    %53 = tpu.reciprocal %52 {approx = true} : vector<32x1xf32> -> vector<32x1xf32>
    %54 = vector.broadcast %53 : vector<32x1xf32> to vector<32x32xf32>
    %55 = arith.mulf %50, %54 : vector<32x32xf32>
    %56 = arith.truncf %55 : vector<32x32xf32> to vector<32x32xbf16>
    %cst_24 = arith.constant dense<0.000000e+00> : vector<32x16xf32>
    %57 = tpu.matmul %56, %44, %cst_24 {dimension_numbers = #tpu.dot_dimension_numbers<[1], [0], [0], [1], [0, 0, 1, 1], [], []>} : vector<32x32xbf16>, vector<32x16xbf16>, vector<32x16xf32> -> vector<32x16xf32>
    %58 = arith.truncf %57 : vector<32x16xf32> to vector<32x16xbf16>
    %c1 = arith.constant 1 : index
    %c0_25 = arith.constant 0 : index
    %c0_26 = arith.constant 0 : index
    %59 = vector.load %arg7[%c1, %c0_25, %c0_26] : memref<8x16x128xbf16, #tpu.memory_space<vmem>>, vector<1x16x128xbf16>
    %60 = vector.shape_cast %59 : vector<1x16x128xbf16> to vector<16x128xbf16>
    %cst_27 = arith.constant dense<0.000000e+00> : vector<32x128xf32>
    %61 = tpu.matmul %58, %60, %cst_27 {dimension_numbers = #tpu.dot_dimension_numbers<[1], [0], [0], [1], [0, 0, 1, 1], [], []>} : vector<32x16xbf16>, vector<16x128xbf16>, vector<32x128xf32> -> vector<32x128xf32>
    %62 = arith.addf %38, %61 : vector<32x128xf32>
    %63 = vector.extract_strided_slice %7 {offsets = [0, 32], sizes = [32, 16], strides = [1, 1]} : vector<32x128xf32> to vector<32x16xf32>
    %64 = arith.truncf %63 : vector<32x16xf32> to vector<32x16xbf16>
    %65 = vector.extract_strided_slice %13 {offsets = [0, 32], sizes = [32, 16], strides = [1, 1]} : vector<32x256xf32> to vector<32x16xf32>
    %66 = arith.truncf %65 : vector<32x16xf32> to vector<32x16xbf16>
    %67 = vector.extract_strided_slice %13 {offsets = [0, 160], sizes = [32, 16], strides = [1, 1]} : vector<32x256xf32> to vector<32x16xf32>
    %68 = arith.truncf %67 : vector<32x16xf32> to vector<32x16xbf16>
    %cst_28 = arith.constant dense<0.000000e+00> : vector<32x32xf32>
    %69 = tpu.matmul %64, %66, %cst_28 {dimension_numbers = #tpu.dot_dimension_numbers<[1], [1], [0], [0], [0, 0, 1, 0], [], []>} : vector<32x16xbf16>, vector<32x16xbf16>, vector<32x32xf32> -> vector<32x32xf32>
    %cst_29 = arith.constant dense<0xFF800000> : vector<32xf32>
    %70 = vector.multi_reduction <maximumf>, %69, %cst_29 [1] : vector<32x32xf32> to vector<32xf32>
    %71 = vector.shape_cast %70 : vector<32xf32> to vector<32x1xf32>
    %72 = vector.broadcast %71 : vector<32x1xf32> to vector<32x32xf32>
    %73 = arith.subf %69, %72 : vector<32x32xf32>
    %74 = math.exp %73 : vector<32x32xf32>
    %cst_30 = arith.constant dense<0.000000e+00> : vector<32xf32>
    %75 = vector.multi_reduction <add>, %74, %cst_30 [1] : vector<32x32xf32> to vector<32xf32>
    %76 = vector.shape_cast %75 : vector<32xf32> to vector<32x1xf32>
    %77 = tpu.reciprocal %76 {approx = true} : vector<32x1xf32> -> vector<32x1xf32>
    %78 = vector.broadcast %77 : vector<32x1xf32> to vector<32x32xf32>
    %79 = arith.mulf %74, %78 : vector<32x32xf32>
    %80 = arith.truncf %79 : vector<32x32xf32> to vector<32x32xbf16>
    %cst_31 = arith.constant dense<0.000000e+00> : vector<32x16xf32>
    %81 = tpu.matmul %80, %68, %cst_31 {dimension_numbers = #tpu.dot_dimension_numbers<[1], [0], [0], [1], [0, 0, 1, 1], [], []>} : vector<32x32xbf16>, vector<32x16xbf16>, vector<32x16xf32> -> vector<32x16xf32>
    %82 = arith.truncf %81 : vector<32x16xf32> to vector<32x16xbf16>
    %c2 = arith.constant 2 : index
    %c0_32 = arith.constant 0 : index
    %c0_33 = arith.constant 0 : index
    %83 = vector.load %arg7[%c2, %c0_32, %c0_33] : memref<8x16x128xbf16, #tpu.memory_space<vmem>>, vector<1x16x128xbf16>
    %84 = vector.shape_cast %83 : vector<1x16x128xbf16> to vector<16x128xbf16>
    %cst_34 = arith.constant dense<0.000000e+00> : vector<32x128xf32>
    %85 = tpu.matmul %82, %84, %cst_34 {dimension_numbers = #tpu.dot_dimension_numbers<[1], [0], [0], [1], [0, 0, 1, 1], [], []>} : vector<32x16xbf16>, vector<16x128xbf16>, vector<32x128xf32> -> vector<32x128xf32>
    %86 = arith.addf %62, %85 : vector<32x128xf32>
    %87 = vector.extract_strided_slice %7 {offsets = [0, 48], sizes = [32, 16], strides = [1, 1]} : vector<32x128xf32> to vector<32x16xf32>
    %88 = arith.truncf %87 : vector<32x16xf32> to vector<32x16xbf16>
    %89 = vector.extract_strided_slice %13 {offsets = [0, 48], sizes = [32, 16], strides = [1, 1]} : vector<32x256xf32> to vector<32x16xf32>
    %90 = arith.truncf %89 : vector<32x16xf32> to vector<32x16xbf16>
    %91 = vector.extract_strided_slice %13 {offsets = [0, 176], sizes = [32, 16], strides = [1, 1]} : vector<32x256xf32> to vector<32x16xf32>
    %92 = arith.truncf %91 : vector<32x16xf32> to vector<32x16xbf16>
    %cst_35 = arith.constant dense<0.000000e+00> : vector<32x32xf32>
    %93 = tpu.matmul %88, %90, %cst_35 {dimension_numbers = #tpu.dot_dimension_numbers<[1], [1], [0], [0], [0, 0, 1, 0], [], []>} : vector<32x16xbf16>, vector<32x16xbf16>, vector<32x32xf32> -> vector<32x32xf32>
    %cst_36 = arith.constant dense<0xFF800000> : vector<32xf32>
    %94 = vector.multi_reduction <maximumf>, %93, %cst_36 [1] : vector<32x32xf32> to vector<32xf32>
    %95 = vector.shape_cast %94 : vector<32xf32> to vector<32x1xf32>
    %96 = vector.broadcast %95 : vector<32x1xf32> to vector<32x32xf32>
    %97 = arith.subf %93, %96 : vector<32x32xf32>
    %98 = math.exp %97 : vector<32x32xf32>
    %cst_37 = arith.constant dense<0.000000e+00> : vector<32xf32>
    %99 = vector.multi_reduction <add>, %98, %cst_37 [1] : vector<32x32xf32> to vector<32xf32>
    %100 = vector.shape_cast %99 : vector<32xf32> to vector<32x1xf32>
    %101 = tpu.reciprocal %100 {approx = true} : vector<32x1xf32> -> vector<32x1xf32>
    %102 = vector.broadcast %101 : vector<32x1xf32> to vector<32x32xf32>
    %103 = arith.mulf %98, %102 : vector<32x32xf32>
    %104 = arith.truncf %103 : vector<32x32xf32> to vector<32x32xbf16>
    %cst_38 = arith.constant dense<0.000000e+00> : vector<32x16xf32>
    %105 = tpu.matmul %104, %92, %cst_38 {dimension_numbers = #tpu.dot_dimension_numbers<[1], [0], [0], [1], [0, 0, 1, 1], [], []>} : vector<32x32xbf16>, vector<32x16xbf16>, vector<32x16xf32> -> vector<32x16xf32>
    %106 = arith.truncf %105 : vector<32x16xf32> to vector<32x16xbf16>
    %c3 = arith.constant 3 : index
    %c0_39 = arith.constant 0 : index
    %c0_40 = arith.constant 0 : index
    %107 = vector.load %arg7[%c3, %c0_39, %c0_40] : memref<8x16x128xbf16, #tpu.memory_space<vmem>>, vector<1x16x128xbf16>
    %108 = vector.shape_cast %107 : vector<1x16x128xbf16> to vector<16x128xbf16>
    %cst_41 = arith.constant dense<0.000000e+00> : vector<32x128xf32>
    %109 = tpu.matmul %106, %108, %cst_41 {dimension_numbers = #tpu.dot_dimension_numbers<[1], [0], [0], [1], [0, 0, 1, 1], [], []>} : vector<32x16xbf16>, vector<16x128xbf16>, vector<32x128xf32> -> vector<32x128xf32>
    %110 = arith.addf %86, %109 : vector<32x128xf32>
    %111 = vector.extract_strided_slice %7 {offsets = [0, 64], sizes = [32, 16], strides = [1, 1]} : vector<32x128xf32> to vector<32x16xf32>
    %112 = arith.truncf %111 : vector<32x16xf32> to vector<32x16xbf16>
    %113 = vector.extract_strided_slice %13 {offsets = [0, 64], sizes = [32, 16], strides = [1, 1]} : vector<32x256xf32> to vector<32x16xf32>
    %114 = arith.truncf %113 : vector<32x16xf32> to vector<32x16xbf16>
    %115 = vector.extract_strided_slice %13 {offsets = [0, 192], sizes = [32, 16], strides = [1, 1]} : vector<32x256xf32> to vector<32x16xf32>
    %116 = arith.truncf %115 : vector<32x16xf32> to vector<32x16xbf16>
    %cst_42 = arith.constant dense<0.000000e+00> : vector<32x32xf32>
    %117 = tpu.matmul %112, %114, %cst_42 {dimension_numbers = #tpu.dot_dimension_numbers<[1], [1], [0], [0], [0, 0, 1, 0], [], []>} : vector<32x16xbf16>, vector<32x16xbf16>, vector<32x32xf32> -> vector<32x32xf32>
    %cst_43 = arith.constant dense<0xFF800000> : vector<32xf32>
    %118 = vector.multi_reduction <maximumf>, %117, %cst_43 [1] : vector<32x32xf32> to vector<32xf32>
    %119 = vector.shape_cast %118 : vector<32xf32> to vector<32x1xf32>
    %120 = vector.broadcast %119 : vector<32x1xf32> to vector<32x32xf32>
    %121 = arith.subf %117, %120 : vector<32x32xf32>
    %122 = math.exp %121 : vector<32x32xf32>
    %cst_44 = arith.constant dense<0.000000e+00> : vector<32xf32>
    %123 = vector.multi_reduction <add>, %122, %cst_44 [1] : vector<32x32xf32> to vector<32xf32>
    %124 = vector.shape_cast %123 : vector<32xf32> to vector<32x1xf32>
    %125 = tpu.reciprocal %124 {approx = true} : vector<32x1xf32> -> vector<32x1xf32>
    %126 = vector.broadcast %125 : vector<32x1xf32> to vector<32x32xf32>
    %127 = arith.mulf %122, %126 : vector<32x32xf32>
    %128 = arith.truncf %127 : vector<32x32xf32> to vector<32x32xbf16>
    %cst_45 = arith.constant dense<0.000000e+00> : vector<32x16xf32>
    %129 = tpu.matmul %128, %116, %cst_45 {dimension_numbers = #tpu.dot_dimension_numbers<[1], [0], [0], [1], [0, 0, 1, 1], [], []>} : vector<32x32xbf16>, vector<32x16xbf16>, vector<32x16xf32> -> vector<32x16xf32>
    %130 = arith.truncf %129 : vector<32x16xf32> to vector<32x16xbf16>
    %c4 = arith.constant 4 : index
    %c0_46 = arith.constant 0 : index
    %c0_47 = arith.constant 0 : index
    %131 = vector.load %arg7[%c4, %c0_46, %c0_47] : memref<8x16x128xbf16, #tpu.memory_space<vmem>>, vector<1x16x128xbf16>
    %132 = vector.shape_cast %131 : vector<1x16x128xbf16> to vector<16x128xbf16>
    %cst_48 = arith.constant dense<0.000000e+00> : vector<32x128xf32>
    %133 = tpu.matmul %130, %132, %cst_48 {dimension_numbers = #tpu.dot_dimension_numbers<[1], [0], [0], [1], [0, 0, 1, 1], [], []>} : vector<32x16xbf16>, vector<16x128xbf16>, vector<32x128xf32> -> vector<32x128xf32>
    %134 = arith.addf %110, %133 : vector<32x128xf32>
    %135 = vector.extract_strided_slice %7 {offsets = [0, 80], sizes = [32, 16], strides = [1, 1]} : vector<32x128xf32> to vector<32x16xf32>
    %136 = arith.truncf %135 : vector<32x16xf32> to vector<32x16xbf16>
    %137 = vector.extract_strided_slice %13 {offsets = [0, 80], sizes = [32, 16], strides = [1, 1]} : vector<32x256xf32> to vector<32x16xf32>
    %138 = arith.truncf %137 : vector<32x16xf32> to vector<32x16xbf16>
    %139 = vector.extract_strided_slice %13 {offsets = [0, 208], sizes = [32, 16], strides = [1, 1]} : vector<32x256xf32> to vector<32x16xf32>
    %140 = arith.truncf %139 : vector<32x16xf32> to vector<32x16xbf16>
    %cst_49 = arith.constant dense<0.000000e+00> : vector<32x32xf32>
    %141 = tpu.matmul %136, %138, %cst_49 {dimension_numbers = #tpu.dot_dimension_numbers<[1], [1], [0], [0], [0, 0, 1, 0], [], []>} : vector<32x16xbf16>, vector<32x16xbf16>, vector<32x32xf32> -> vector<32x32xf32>
    %cst_50 = arith.constant dense<0xFF800000> : vector<32xf32>
    %142 = vector.multi_reduction <maximumf>, %141, %cst_50 [1] : vector<32x32xf32> to vector<32xf32>
    %143 = vector.shape_cast %142 : vector<32xf32> to vector<32x1xf32>
    %144 = vector.broadcast %143 : vector<32x1xf32> to vector<32x32xf32>
    %145 = arith.subf %141, %144 : vector<32x32xf32>
    %146 = math.exp %145 : vector<32x32xf32>
    %cst_51 = arith.constant dense<0.000000e+00> : vector<32xf32>
    %147 = vector.multi_reduction <add>, %146, %cst_51 [1] : vector<32x32xf32> to vector<32xf32>
    %148 = vector.shape_cast %147 : vector<32xf32> to vector<32x1xf32>
    %149 = tpu.reciprocal %148 {approx = true} : vector<32x1xf32> -> vector<32x1xf32>
    %150 = vector.broadcast %149 : vector<32x1xf32> to vector<32x32xf32>
    %151 = arith.mulf %146, %150 : vector<32x32xf32>
    %152 = arith.truncf %151 : vector<32x32xf32> to vector<32x32xbf16>
    %cst_52 = arith.constant dense<0.000000e+00> : vector<32x16xf32>
    %153 = tpu.matmul %152, %140, %cst_52 {dimension_numbers = #tpu.dot_dimension_numbers<[1], [0], [0], [1], [0, 0, 1, 1], [], []>} : vector<32x32xbf16>, vector<32x16xbf16>, vector<32x16xf32> -> vector<32x16xf32>
    %154 = arith.truncf %153 : vector<32x16xf32> to vector<32x16xbf16>
    %c5 = arith.constant 5 : index
    %c0_53 = arith.constant 0 : index
    %c0_54 = arith.constant 0 : index
    %155 = vector.load %arg7[%c5, %c0_53, %c0_54] : memref<8x16x128xbf16, #tpu.memory_space<vmem>>, vector<1x16x128xbf16>
    %156 = vector.shape_cast %155 : vector<1x16x128xbf16> to vector<16x128xbf16>
    %cst_55 = arith.constant dense<0.000000e+00> : vector<32x128xf32>
    %157 = tpu.matmul %154, %156, %cst_55 {dimension_numbers = #tpu.dot_dimension_numbers<[1], [0], [0], [1], [0, 0, 1, 1], [], []>} : vector<32x16xbf16>, vector<16x128xbf16>, vector<32x128xf32> -> vector<32x128xf32>
    %158 = arith.addf %134, %157 : vector<32x128xf32>
    %159 = vector.extract_strided_slice %7 {offsets = [0, 96], sizes = [32, 16], strides = [1, 1]} : vector<32x128xf32> to vector<32x16xf32>
    %160 = arith.truncf %159 : vector<32x16xf32> to vector<32x16xbf16>
    %161 = vector.extract_strided_slice %13 {offsets = [0, 96], sizes = [32, 16], strides = [1, 1]} : vector<32x256xf32> to vector<32x16xf32>
    %162 = arith.truncf %161 : vector<32x16xf32> to vector<32x16xbf16>
    %163 = vector.extract_strided_slice %13 {offsets = [0, 224], sizes = [32, 16], strides = [1, 1]} : vector<32x256xf32> to vector<32x16xf32>
    %164 = arith.truncf %163 : vector<32x16xf32> to vector<32x16xbf16>
    %cst_56 = arith.constant dense<0.000000e+00> : vector<32x32xf32>
    %165 = tpu.matmul %160, %162, %cst_56 {dimension_numbers = #tpu.dot_dimension_numbers<[1], [1], [0], [0], [0, 0, 1, 0], [], []>} : vector<32x16xbf16>, vector<32x16xbf16>, vector<32x32xf32> -> vector<32x32xf32>
    %cst_57 = arith.constant dense<0xFF800000> : vector<32xf32>
    %166 = vector.multi_reduction <maximumf>, %165, %cst_57 [1] : vector<32x32xf32> to vector<32xf32>
    %167 = vector.shape_cast %166 : vector<32xf32> to vector<32x1xf32>
    %168 = vector.broadcast %167 : vector<32x1xf32> to vector<32x32xf32>
    %169 = arith.subf %165, %168 : vector<32x32xf32>
    %170 = math.exp %169 : vector<32x32xf32>
    %cst_58 = arith.constant dense<0.000000e+00> : vector<32xf32>
    %171 = vector.multi_reduction <add>, %170, %cst_58 [1] : vector<32x32xf32> to vector<32xf32>
    %172 = vector.shape_cast %171 : vector<32xf32> to vector<32x1xf32>
    %173 = tpu.reciprocal %172 {approx = true} : vector<32x1xf32> -> vector<32x1xf32>
    %174 = vector.broadcast %173 : vector<32x1xf32> to vector<32x32xf32>
    %175 = arith.mulf %170, %174 : vector<32x32xf32>
    %176 = arith.truncf %175 : vector<32x32xf32> to vector<32x32xbf16>
    %cst_59 = arith.constant dense<0.000000e+00> : vector<32x16xf32>
    %177 = tpu.matmul %176, %164, %cst_59 {dimension_numbers = #tpu.dot_dimension_numbers<[1], [0], [0], [1], [0, 0, 1, 1], [], []>} : vector<32x32xbf16>, vector<32x16xbf16>, vector<32x16xf32> -> vector<32x16xf32>
    %178 = arith.truncf %177 : vector<32x16xf32> to vector<32x16xbf16>
    %c6 = arith.constant 6 : index
    %c0_60 = arith.constant 0 : index
    %c0_61 = arith.constant 0 : index
    %179 = vector.load %arg7[%c6, %c0_60, %c0_61] : memref<8x16x128xbf16, #tpu.memory_space<vmem>>, vector<1x16x128xbf16>
    %180 = vector.shape_cast %179 : vector<1x16x128xbf16> to vector<16x128xbf16>
    %cst_62 = arith.constant dense<0.000000e+00> : vector<32x128xf32>
    %181 = tpu.matmul %178, %180, %cst_62 {dimension_numbers = #tpu.dot_dimension_numbers<[1], [0], [0], [1], [0, 0, 1, 1], [], []>} : vector<32x16xbf16>, vector<16x128xbf16>, vector<32x128xf32> -> vector<32x128xf32>
    %182 = arith.addf %158, %181 : vector<32x128xf32>
    %183 = vector.extract_strided_slice %7 {offsets = [0, 112], sizes = [32, 16], strides = [1, 1]} : vector<32x128xf32> to vector<32x16xf32>
    %184 = arith.truncf %183 : vector<32x16xf32> to vector<32x16xbf16>
    %185 = vector.extract_strided_slice %13 {offsets = [0, 112], sizes = [32, 16], strides = [1, 1]} : vector<32x256xf32> to vector<32x16xf32>
    %186 = arith.truncf %185 : vector<32x16xf32> to vector<32x16xbf16>
    %187 = vector.extract_strided_slice %13 {offsets = [0, 240], sizes = [32, 16], strides = [1, 1]} : vector<32x256xf32> to vector<32x16xf32>
    %188 = arith.truncf %187 : vector<32x16xf32> to vector<32x16xbf16>
    %cst_63 = arith.constant dense<0.000000e+00> : vector<32x32xf32>
    %189 = tpu.matmul %184, %186, %cst_63 {dimension_numbers = #tpu.dot_dimension_numbers<[1], [1], [0], [0], [0, 0, 1, 0], [], []>} : vector<32x16xbf16>, vector<32x16xbf16>, vector<32x32xf32> -> vector<32x32xf32>
    %cst_64 = arith.constant dense<0xFF800000> : vector<32xf32>
    %190 = vector.multi_reduction <maximumf>, %189, %cst_64 [1] : vector<32x32xf32> to vector<32xf32>
    %191 = vector.shape_cast %190 : vector<32xf32> to vector<32x1xf32>
    %192 = vector.broadcast %191 : vector<32x1xf32> to vector<32x32xf32>
    %193 = arith.subf %189, %192 : vector<32x32xf32>
    %194 = math.exp %193 : vector<32x32xf32>
    %cst_65 = arith.constant dense<0.000000e+00> : vector<32xf32>
    %195 = vector.multi_reduction <add>, %194, %cst_65 [1] : vector<32x32xf32> to vector<32xf32>
    %196 = vector.shape_cast %195 : vector<32xf32> to vector<32x1xf32>
    %197 = tpu.reciprocal %196 {approx = true} : vector<32x1xf32> -> vector<32x1xf32>
    %198 = vector.broadcast %197 : vector<32x1xf32> to vector<32x32xf32>
    %199 = arith.mulf %194, %198 : vector<32x32xf32>
    %200 = arith.truncf %199 : vector<32x32xf32> to vector<32x32xbf16>
    %cst_66 = arith.constant dense<0.000000e+00> : vector<32x16xf32>
    %201 = tpu.matmul %200, %188, %cst_66 {dimension_numbers = #tpu.dot_dimension_numbers<[1], [0], [0], [1], [0, 0, 1, 1], [], []>} : vector<32x32xbf16>, vector<32x16xbf16>, vector<32x16xf32> -> vector<32x16xf32>
    %202 = arith.truncf %201 : vector<32x16xf32> to vector<32x16xbf16>
    %c7 = arith.constant 7 : index
    %c0_67 = arith.constant 0 : index
    %c0_68 = arith.constant 0 : index
    %203 = vector.load %arg7[%c7, %c0_67, %c0_68] : memref<8x16x128xbf16, #tpu.memory_space<vmem>>, vector<1x16x128xbf16>
    %204 = vector.shape_cast %203 : vector<1x16x128xbf16> to vector<16x128xbf16>
    %cst_69 = arith.constant dense<0.000000e+00> : vector<32x128xf32>
    %205 = tpu.matmul %202, %204, %cst_69 {dimension_numbers = #tpu.dot_dimension_numbers<[1], [0], [0], [1], [0, 0, 1, 1], [], []>} : vector<32x16xbf16>, vector<16x128xbf16>, vector<32x128xf32> -> vector<32x128xf32>
    %206 = arith.addf %182, %205 : vector<32x128xf32>
    %c0_70 = arith.constant 0 : index
    %c0_71 = arith.constant 0 : index
    %207 = vector.load %arg8[%c0_70, %c0_71] : memref<1x128xf32, #tpu.memory_space<vmem>>, vector<1x128xf32>
    %208 = vector.broadcast %207 : vector<1x128xf32> to vector<32x128xf32>
    %209 = arith.addf %206, %208 : vector<32x128xf32>
    %210 = arith.addf %0, %209 : vector<32x128xf32>
    %cst_72 = arith.constant dense<0.000000e+00> : vector<32xf32>
    %211 = vector.multi_reduction <add>, %210, %cst_72 [1] : vector<32x128xf32> to vector<32xf32>
    %212 = vector.shape_cast %211 : vector<32xf32> to vector<32x1xf32>
    %cst_73 = arith.constant 1.280000e+02 : f32
    %213 = vector.broadcast %cst_73 : f32 to vector<32x1xf32>
    %214 = arith.divf %212, %213 : vector<32x1xf32>
    %215 = vector.broadcast %214 : vector<32x1xf32> to vector<32x128xf32>
    %216 = arith.subf %210, %215 : vector<32x128xf32>
    %217 = arith.mulf %216, %216 : vector<32x128xf32>
    %cst_74 = arith.constant dense<0.000000e+00> : vector<32xf32>
    %218 = vector.multi_reduction <add>, %217, %cst_74 [1] : vector<32x128xf32> to vector<32xf32>
    %219 = vector.shape_cast %218 : vector<32xf32> to vector<32x1xf32>
    %cst_75 = arith.constant 1.280000e+02 : f32
    %220 = vector.broadcast %cst_75 : f32 to vector<32x1xf32>
    %221 = arith.divf %219, %220 : vector<32x1xf32>
    %cst_76 = arith.constant 9.99999974E-6 : f32
    %222 = vector.broadcast %cst_76 : f32 to vector<32x1xf32>
    %223 = arith.addf %221, %222 : vector<32x1xf32>
    %224 = math.rsqrt %223 : vector<32x1xf32>
    %225 = vector.broadcast %224 : vector<32x1xf32> to vector<32x128xf32>
    %226 = arith.mulf %216, %225 : vector<32x128xf32>
    %c0_77 = arith.constant 0 : index
    %c0_78 = arith.constant 0 : index
    %227 = vector.load %arg9[%c0_77, %c0_78] : memref<1x128xf32, #tpu.memory_space<vmem>>, vector<1x128xf32>
    %228 = vector.broadcast %227 : vector<1x128xf32> to vector<32x128xf32>
    %229 = arith.mulf %226, %228 : vector<32x128xf32>
    %c0_79 = arith.constant 0 : index
    %c0_80 = arith.constant 0 : index
    %230 = vector.load %arg10[%c0_79, %c0_80] : memref<1x128xf32, #tpu.memory_space<vmem>>, vector<1x128xf32>
    %231 = vector.broadcast %230 : vector<1x128xf32> to vector<32x128xf32>
    %232 = arith.addf %229, %231 : vector<32x128xf32>
    %233 = arith.truncf %232 : vector<32x128xf32> to vector<32x128xbf16>
    %c0_81 = arith.constant 0 : index
    %c0_82 = arith.constant 0 : index
    %234 = vector.load %arg11[%c0_81, %c0_82] : memref<128x256xbf16, #tpu.memory_space<vmem>>, vector<128x256xbf16>
    %cst_83 = arith.constant dense<0.000000e+00> : vector<32x256xf32>
    %235 = tpu.matmul %233, %234, %cst_83 {dimension_numbers = #tpu.dot_dimension_numbers<[1], [0], [0], [1], [0, 0, 1, 1], [], []>} : vector<32x128xbf16>, vector<128x256xbf16>, vector<32x256xf32> -> vector<32x256xf32>
    %c0_84 = arith.constant 0 : index
    %c0_85 = arith.constant 0 : index
    %236 = vector.load %arg12[%c0_84, %c0_85] : memref<1x256xf32, #tpu.memory_space<vmem>>, vector<1x256xf32>
    %237 = vector.broadcast %236 : vector<1x256xf32> to vector<32x256xf32>
    %238 = arith.addf %235, %237 : vector<32x256xf32>
    %cst_86 = arith.constant 0.000000e+00 : f32
    %239 = vector.broadcast %cst_86 : f32 to vector<32x256xf32>
    %240 = arith.maximumf %238, %239 : vector<32x256xf32>
    %241 = arith.truncf %240 : vector<32x256xf32> to vector<32x256xbf16>
    %c0_87 = arith.constant 0 : index
    %c0_88 = arith.constant 0 : index
    %242 = vector.load %arg13[%c0_87, %c0_88] : memref<256x128xbf16, #tpu.memory_space<vmem>>, vector<256x128xbf16>
    %cst_89 = arith.constant dense<0.000000e+00> : vector<32x128xf32>
    %243 = tpu.matmul %241, %242, %cst_89 {dimension_numbers = #tpu.dot_dimension_numbers<[1], [0], [0], [1], [0, 0, 1, 1], [], []>} : vector<32x256xbf16>, vector<256x128xbf16>, vector<32x128xf32> -> vector<32x128xf32>
    %c0_90 = arith.constant 0 : index
    %c0_91 = arith.constant 0 : index
    %244 = vector.load %arg14[%c0_90, %c0_91] : memref<1x128xf32, #tpu.memory_space<vmem>>, vector<1x128xf32>
    %245 = vector.broadcast %244 : vector<1x128xf32> to vector<32x128xf32>
    %246 = arith.addf %243, %245 : vector<32x128xf32>
    %247 = arith.addf %232, %246 : vector<32x128xf32>
    %cst_92 = arith.constant dense<0.000000e+00> : vector<32xf32>
    %248 = vector.multi_reduction <add>, %247, %cst_92 [1] : vector<32x128xf32> to vector<32xf32>
    %249 = vector.shape_cast %248 : vector<32xf32> to vector<32x1xf32>
    %cst_93 = arith.constant 1.280000e+02 : f32
    %250 = vector.broadcast %cst_93 : f32 to vector<32x1xf32>
    %251 = arith.divf %249, %250 : vector<32x1xf32>
    %252 = vector.broadcast %251 : vector<32x1xf32> to vector<32x128xf32>
    %253 = arith.subf %247, %252 : vector<32x128xf32>
    %254 = arith.mulf %253, %253 : vector<32x128xf32>
    %cst_94 = arith.constant dense<0.000000e+00> : vector<32xf32>
    %255 = vector.multi_reduction <add>, %254, %cst_94 [1] : vector<32x128xf32> to vector<32xf32>
    %256 = vector.shape_cast %255 : vector<32xf32> to vector<32x1xf32>
    %cst_95 = arith.constant 1.280000e+02 : f32
    %257 = vector.broadcast %cst_95 : f32 to vector<32x1xf32>
    %258 = arith.divf %256, %257 : vector<32x1xf32>
    %cst_96 = arith.constant 9.99999974E-6 : f32
    %259 = vector.broadcast %cst_96 : f32 to vector<32x1xf32>
    %260 = arith.addf %258, %259 : vector<32x1xf32>
    %261 = math.rsqrt %260 : vector<32x1xf32>
    %262 = vector.broadcast %261 : vector<32x1xf32> to vector<32x128xf32>
    %263 = arith.mulf %253, %262 : vector<32x128xf32>
    %c0_97 = arith.constant 0 : index
    %c0_98 = arith.constant 0 : index
    %264 = vector.load %arg15[%c0_97, %c0_98] : memref<1x128xf32, #tpu.memory_space<vmem>>, vector<1x128xf32>
    %265 = vector.broadcast %264 : vector<1x128xf32> to vector<32x128xf32>
    %266 = arith.mulf %263, %265 : vector<32x128xf32>
    %c0_99 = arith.constant 0 : index
    %c0_100 = arith.constant 0 : index
    %267 = vector.load %arg16[%c0_99, %c0_100] : memref<1x128xf32, #tpu.memory_space<vmem>>, vector<1x128xf32>
    %268 = vector.broadcast %267 : vector<1x128xf32> to vector<32x128xf32>
    %269 = arith.addf %266, %268 : vector<32x128xf32>
    %c0_101 = arith.constant 0 : index
    %c0_102 = arith.constant 0 : index
    %270 = vector.load %arg17[%c0_101, %c0_102] : memref<32x128xf32, #tpu.memory_space<vmem>>, vector<32x128xf32>
    tpu.vector_store %arg17[%c0_101, %c0_102], %269 {strides = array<i32>} : memref<32x128xf32, #tpu.memory_space<vmem>>, vector<32x128xf32>,
    return
  }
  func.func @transform_0(%arg0: i32) -> (i32, i32) {
    %c0_i32 = arith.constant 0 : i32
    %c0_i32_0 = arith.constant 0 : i32
    return %arg0, %c0_i32 : i32, i32
  }
  func.func @transform_1(%arg0: i32) -> (i32, i32) {
    %c0_i32 = arith.constant 0 : i32
    %c0_i32_0 = arith.constant 0 : i32
    %c0_i32_1 = arith.constant 0 : i32
    return %c0_i32, %c0_i32_0 : i32, i32
  }
  func.func @transform_2(%arg0: i32) -> (i32, i32) {
    %c0_i32 = arith.constant 0 : i32
    %c0_i32_0 = arith.constant 0 : i32
    %c0_i32_1 = arith.constant 0 : i32
    return %c0_i32, %c0_i32_0 : i32, i32
  }
  func.func @transform_3(%arg0: i32) -> (i32, i32) {
    %c0_i32 = arith.constant 0 : i32
    %c0_i32_0 = arith.constant 0 : i32
    %c0_i32_1 = arith.constant 0 : i32
    return %c0_i32, %c0_i32_0 : i32, i32
  }
  func.func @transform_4(%arg0: i32) -> (i32, i32) {
    %c0_i32 = arith.constant 0 : i32
    %c0_i32_0 = arith.constant 0 : i32
    %c0_i32_1 = arith.constant 0 : i32
    return %c0_i32, %c0_i32_0 : i32, i32
  }
  func.func @transform_5(%arg0: i32) -> (i32, i32) {
    %c0_i32 = arith.constant 0 : i32
    %c0_i32_0 = arith.constant 0 : i32
    %c0_i32_1 = arith.constant 0 : i32
    return %c0_i32, %c0_i32_0 : i32, i32
  }
  func.func @transform_6(%arg0: i32) -> (i32, i32, i32) {
    %c0_i32 = arith.constant 0 : i32
    %c0_i32_0 = arith.constant 0 : i32
    %c0_i32_1 = arith.constant 0 : i32
    %c0_i32_2 = arith.constant 0 : i32
    return %c0_i32, %c0_i32_0, %c0_i32_1 : i32, i32, i32
  }
  func.func @transform_7(%arg0: i32) -> (i32, i32) {
    %c0_i32 = arith.constant 0 : i32
    %c0_i32_0 = arith.constant 0 : i32
    %c0_i32_1 = arith.constant 0 : i32
    return %c0_i32, %c0_i32_0 : i32, i32
  }
  func.func @transform_8(%arg0: i32) -> (i32, i32) {
    %c0_i32 = arith.constant 0 : i32
    %c0_i32_0 = arith.constant 0 : i32
    %c0_i32_1 = arith.constant 0 : i32
    return %c0_i32, %c0_i32_0 : i32, i32
  }
  func.func @transform_9(%arg0: i32) -> (i32, i32) {
    %c0_i32 = arith.constant 0 : i32
    %c0_i32_0 = arith.constant 0 : i32
    %c0_i32_1 = arith.constant 0 : i32
    return %c0_i32, %c0_i32_0 : i32, i32
  }
  func.func @transform_10(%arg0: i32) -> (i32, i32) {
    %c0_i32 = arith.constant 0 : i32
    %c0_i32_0 = arith.constant 0 : i32
    %c0_i32_1 = arith.constant 0 : i32
    return %c0_i32, %c0_i32_0 : i32, i32
  }
  func.func @transform_11(%arg0: i32) -> (i32, i32) {
    %c0_i32 = arith.constant 0 : i32
    %c0_i32_0 = arith.constant 0 : i32
    %c0_i32_1 = arith.constant 0 : i32
    return %c0_i32, %c0_i32_0 : i32, i32
  }
  func.func @transform_12(%arg0: i32) -> (i32, i32) {
    %c0_i32 = arith.constant 0 : i32
    %c0_i32_0 = arith.constant 0 : i32
    %c0_i32_1 = arith.constant 0 : i32
    return %c0_i32, %c0_i32_0 : i32, i32
  }
  func.func @transform_13(%arg0: i32) -> (i32, i32) {
    %c0_i32 = arith.constant 0 : i32
    %c0_i32_0 = arith.constant 0 : i32
    %c0_i32_1 = arith.constant 0 : i32
    return %c0_i32, %c0_i32_0 : i32, i32
  }
  func.func @transform_14(%arg0: i32) -> (i32, i32) {
    %c0_i32 = arith.constant 0 : i32
    %c0_i32_0 = arith.constant 0 : i32
    %c0_i32_1 = arith.constant 0 : i32
    return %c0_i32, %c0_i32_0 : i32, i32
  }
  func.func @transform_15(%arg0: i32) -> (i32, i32) {
    %c0_i32 = arith.constant 0 : i32
    %c0_i32_0 = arith.constant 0 : i32
    %c0_i32_1 = arith.constant 0 : i32
    return %c0_i32, %c0_i32_0 : i32, i32
  }
  func.func @transform_16(%arg0: i32) -> (i32, i32) {
    %c0_i32 = arith.constant 0 : i32
    %c0_i32_0 = arith.constant 0 : i32
    return %arg0, %c0_i32 : i32, i32
  }
}

</mosaic_0001>

<llo_original>
// kernel: tpu_custom_call.1
$region0: #{tpu_custom_call.1}
  #allocation0 [shape = 'u32[]', space=smem, size = 0x4, offset = 0x4, fixed_abs, tag = 'smem constant byte address 0x4 - core index']
  #allocation1 [shape = 'u32[144,128]{1,0:T(1,128)}', space=vmem, size = 0x12000, scoped, tag = 'internal scratch']
  %s0 = inlined_call_operand.hbm [shape: f32[32,128], index: 0, kind: input, shape index: {}]
  %s1 = inlined_call_operand.hbm [shape: f32[32,128], index: 1, kind: input, shape index: {}]
  %s2 = inlined_call_operand.hbm [shape: bf16[128,128], index: 2, kind: input, shape index: {}]
  %s3 = inlined_call_operand.vmem [shape: f32[1,128], index: 3, kind: input, shape index: {}]
  %s4 = inlined_call_operand.hbm [shape: bf16[128,256], index: 4, kind: input, shape index: {}]
  %s5 = inlined_call_operand.vmem [shape: f32[1,256], index: 5, kind: input, shape index: {}]
  %s6 = inlined_call_operand.hbm [shape: bf16[8,16,128], index: 6, kind: input, shape index: {}]
  %s7 = inlined_call_operand.vmem [shape: f32[1,128], index: 7, kind: input, shape index: {}]
  %s8 = inlined_call_operand.vmem [shape: f32[1,128], index: 8, kind: input, shape index: {}]
  %s9 = inlined_call_operand.vmem [shape: f32[1,128], index: 9, kind: input, shape index: {}]
  %s10 = inlined_call_operand.hbm [shape: bf16[128,256], index: 10, kind: input, shape index: {}]
  %s11 = inlined_call_operand.vmem [shape: f32[1,256], index: 11, kind: input, shape index: {}]
  %s12 = inlined_call_operand.hbm [shape: bf16[256,128], index: 12, kind: input, shape index: {}]
  %s13 = inlined_call_operand.vmem [shape: f32[1,128], index: 13, kind: input, shape index: {}]
  %s14 = inlined_call_operand.vmem [shape: f32[1,128], index: 14, kind: input, shape index: {}]
  %s15 = inlined_call_operand.vmem [shape: f32[1,128], index: 15, kind: input, shape index: {}]
  %s16 = inlined_call_operand.hbm [shape: f32[32,128], index: 16, kind: output, shape index: {}]
  %s17 = sld [smem:[#allocation0]]
  $region102: #{tpu_custom_call.1} parent=0
    _
  %s19 = ssub.s32 1, %s17
  %s20 = scalar_select 0, %s19, %s17
  $region1: #{tpu_custom_call.1} parent=0
    #allocation2 [shape = 'u8[16384]{0}', space=vmem, size = 0x4000, scoped, tag = 'input window, operand 0, single buffered']
    #allocation3 [shape = 's32[1]{0}', space=sflag, size = 0x4, scoped, tag = 'scoped memory for tpu_custom_call.1']
    #allocation4 [shape = 's32[1]{0}', space=sflag, size = 0x4, scoped, tag = 'scoped memory for tpu_custom_call.1']
    #allocation5 [shape = 'u8[16384]{0}', space=vmem, size = 0x4000, scoped, tag = 'input window, operand 1, single buffered']
    #allocation6 [shape = 's32[1]{0}', space=sflag, size = 0x4, scoped, tag = 'scoped memory for tpu_custom_call.1']
    #allocation7 [shape = 'u8[32768]{0}', space=vmem, size = 0x8000, scoped, tag = 'input window, operand 2, single buffered']
    #allocation8 [shape = 'u8[65536]{0}', space=vmem, size = 0x10000, scoped, tag = 'input window, operand 4, single buffered']
    #allocation9 [shape = 's32[1]{0}', space=sflag, size = 0x4, scoped, tag = 'scoped memory for tpu_custom_call.1']
    #allocation10 [shape = 'u8[32768]{0}', space=vmem, size = 0x8000, scoped, tag = 'input window, operand 6, single buffered']
    #allocation11 [shape = 'u8[65536]{0}', space=vmem, size = 0x10000, scoped, tag = 'input window, operand 10, single buffered']
    #allocation12 [shape = 's32[1]{0}', space=sflag, size = 0x4, scoped, tag = 'scoped memory for tpu_custom_call.1']
    #allocation13 [shape = 'u8[65536]{0}', space=vmem, size = 0x10000, scoped, tag = 'input window, operand 12, single buffered']
    #allocation14 [shape = 'u8[16384]{0}', space=vmem, size = 0x4000, scoped, tag = 'output window, operand 0, single buffered']
    %21 = vsyncpa [#allocation3], 0
    %22 = vsyncpa [#allocation6], 0
    %23 = vsyncpa [#allocation9], 0
    %24 = vsyncpa [#allocation12], 0
    %25 = vsyncpa [#allocation4], 0
    // Predicated region
    $region2: #{tpu_custom_call.1} parent=1 // pred_check
      _
    $region3: #{tpu_custom_call.1} parent=1 // pred_check_branch
      %27 = sbr.rel (0) target = $region5
    $region4: #{tpu_custom_call.1} parent=1 // pred_region
      %s29 = ssub.s32 512, 512
      %30 = vsyncadd [#allocation3], %s29
      %s31 = sshll.u32 [#allocation2], 4
      %s32 = int_to_ptr.vmem [resolvable:$true] %s31
      %37 = dma.hbm_to_vmem [thread:$0]  %s0, 512, %s32, [#allocation3], 128, 128, 8
    $region5: #{tpu_custom_call.1} parent=1 // pred_fallthru
      _
    // Predicated region
    $region6: #{tpu_custom_call.1} parent=1 // pred_check
      _
    $region7: #{tpu_custom_call.1} parent=1 // pred_check_branch
      %39 = sbr.rel (0) target = $region9
    $region8: #{tpu_custom_call.1} parent=1 // pred_region
      %s41 = ssub.s32 512, 512
      %42 = vsyncadd [#allocation6], %s41
      %s43 = sshll.u32 [#allocation5], 4
      %s44 = int_to_ptr.vmem [resolvable:$true] %s43
      %49 = dma.hbm_to_vmem [thread:$0]  %s1, 512, %s44, [#allocation6], 128, 128, 8
    $region9: #{tpu_custom_call.1} parent=1 // pred_fallthru
      _
    // Predicated region
    $region10: #{tpu_custom_call.1} parent=1 // pred_check
      _
    $region11: #{tpu_custom_call.1} parent=1 // pred_check_branch
      %51 = sbr.rel (0) target = $region13
    $region12: #{tpu_custom_call.1} parent=1 // pred_region
      %s53 = ssub.s32 1024, 1024
      %54 = vsyncadd [#allocation6], %s53
      %s55 = sshll.u32 [#allocation7], 4
      %s56 = int_to_ptr.vmem [resolvable:$true] %s55
      %61 = dma.hbm_to_vmem [thread:$0]  %s2, 1024, %s56, [#allocation6], 64, 64, 4
    $region13: #{tpu_custom_call.1} parent=1 // pred_fallthru
      _
    // Predicated region
    $region14: #{tpu_custom_call.1} parent=1 // pred_check
      _
    $region15: #{tpu_custom_call.1} parent=1 // pred_check_branch
      %63 = sbr.rel (0) target = $region17
    $region16: #{tpu_custom_call.1} parent=1 // pred_region
      _
    $region17: #{tpu_custom_call.1} parent=1 // pred_fallthru
      _
    // Predicated region
    $region18: #{tpu_custom_call.1} parent=1 // pred_check
      _
    $region19: #{tpu_custom_call.1} parent=1 // pred_check_branch
      %65 = sbr.rel (0) target = $region21
    $region20: #{tpu_custom_call.1} parent=1 // pred_region
      %s67 = ssub.s32 2048, 2048
      %68 = vsyncadd [#allocation9], %s67
      %s69 = sshll.u32 [#allocation8], 4
      %s70 = int_to_ptr.vmem [resolvable:$true] %s69
      %75 = dma.hbm_to_vmem [thread:$0]  %s4, 2048, %s70, [#allocation9], 128, 128, 8
    $region21: #{tpu_custom_call.1} parent=1 // pred_fallthru
      _
    // Predicated region
    $region22: #{tpu_custom_call.1} parent=1 // pred_check
      _
    $region23: #{tpu_custom_call.1} parent=1 // pred_check_branch
      %77 = sbr.rel (0) target = $region25
    $region24: #{tpu_custom_call.1} parent=1 // pred_region
      _
    $region25: #{tpu_custom_call.1} parent=1 // pred_fallthru
      _
    // Predicated region
    $region26: #{tpu_custom_call.1} parent=1 // pred_check
      _
    $region27: #{tpu_custom_call.1} parent=1 // pred_check_branch
      %79 = sbr.rel (0) target = $region29
    $region28: #{tpu_custom_call.1} parent=1 // pred_region
      %s81 = ssub.s32 1024, 1024
      %82 = vsyncadd [#allocation9], %s81
      %s83 = sshll.u32 [#allocation10], 4
      %s84 = int_to_ptr.vmem [resolvable:$true] %s83
      %89 = dma.hbm_to_vmem [thread:$0]  %s6, 1024, %s84, [#allocation9], 64, 64, 4
    $region29: #{tpu_custom_call.1} parent=1 // pred_fallthru
      _
    // Predicated region
    $region30: #{tpu_custom_call.1} parent=1 // pred_check
      _
    $region31: #{tpu_custom_call.1} parent=1 // pred_check_branch
      %91 = sbr.rel (0) target = $region33
    $region32: #{tpu_custom_call.1} parent=1 // pred_region
      _
    $region33: #{tpu_custom_call.1} parent=1 // pred_fallthru
      _
    // Predicated region
    $region34: #{tpu_custom_call.1} parent=1 // pred_check
      _
    $region35: #{tpu_custom_call.1} parent=1 // pred_check_branch
      %93 = sbr.rel (0) target = $region37
    $region36: #{tpu_custom_call.1} parent=1 // pred_region
      _
    $region37: #{tpu_custom_call.1} parent=1 // pred_fallthru
      _
    // Predicated region
    $region38: #{tpu_custom_call.1} parent=1 // pred_check
      _
    $region39: #{tpu_custom_call.1} parent=1 // pred_check_branch
      %95 = sbr.rel (0) target = $region41
    $region40: #{tpu_custom_call.1} parent=1 // pred_region
      _
    $region41: #{tpu_custom_call.1} parent=1 // pred_fallthru
      _
    // Predicated region
    $region42: #{tpu_custom_call.1} parent=1 // pred_check
      _
    $region43: #{tpu_custom_call.1} parent=1 // pred_check_branch
      %97 = sbr.rel (0) target = $region45
    $region44: #{tpu_custom_call.1} parent=1 // pred_region
      %s99 = ssub.s32 2048, 2048
      %100 = vsyncadd [#allocation12], %s99
      %s101 = sshll.u32 [#allocation11], 4
      %s102 = int_to_ptr.vmem [resolvable:$true] %s101
      %107 = dma.hbm_to_vmem [thread:$0]  %s10, 2048, %s102, [#allocation12], 128, 128, 8
    $region45: #{tpu_custom_call.1} parent=1 // pred_fallthru
      _
    // Predicated region
    $region46: #{tpu_custom_call.1} parent=1 // pred_check
      _
    $region47: #{tpu_custom_call.1} parent=1 // pred_check_branch
      %109 = sbr.rel (0) target = $region49
    $region48: #{tpu_custom_call.1} parent=1 // pred_region
      _
    $region49: #{tpu_custom_call.1} parent=1 // pred_fallthru
      _
    // Predicated region
    $region50: #{tpu_custom_call.1} parent=1 // pred_check
      _
    $region51: #{tpu_custom_call.1} parent=1 // pred_check_branch
      %111 = sbr.rel (0) target = $region53
    $region52: #{tpu_custom_call.1} parent=1 // pred_region
      %s113 = ssub.s32 2048, 2048
      %114 = vsyncadd [#allocation12], %s113
      %s115 = sshll.u32 [#allocation13], 4
      %s116 = int_to_ptr.vmem [resolvable:$true] %s115
      %121 = dma.hbm_to_vmem [thread:$0]  %s12, 2048, %s116, [#allocation12], 64, 64, 4
    $region53: #{tpu_custom_call.1} parent=1 // pred_fallthru
      _
    // Predicated region
    $region54: #{tpu_custom_call.1} parent=1 // pred_check
      _
    $region55: #{tpu_custom_call.1} parent=1 // pred_check_branch
      %123 = sbr.rel (0) target = $region57
    $region56: #{tpu_custom_call.1} parent=1 // pred_region
      _
    $region57: #{tpu_custom_call.1} parent=1 // pred_fallthru
      _
    // Predicated region
    $region58: #{tpu_custom_call.1} parent=1 // pred_check
      _
    $region59: #{tpu_custom_call.1} parent=1 // pred_check_branch
      %125 = sbr.rel (0) target = $region61
    $region60: #{tpu_custom_call.1} parent=1 // pred_region
      _
    $region61: #{tpu_custom_call.1} parent=1 // pred_fallthru
      _
    // Predicated region
    $region62: #{tpu_custom_call.1} parent=1 // pred_check
      _
    $region63: #{tpu_custom_call.1} parent=1 // pred_check_branch
      %127 = sbr.rel (0) target = $region65
    $region64: #{tpu_custom_call.1} parent=1 // pred_region
      _
    $region65: #{tpu_custom_call.1} parent=1 // pred_fallthru
      _
    // Predicated region
    $region66: #{tpu_custom_call.1} parent=1 // pred_check
      _
    $region67: #{tpu_custom_call.1} parent=1 // pred_check_branch
      %129 = sbr.rel (0) target = $region69
    $region68: #{tpu_custom_call.1} parent=1 // pred_region
      %130 = dma.done [#allocation3], 512
    $region69: #{tpu_custom_call.1} parent=1 // pred_fallthru
      _
    // Predicated region
    $region70: #{tpu_custom_call.1} parent=1 // pred_check
      _
    $region71: #{tpu_custom_call.1} parent=1 // pred_check_branch
      %132 = sbr.rel (0) target = $region73
    $region72: #{tpu_custom_call.1} parent=1 // pred_region
      %133 = dma.done [#allocation6], 512
    $region73: #{tpu_custom_call.1} parent=1 // pred_fallthru
      _
    // Predicated region
    $region74: #{tpu_custom_call.1} parent=1 // pred_check
      _
    $region75: #{tpu_custom_call.1} parent=1 // pred_check_branch
      %135 = sbr.rel (0) target = $region77
    $region76: #{tpu_custom_call.1} parent=1 // pred_region
      %136 = dma.done [#allocation6], 1024
    $region77: #{tpu_custom_call.1} parent=1 // pred_fallthru
      _
    // Predicated region
    $region78: #{tpu_custom_call.1} parent=1 // pred_check
      _
    $region79: #{tpu_custom_call.1} parent=1 // pred_check_branch
      %138 = sbr.rel (0) target = $region81
    $region80: #{tpu_custom_call.1} parent=1 // pred_region
      %139 = dma.done [#allocation9], 2048
    $region81: #{tpu_custom_call.1} parent=1 // pred_fallthru
      _
    // Predicated region
    $region82: #{tpu_custom_call.1} parent=1 // pred_check
      _
    $region83: #{tpu_custom_call.1} parent=1 // pred_check_branch
      %141 = sbr.rel (0) target = $region85
    $region84: #{tpu_custom_call.1} parent=1 // pred_region
      %142 = dma.done [#allocation9], 1024
    $region85: #{tpu_custom_call.1} parent=1 // pred_fallthru
      _
    // Predicated region
    $region86: #{tpu_custom_call.1} parent=1 // pred_check
      _
    $region87: #{tpu_custom_call.1} parent=1 // pred_check_branch
      %144 = sbr.rel (0) target = $region89
    $region88: #{tpu_custom_call.1} parent=1 // pred_region
      %145 = dma.done [#allocation12], 2048
    $region89: #{tpu_custom_call.1} parent=1 // pred_fallthru
      _
    // Predicated region
    $region90: #{tpu_custom_call.1} parent=1 // pred_check
      _
    $region91: #{tpu_custom_call.1} parent=1 // pred_check_branch
      %147 = sbr.rel (0) target = $region93
    $region92: #{tpu_custom_call.1} parent=1 // pred_region
      %148 = dma.done [#allocation12], 2048
    $region93: #{tpu_custom_call.1} parent=1 // pred_fallthru
      _
    %v150 = vld [vmem:[#allocation2] sm:$0xff]
    %v151 = vld [vmem:[#allocation2 + $0x8] sm:$0xff]
    %v152 = vld [vmem:[#allocation2 + $0x10] sm:$0xff]
    %v153 = vld [vmem:[#allocation2 + $0x18] sm:$0xff]
    %v154 = vld [vmem:[#allocation5] sm:$0xff]
    %v155 = vld [vmem:[#allocation5 + $0x8] sm:$0xff]
    %v156 = vld [vmem:[#allocation5 + $0x10] sm:$0xff]
    %v157 = vld [vmem:[#allocation5 + $0x18] sm:$0xff]
    %v158 = vpack.c.bf16 %v151, %v150
    %v159 = vpack.c.bf16 %v153, %v152
    %v160 = vld [vmem:[#allocation7] sm:$0xf]
    %v161 = vld [vmem:[#allocation7 + $0x4] sm:$0xf]
    %v162 = vld [vmem:[#allocation7 + $0x8] sm:$0xf]
    %v163 = vld [vmem:[#allocation7 + $0xc] sm:$0xf]
    %v164 = vld [vmem:[#allocation7 + $0x10] sm:$0xf]
    %v165 = vld [vmem:[#allocation7 + $0x14] sm:$0xf]
    %v166 = vld [vmem:[#allocation7 + $0x18] sm:$0xf]
    %v167 = vld [vmem:[#allocation7 + $0x1c] sm:$0xf]
    %v168 = vld [vmem:[#allocation7 + $0x20] sm:$0xf]
    %v169 = vld [vmem:[#allocation7 + $0x24] sm:$0xf]
    %v170 = vld [vmem:[#allocation7 + $0x28] sm:$0xf]
    %v171 = vld [vmem:[#allocation7 + $0x2c] sm:$0xf]
    %v172 = vld [vmem:[#allocation7 + $0x30] sm:$0xf]
    %v173 = vld [vmem:[#allocation7 + $0x34] sm:$0xf]
    %v174 = vld [vmem:[#allocation7 + $0x38] sm:$0xf]
    %v175 = vld [vmem:[#allocation7 + $0x3c] sm:$0xf]
    %v176 = vld [vmem:[%s3] sm:$0x1]
    %v178 = vlaneseq
    %v179 = vshrl.u32 %v178, 7
    %v180 = vsub.s32 0, %v179
    %v181 = vrot.slane %v176, %v180
    %v199 = vunpack.c.l.b16 %v160
    %v200 = vunpack.c.l.b16 %v161
    %v201 = vunpack.c.l.b16 %v162
    %v202 = vunpack.c.l.b16 %v163
    %v203 = vunpack.c.l.b16 %v164
    %v204 = vunpack.c.l.b16 %v165
    %v205 = vunpack.c.l.b16 %v166
    %v206 = vunpack.c.l.b16 %v167
    %v207 = vunpack.c.l.b16 %v168
    %v208 = vunpack.c.l.b16 %v169
    %v209 = vunpack.c.l.b16 %v170
    %v210 = vunpack.c.l.b16 %v171
    %v211 = vunpack.c.l.b16 %v172
    %v212 = vunpack.c.l.b16 %v173
    %v213 = vunpack.c.l.b16 %v174
    %v214 = vunpack.c.l.b16 %v175
    %v215 = vpack.c.b16 %v200, %v199
    %v216 = vpack.c.b16 %v202, %v201
    %v217 = vpack.c.b16 %v204, %v203
    %v218 = vpack.c.b16 %v206, %v205
    %v219 = vpack.c.b16 %v208, %v207
    %v220 = vpack.c.b16 %v210, %v209
    %v221 = vpack.c.b16 %v212, %v211
    %v222 = vpack.c.b16 %v214, %v213
    %231 = vmatprep.subr.bf16.mxu0 0
    %232 = vmatpush1.bf16.msra.mxu0 %v215
    %233 = vmatprep.subr.bf16.mxu0 0
    %234 = vmatpush1.bf16.msra.mxu0 %v216
    %235 = vmatprep.subr.bf16.mxu0 0
    %236 = vmatpush1.bf16.msra.mxu0 %v217
    %237 = vmatprep.subr.bf16.mxu0 0
    %238 = vmatpush1.bf16.msra.mxu0 %v218
    %239 = vmatprep.subr.bf16.mxu0 0
    %240 = vmatpush1.bf16.msra.mxu0 %v219
    %241 = vmatprep.subr.bf16.mxu0 0
    %242 = vmatpush1.bf16.msra.mxu0 %v220
    %243 = vmatprep.subr.bf16.mxu0 0
    %244 = vmatpush1.bf16.msra.mxu0 %v221
    %245 = vmatprep.subr.bf16.mxu0 0
    %246 = vmatpush1.bf16.msra.mxu0 %v222
    %247 = vmatprep.subr.bf16.mxu0 0
    %248 = vmatpush1.bf16.msra.mxu0 0
    %249 = vmatprep.subr.bf16.mxu0 0
    %250 = vmatpush1.bf16.msra.mxu0 0
    %251 = vmatprep.subr.bf16.mxu0 0
    %252 = vmatpush1.bf16.msra.mxu0 0
    %253 = vmatprep.subr.bf16.mxu0 0
    %254 = vmatpush1.bf16.msra.mxu0 0
    %255 = vmatprep.subr.bf16.mxu0 0
    %256 = vmatpush1.bf16.msra.mxu0 0
    %257 = vmatprep.subr.bf16.mxu0 0
    %258 = vmatpush1.bf16.msra.mxu0 0
    %259 = vmatprep.subr.bf16.mxu0 0
    %260 = vmatpush1.bf16.msra.mxu0 0
    %261 = vmatprep.subr.bf16.mxu0 0
    %262 = vmatpush1.bf16.msra.mxu0 0
    %263 = vmatprep.mubr.bf16.mxu0 0
    %264 = vmatmul.mubr.bf16.gmra.mrb[0].mxu0 %v158
    %v265 = vpop.f32.mrb[0].mxu0
    %v266 = vadd.f32 %v181, %v265
    %v267 = vpop.f32.mrb[0].mxu0
    %v268 = vpop.f32.mrb[0].mxu0
    %v269 = vadd.f32 %v181, %v268
    %v270 = vpop.f32.mrb[0].mxu0
    %271 = vmatprep.mubr.bf16.mxu0 0
    %272 = vmatmul.mubr.bf16.gmra.mrb[0].mxu0 %v159
    %v273 = vpop.f32.mrb[0].mxu0
    %v274 = vadd.f32 %v181, %v273
    %v275 = vpop.f32.mrb[0].mxu0
    %v276 = vpop.f32.mrb[0].mxu0
    %v277 = vadd.f32 %v181, %v276
    %v278 = vpop.f32.mrb[0].mxu0
    %279 = vdwg.mxu0
    %v280 = vpack.c.bf16 %v155, %v154
    %v281 = vpack.c.bf16 %v157, %v156
    %v282 = vld [vmem:[#allocation8] sm:$0xff]
    %v283 = vld [vmem:[#allocation8 + $0x8] sm:$0xff]
    %v284 = vld [vmem:[#allocation8 + $0x10] sm:$0xff]
    %v285 = vld [vmem:[#allocation8 + $0x18] sm:$0xff]
    %v286 = vld [vmem:[#allocation8 + $0x20] sm:$0xff]
    %v287 = vld [vmem:[#allocation8 + $0x28] sm:$0xff]
    %v288 = vld [vmem:[#allocation8 + $0x30] sm:$0xff]
    %v289 = vld [vmem:[#allocation8 + $0x38] sm:$0xff]
    %v290 = vld [vmem:[#allocation8 + $0x40] sm:$0xff]
    %v291 = vld [vmem:[#allocation8 + $0x48] sm:$0xff]
    %v292 = vld [vmem:[#allocation8 + $0x50] sm:$0xff]
    %v293 = vld [vmem:[#allocation8 + $0x58] sm:$0xff]
    %v294 = vld [vmem:[#allocation8 + $0x60] sm:$0xff]
    %v295 = vld [vmem:[#allocation8 + $0x68] sm:$0xff]
    %v296 = vld [vmem:[#allocation8 + $0x70] sm:$0xff]
    %v297 = vld [vmem:[#allocation8 + $0x78] sm:$0xff]
    %v298 = vld [vmem:[%s5] sm:$0x3]
    %v300 = vlaneseq
    %v301 = vshrl.u32 %v300, 7
    %v302 = vsub.s32 0, %v301
    %v303 = vrot.slane %v298, %v302
    %v304 = vlaneseq
    %v305 = vshrl.u32 %v304, 7
    %v306 = vsub.s32 1, %v305
    %v307 = vrot.slane %v298, %v306
    %v326 = vunpack.c.l.b16 %v282
    %v327 = vunpack.c.h.b16 %v282
    %v328 = vunpack.c.l.b16 %v283
    %v329 = vunpack.c.h.b16 %v283
    %v330 = vunpack.c.l.b16 %v284
    %v331 = vunpack.c.h.b16 %v284
    %v332 = vunpack.c.l.b16 %v285
    %v333 = vunpack.c.h.b16 %v285
    %v334 = vunpack.c.l.b16 %v286
    %v335 = vunpack.c.h.b16 %v286
    %v336 = vunpack.c.l.b16 %v287
    %v337 = vunpack.c.h.b16 %v287
    %v338 = vunpack.c.l.b16 %v288
    %v339 = vunpack.c.h.b16 %v288
    %v340 = vunpack.c.l.b16 %v289
    %v341 = vunpack.c.h.b16 %v289
    %v342 = vunpack.c.l.b16 %v290
    %v343 = vunpack.c.h.b16 %v290
    %v344 = vunpack.c.l.b16 %v291
    %v345 = vunpack.c.h.b16 %v291
    %v346 = vunpack.c.l.b16 %v292
    %v347 = vunpack.c.h.b16 %v292
    %v348 = vunpack.c.l.b16 %v293
    %v349 = vunpack.c.h.b16 %v293
    %v350 = vunpack.c.l.b16 %v294
    %v351 = vunpack.c.h.b16 %v294
    %v352 = vunpack.c.l.b16 %v295
    %v353 = vunpack.c.h.b16 %v295
    %v354 = vunpack.c.l.b16 %v296
    %v355 = vunpack.c.h.b16 %v296
    %v356 = vunpack.c.l.b16 %v297
    %v357 = vunpack.c.h.b16 %v297
    %v358 = vpack.c.b16 %v328, %v326
    %v359 = vpack.c.b16 %v329, %v327
    %v360 = vpack.c.b16 %v332, %v330
    %v361 = vpack.c.b16 %v333, %v331
    %v362 = vpack.c.b16 %v336, %v334
    %v363 = vpack.c.b16 %v337, %v335
    %v364 = vpack.c.b16 %v340, %v338
    %v365 = vpack.c.b16 %v341, %v339
    %v366 = vpack.c.b16 %v344, %v342
    %v367 = vpack.c.b16 %v345, %v343
    %v368 = vpack.c.b16 %v348, %v346
    %v369 = vpack.c.b16 %v349, %v347
    %v370 = vpack.c.b16 %v352, %v350
    %v371 = vpack.c.b16 %v353, %v351
    %v372 = vpack.c.b16 %v356, %v354
    %v373 = vpack.c.b16 %v357, %v355
    %390 = vmatprep.subr.bf16.mxu0 %v359
    %391 = vmatpush1.bf16.msra.mxu0 %v358
    %392 = vmatprep.subr.bf16.mxu0 %v361
    %393 = vmatpush1.bf16.msra.mxu0 %v360
    %394 = vmatprep.subr.bf16.mxu0 %v363
    %395 = vmatpush1.bf16.msra.mxu0 %v362
    %396 = vmatprep.subr.bf16.mxu0 %v365
    %397 = vmatpush1.bf16.msra.mxu0 %v364
    %398 = vmatprep.subr.bf16.mxu0 %v367
    %399 = vmatpush1.bf16.msra.mxu0 %v366
    %400 = vmatprep.subr.bf16.mxu0 %v369
    %401 = vmatpush1.bf16.msra.mxu0 %v368
    %402 = vmatprep.subr.bf16.mxu0 %v371
    %403 = vmatpush1.bf16.msra.mxu0 %v370
    %404 = vmatprep.subr.bf16.mxu0 %v373
    %405 = vmatpush1.bf16.msra.mxu0 %v372
    %406 = vmatprep.subr.bf16.mxu0 0
    %407 = vmatpush1.bf16.msra.mxu0 0
    %408 = vmatprep.subr.bf16.mxu0 0
    %409 = vmatpush1.bf16.msra.mxu0 0
    %410 = vmatprep.subr.bf16.mxu0 0
    %411 = vmatpush1.bf16.msra.mxu0 0
    %412 = vmatprep.subr.bf16.mxu0 0
    %413 = vmatpush1.bf16.msra.mxu0 0
    %414 = vmatprep.subr.bf16.mxu0 0
    %415 = vmatpush1.bf16.msra.mxu0 0
    %416 = vmatprep.subr.bf16.mxu0 0
    %417 = vmatpush1.bf16.msra.mxu0 0
    %418 = vmatprep.subr.bf16.mxu0 0
    %419 = vmatpush1.bf16.msra.mxu0 0
    %420 = vmatprep.subr.bf16.mxu0 0
    %421 = vmatpush1.bf16.msra.mxu0 0
    %422 = vmatprep.mubr.bf16.mxu0 0
    %423 = vmatmul.mubr.bf16.gmra.mrb[0].mxu0 %v280
    %v424 = vpop.f32.mrb[0].mxu0
    %v425 = vadd.f32 %v303, %v424
    %v426 = vpop.f32.mrb[0].mxu0
    %v427 = vadd.f32 %v307, %v426
    %v428 = vpop.f32.mrb[0].mxu0
    %v429 = vadd.f32 %v303, %v428
    %v430 = vpop.f32.mrb[0].mxu0
    %v431 = vadd.f32 %v307, %v430
    %432 = vmatprep.mubr.bf16.mxu0 0
    %433 = vmatmul.mubr.bf16.gmra.mrb[0].mxu0 %v281
    %v434 = vpop.f32.mrb[0].mxu0
    %v435 = vadd.f32 %v303, %v434
    %v436 = vpop.f32.mrb[0].mxu0
    %v437 = vadd.f32 %v307, %v436
    %v438 = vpop.f32.mrb[0].mxu0
    %v439 = vadd.f32 %v303, %v438
    %v440 = vpop.f32.mrb[0].mxu0
    %v441 = vadd.f32 %v307, %v440
    %442 = vdwg.mxu0
    %v443 = vpack.c.bf16 %v269, %v266
    %v444 = vpack.c.bf16 %v277, %v274
    %v445 = vpack.c.bf16 %v429, %v425
    %v446 = vpack.c.bf16 %v439, %v435
    %v447 = vpack.c.bf16 %v431, %v427
    %v448 = vpack.c.bf16 %v441, %v437
    %vm449 = vcmask 130048
    %v451 = vsel %vm449, %v443, 0
    %v454 = vsel %vm449, %v444, 0
    %v457 = vsel %vm449, %v445, 0
    %v460 = vsel %vm449, %v446, 0
    %462 = vmatprep.subr.bf16.mxu0 0
    %463 = vmatpush1.bf16.xpose.msra.mxu0 %v457
    %464 = vmatprep.subr.bf16.mxu0 0
    %465 = vmatpush1.bf16.xpose.msra.mxu0 %v460
    %466 = vmatprep.subr.bf16.mxu0 0
    %467 = vmatpush1.bf16.xpose.msra.mxu0 0
    %468 = vmatprep.subr.bf16.mxu0 0
    %469 = vmatpush1.bf16.xpose.msra.mxu0 0
    %470 = vmatprep.subr.bf16.mxu0 0
    %471 = vmatpush1.bf16.xpose.msra.mxu0 0
    %472 = vmatprep.subr.bf16.mxu0 0
    %473 = vmatpush1.bf16.xpose.msra.mxu0 0
    %474 = vmatprep.subr.bf16.mxu0 0
    %475 = vmatpush1.bf16.xpose.msra.mxu0 0
    %476 = vmatprep.subr.bf16.mxu0 0
    %477 = vmatpush1.bf16.xpose.msra.mxu0 0
    %478 = vmatprep.subr.bf16.mxu0 0
    %479 = vmatpush1.bf16.xpose.msra.mxu0 0
    %480 = vmatprep.subr.bf16.mxu0 0
    %481 = vmatpush1.bf16.xpose.msra.mxu0 0
    %482 = vmatprep.subr.bf16.mxu0 0
    %483 = vmatpush1.bf16.xpose.msra.mxu0 0
    %484 = vmatprep.subr.bf16.mxu0 0
    %485 = vmatpush1.bf16.xpose.msra.mxu0 0
    %486 = vmatprep.subr.bf16.mxu0 0
    %487 = vmatpush1.bf16.xpose.msra.mxu0 0
    %488 = vmatprep.subr.bf16.mxu0 0
    %489 = vmatpush1.bf16.xpose.msra.mxu0 0
    %490 = vmatprep.subr.bf16.mxu0 0
    %491 = vmatpush1.bf16.xpose.msra.mxu0 0
    %492 = vmatprep.subr.bf16.mxu0 0
    %493 = vmatpush1.bf16.xpose.msra.mxu0 0
    %494 = vmatprep.mubr.bf16.mxu0 0
    %495 = vmatmul.mubr.bf16.gmra.mrb[0].mxu0 %v451
    %v496 = vpop.f32.mrb[0].mxu0
    %v497 = vadd.f32 0.0, %v496
    %v498 = vpop.f32.mrb[0].mxu0
    %v499 = vpop.f32.mrb[0].mxu0
    %v500 = vadd.f32 0.0, %v499
    %v501 = vpop.f32.mrb[0].mxu0
    %502 = vmatprep.mubr.bf16.mxu0 0
    %503 = vmatmul.mubr.bf16.gmra.mrb[0].mxu0 %v454
    %v504 = vpop.f32.mrb[0].mxu0
    %v505 = vadd.f32 0.0, %v504
    %v506 = vpop.f32.mrb[0].mxu0
    %v507 = vpop.f32.mrb[0].mxu0
    %v508 = vadd.f32 0.0, %v507
    %v509 = vpop.f32.mrb[0].mxu0
    %510 = vdwg.mxu0
    %vm511 = vcmask 261120
    %v512 = vsel %vm511, %v497, -inf
    %513 = vmax.xlane.f32.xlu0 %v512
    %v514 = vpop.xlane.xlu0 %513
    %v515 = vsel %vm511, %v500, -inf
    %516 = vmax.xlane.f32.xlu0 %v515
    %v517 = vpop.xlane.xlu0 %516
    %v518 = vsel %vm511, %v505, -inf
    %519 = vmax.xlane.f32.xlu0 %v518
    %v520 = vpop.xlane.xlu0 %519
    %v521 = vsel %vm511, %v508, -inf
    %522 = vmax.xlane.f32.xlu0 %v521
    %v523 = vpop.xlane.xlu0 %522
    %v524 = vsub.f32 %v497, %v514
    %v525 = vsub.f32 %v500, %v517
    %v526 = vsub.f32 %v505, %v520
    %v527 = vsub.f32 %v508, %v523
    %v528 = vmul.f32 %v524, 1.442695
    %v529 = vpow.pop %v528
    %v530 = vmul.f32 %v525, 1.442695
    %v531 = vpow.pop %v530
    %v532 = vmul.f32 %v526, 1.442695
    %v533 = vpow.pop %v532
    %v534 = vmul.f32 %v527, 1.442695
    %v535 = vpow.pop %v534
    %v536 = vsel %vm511, %v529, 0.0
    %537 = vadd.xlane.f32.xlu0 %v536
    %v538 = vpop.xlane.xlu0 %537
    %v539 = vsel %vm511, %v531, 0.0
    %540 = vadd.xlane.f32.xlu0 %v539
    %v541 = vpop.xlane.xlu0 %540
    %v542 = vsel %vm511, %v533, 0.0
    %543 = vadd.xlane.f32.xlu0 %v542
    %v544 = vpop.xlane.xlu0 %543
    %v545 = vsel %vm511, %v535, 0.0
    %546 = vadd.xlane.f32.xlu0 %v545
    %v547 = vpop.xlane.xlu0 %546
    %v548 = vrcp.pop %v538
    %v549 = vrcp.pop %v541
    %v550 = vrcp.pop %v544
    %v551 = vrcp.pop %v547
    %v552 = vmul.f32 %v529, %v548
    %v553 = vmul.f32 %v531, %v549
    %v554 = vmul.f32 %v533, %v550
    %v555 = vmul.f32 %v535, %v551
    %v556 = vpack.c.bf16 %v553, %v552
    %v557 = vpack.c.bf16 %v555, %v554
    %v559 = vsel %vm511, %v556, 0
    %v562 = vsel %vm511, %v557, 0
    %564 = vmatprep.subr.bf16.mxu0 0
    %565 = vmatpush1.bf16.msra.mxu0 %v447
    %566 = vmatprep.subr.bf16.mxu0 0
    %567 = vmatpush1.bf16.msra.mxu0 %v448
    %568 = vmatprep.subr.bf16.mxu0 0
    %569 = vmatpush1.bf16.msra.mxu0 0
    %570 = vmatprep.subr.bf16.mxu0 0
    %571 = vmatpush1.bf16.msra.mxu0 0
    %572 = vmatprep.subr.bf16.mxu0 0
    %573 = vmatpush1.bf16.msra.mxu0 0
    %574 = vmatprep.subr.bf16.mxu0 0
    %575 = vmatpush1.bf16.msra.mxu0 0
    %576 = vmatprep.subr.bf16.mxu0 0
    %577 = vmatpush1.bf16.msra.mxu0 0
    %578 = vmatprep.subr.bf16.mxu0 0
    %579 = vmatpush1.bf16.msra.mxu0 0
    %580 = vmatprep.subr.bf16.mxu0 0
    %581 = vmatpush1.bf16.msra.mxu0 0
    %582 = vmatprep.subr.bf16.mxu0 0
    %583 = vmatpush1.bf16.msra.mxu0 0
    %584 = vmatprep.subr.bf16.mxu0 0
    %585 = vmatpush1.bf16.msra.mxu0 0
    %586 = vmatprep.subr.bf16.mxu0 0
    %587 = vmatpush1.bf16.msra.mxu0 0
    %588 = vmatprep.subr.bf16.mxu0 0
    %589 = vmatpush1.bf16.msra.mxu0 0
    %590 = vmatprep.subr.bf16.mxu0 0
    %591 = vmatpush1.bf16.msra.mxu0 0
    %592 = vmatprep.subr.bf16.mxu0 0
    %593 = vmatpush1.bf16.msra.mxu0 0
    %594 = vmatprep.subr.bf16.mxu0 0
    %595 = vmatpush1.bf16.msra.mxu0 0
    %596 = vmatprep.mubr.bf16.mxu0 0
    %597 = vmatmul.mubr.bf16.gmra.mrb[0].mxu0 %v559
    %v598 = vpop.f32.mrb[0].mxu0
    %v599 = vadd.f32 0.0, %v598
    %v600 = vpop.f32.mrb[0].mxu0
    %v601 = vpop.f32.mrb[0].mxu0
    %v602 = vadd.f32 0.0, %v601
    %v603 = vpop.f32.mrb[0].mxu0
    %604 = vmatprep.mubr.bf16.mxu0 0
    %605 = vmatmul.mubr.bf16.gmra.mrb[0].mxu0 %v562
    %v606 = vpop.f32.mrb[0].mxu0
    %v607 = vadd.f32 0.0, %v606
    %v608 = vpop.f32.mrb[0].mxu0
    %v609 = vpop.f32.mrb[0].mxu0
    %v610 = vadd.f32 0.0, %v609
    %v611 = vpop.f32.mrb[0].mxu0
    %612 = vdwg.mxu0
    %v613 = vpack.c.bf16 %v602, %v599
    %v614 = vpack.c.bf16 %v610, %v607
    %v615 = vld [vmem:[#allocation10] sm:$0xf]
    %v616 = vld [vmem:[#allocation10 + $0x4] sm:$0xf]
    %619 = vrot.lane.b32.xlu0 %v443, 112
    %v620 = vpop.permute.xlu0 %619
    %621 = vrot.lane.b32.xlu0 %v444, 112
    %v622 = vpop.permute.xlu0 %621
    %625 = vrot.lane.b32.xlu0 %v445, 112
    %v626 = vpop.permute.xlu0 %625
    %627 = vrot.lane.b32.xlu0 %v446, 112
    %v628 = vpop.permute.xlu0 %627
    %v630 = vsel %vm449, %v620, 0
    %v633 = vsel %vm449, %v622, 0
    %v636 = vsel %vm449, %v626, 0
    %v639 = vsel %vm449, %v628, 0
    %641 = vmatprep.subr.bf16.mxu0 0
    %642 = vmatpush1.bf16.xpose.msra.mxu0 %v636
    %643 = vmatprep.subr.bf16.mxu0 0
    %644 = vmatpush1.bf16.xpose.msra.mxu0 %v639
    %645 = vmatprep.subr.bf16.mxu0 0
    %646 = vmatpush1.bf16.xpose.msra.mxu0 0
    %647 = vmatprep.subr.bf16.mxu0 0
    %648 = vmatpush1.bf16.xpose.msra.mxu0 0
    %649 = vmatprep.subr.bf16.mxu0 0
    %650 = vmatpush1.bf16.xpose.msra.mxu0 0
    %651 = vmatprep.subr.bf16.mxu0 0
    %652 = vmatpush1.bf16.xpose.msra.mxu0 0
    %653 = vmatprep.subr.bf16.mxu0 0
    %654 = vmatpush1.bf16.xpose.msra.mxu0 0
    %655 = vmatprep.subr.bf16.mxu0 0
    %656 = vmatpush1.bf16.xpose.msra.mxu0 0
    %657 = vmatprep.subr.bf16.mxu0 0
    %658 = vmatpush1.bf16.xpose.msra.mxu0 0
    %659 = vmatprep.subr.bf16.mxu0 0
    %660 = vmatpush1.bf16.xpose.msra.mxu0 0
    %661 = vmatprep.subr.bf16.mxu0 0
    %662 = vmatpush1.bf16.xpose.msra.mxu0 0
    %663 = vmatprep.subr.bf16.mxu0 0
    %664 = vmatpush1.bf16.xpose.msra.mxu0 0
    %665 = vmatprep.subr.bf16.mxu0 0
    %666 = vmatpush1.bf16.xpose.msra.mxu0 0
    %667 = vmatprep.subr.bf16.mxu0 0
    %668 = vmatpush1.bf16.xpose.msra.mxu0 0
    %669 = vmatprep.subr.bf16.mxu0 0
    %670 = vmatpush1.bf16.xpose.msra.mxu0 0
    %671 = vmatprep.subr.bf16.mxu0 0
    %672 = vmatpush1.bf16.xpose.msra.mxu0 0
    %673 = vmatprep.mubr.bf16.mxu0 0
    %674 = vmatmul.mubr.bf16.gmra.mrb[0].mxu0 %v630
    %v675 = vpop.f32.mrb[0].mxu0
    %v676 = vadd.f32 0.0, %v675
    %v677 = vpop.f32.mrb[0].mxu0
    %v678 = vpop.f32.mrb[0].mxu0
    %v679 = vadd.f32 0.0, %v678
    %v680 = vpop.f32.mrb[0].mxu0
    %681 = vmatprep.mubr.bf16.mxu0 0
    %682 = vmatmul.mubr.bf16.gmra.mrb[0].mxu0 %v633
    %v683 = vpop.f32.mrb[0].mxu0
    %v684 = vadd.f32 0.0, %v683
    %v685 = vpop.f32.mrb[0].mxu0
    %v686 = vpop.f32.mrb[0].mxu0
    %v687 = vadd.f32 0.0, %v686
    %v688 = vpop.f32.mrb[0].mxu0
    %689 = vdwg.mxu0
    %v690 = vsel %vm511, %v676, -inf
    %691 = vmax.xlane.f32.xlu0 %v690
    %v692 = vpop.xlane.xlu0 %691
    %v693 = vsel %vm511, %v679, -inf
    %694 = vmax.xlane.f32.xlu0 %v693
    %v695 = vpop.xlane.xlu0 %694
    %v696 = vsel %vm511, %v684, -inf
    %697 = vmax.xlane.f32.xlu0 %v696
    %v698 = vpop.xlane.xlu0 %697
    %v699 = vsel %vm511, %v687, -inf
    %700 = vmax.xlane.f32.xlu0 %v699
    %v701 = vpop.xlane.xlu0 %700
    %v702 = vsub.f32 %v676, %v692
    %v703 = vsub.f32 %v679, %v695
    %v704 = vsub.f32 %v684, %v698
    %v705 = vsub.f32 %v687, %v701
    %v706 = vmul.f32 %v702, 1.442695
    %v707 = vpow.pop %v706
    %v708 = vmul.f32 %v703, 1.442695
    %v709 = vpow.pop %v708
    %v710 = vmul.f32 %v704, 1.442695
    %v711 = vpow.pop %v710
    %v712 = vmul.f32 %v705, 1.442695
    %v713 = vpow.pop %v712
    %v714 = vsel %vm511, %v707, 0.0
    %715 = vadd.xlane.f32.xlu0 %v714
    %v716 = vpop.xlane.xlu0 %715
    %v717 = vsel %vm511, %v709, 0.0
    %718 = vadd.xlane.f32.xlu0 %v717
    %v719 = vpop.xlane.xlu0 %718
    %v720 = vsel %vm511, %v711, 0.0
    %721 = vadd.xlane.f32.xlu0 %v720
    %v722 = vpop.xlane.xlu0 %721
    %v723 = vsel %vm511, %v713, 0.0
    %724 = vadd.xlane.f32.xlu0 %v723
    %v725 = vpop.xlane.xlu0 %724
    %v726 = vrcp.pop %v716
    %v727 = vrcp.pop %v719
    %v728 = vrcp.pop %v722
    %v729 = vrcp.pop %v725
    %v730 = vmul.f32 %v707, %v726
    %v731 = vmul.f32 %v709, %v727
    %v732 = vmul.f32 %v711, %v728
    %v733 = vmul.f32 %v713, %v729
    %v734 = vpack.c.bf16 %v731, %v730
    %v735 = vpack.c.bf16 %v733, %v732
    %738 = vrot.lane.b32.xlu0 %v447, 112
    %v739 = vpop.permute.xlu0 %738
    %740 = vrot.lane.b32.xlu0 %v448, 112
    %v741 = vpop.permute.xlu0 %740
    %v745 = vsel %vm511, %v734, 0
    %v748 = vsel %vm511, %v735, 0
    %750 = vmatprep.subr.bf16.mxu0 0
    %751 = vmatpush1.bf16.msra.mxu0 %v739
    %752 = vmatprep.subr.bf16.mxu0 0
    %753 = vmatpush1.bf16.msra.mxu0 %v741
    %754 = vmatprep.subr.bf16.mxu0 0
    %755 = vmatpush1.bf16.msra.mxu0 0
    %756 = vmatprep.subr.bf16.mxu0 0
    %757 = vmatpush1.bf16.msra.mxu0 0
    %758 = vmatprep.subr.bf16.mxu0 0
    %759 = vmatpush1.bf16.msra.mxu0 0
    %760 = vmatprep.subr.bf16.mxu0 0
    %761 = vmatpush1.bf16.msra.mxu0 0
    %762 = vmatprep.subr.bf16.mxu0 0
    %763 = vmatpush1.bf16.msra.mxu0 0
    %764 = vmatprep.subr.bf16.mxu0 0
    %765 = vmatpush1.bf16.msra.mxu0 0
    %766 = vmatprep.subr.bf16.mxu0 0
    %767 = vmatpush1.bf16.msra.mxu0 0
    %768 = vmatprep.subr.bf16.mxu0 0
    %769 = vmatpush1.bf16.msra.mxu0 0
    %770 = vmatprep.subr.bf16.mxu0 0
    %771 = vmatpush1.bf16.msra.mxu0 0
    %772 = vmatprep.subr.bf16.mxu0 0
    %773 = vmatpush1.bf16.msra.mxu0 0
    %774 = vmatprep.subr.bf16.mxu0 0
    %775 = vmatpush1.bf16.msra.mxu0 0
    %776 = vmatprep.subr.bf16.mxu0 0
    %777 = vmatpush1.bf16.msra.mxu0 0
    %778 = vmatprep.subr.bf16.mxu0 0
    %779 = vmatpush1.bf16.msra.mxu0 0
    %780 = vmatprep.subr.bf16.mxu0 0
    %781 = vmatpush1.bf16.msra.mxu0 0
    %782 = vmatprep.mubr.bf16.mxu0 0
    %783 = vmatmul.mubr.bf16.gmra.mrb[0].mxu0 %v745
    %v784 = vpop.f32.mrb[0].mxu0
    %v785 = vadd.f32 0.0, %v784
    %v786 = vpop.f32.mrb[0].mxu0
    %v787 = vpop.f32.mrb[0].mxu0
    %v788 = vadd.f32 0.0, %v787
    %v789 = vpop.f32.mrb[0].mxu0
    %790 = vmatprep.mubr.bf16.mxu0 0
    %791 = vmatmul.mubr.bf16.gmra.mrb[0].mxu0 %v748
    %v792 = vpop.f32.mrb[0].mxu0
    %v793 = vadd.f32 0.0, %v792
    %v794 = vpop.f32.mrb[0].mxu0
    %v795 = vpop.f32.mrb[0].mxu0
    %v796 = vadd.f32 0.0, %v795
    %v797 = vpop.f32.mrb[0].mxu0
    %798 = vdwg.mxu0
    %v799 = vpack.c.bf16 %v788, %v785
    %v800 = vpack.c.bf16 %v796, %v793
    %s801 = scalar_lea.vmem [#allocation10], 8
    %v802 = vld [vmem:[%s801] sm:$0xf]
    %v803 = vld [vmem:[%s801 + $0x4] sm:$0xf]
    %v806 = vunpack.c.l.b16 %v802
    %v807 = vunpack.c.l.b16 %v803
    %v808 = vpack.c.b16 %v807, %v806
    %v811 = vsel %vm449, %v799, 0
    %v814 = vsel %vm449, %v800, 0
    %816 = vmatprep.subr.bf16.mxu0 0
    %817 = vmatpush1.bf16.msra.mxu0 %v808
    %818 = vmatprep.subr.bf16.mxu0 0
    %819 = vmatpush1.bf16.msra.mxu0 0
    %820 = vmatprep.subr.bf16.mxu0 0
    %821 = vmatpush1.bf16.msra.mxu0 0
    %822 = vmatprep.subr.bf16.mxu0 0
    %823 = vmatpush1.bf16.msra.mxu0 0
    %824 = vmatprep.subr.bf16.mxu0 0
    %825 = vmatpush1.bf16.msra.mxu0 0
    %826 = vmatprep.subr.bf16.mxu0 0
    %827 = vmatpush1.bf16.msra.mxu0 0
    %828 = vmatprep.subr.bf16.mxu0 0
    %829 = vmatpush1.bf16.msra.mxu0 0
    %830 = vmatprep.subr.bf16.mxu0 0
    %831 = vmatpush1.bf16.msra.mxu0 0
    %832 = vmatprep.subr.bf16.mxu0 0
    %833 = vmatpush1.bf16.msra.mxu0 0
    %834 = vmatprep.subr.bf16.mxu0 0
    %835 = vmatpush1.bf16.msra.mxu0 0
    %836 = vmatprep.subr.bf16.mxu0 0
    %837 = vmatpush1.bf16.msra.mxu0 0
    %838 = vmatprep.subr.bf16.mxu0 0
    %839 = vmatpush1.bf16.msra.mxu0 0
    %840 = vmatprep.subr.bf16.mxu0 0
    %841 = vmatpush1.bf16.msra.mxu0 0
    %842 = vmatprep.subr.bf16.mxu0 0
    %843 = vmatpush1.bf16.msra.mxu0 0
    %844 = vmatprep.subr.bf16.mxu0 0
    %845 = vmatpush1.bf16.msra.mxu0 0
    %846 = vmatprep.subr.bf16.mxu0 0
    %847 = vmatpush1.bf16.msra.mxu0 0
    %848 = vmatprep.mubr.bf16.mxu0 0
    %849 = vmatmul.mubr.bf16.gmra.mrb[0].mxu0 %v811
    %v850 = vpop.f32.mrb[0].mxu0
    %v851 = vadd.f32 0.0, %v850
    %v852 = vpop.f32.mrb[0].mxu0
    %v853 = vpop.f32.mrb[0].mxu0
    %v854 = vadd.f32 0.0, %v853
    %v855 = vpop.f32.mrb[0].mxu0
    %856 = vmatprep.mubr.bf16.mxu0 0
    %857 = vmatmul.mubr.bf16.gmra.mrb[0].mxu0 %v814
    %v858 = vpop.f32.mrb[0].mxu0
    %v859 = vadd.f32 0.0, %v858
    %v860 = vpop.f32.mrb[0].mxu0
    %v861 = vpop.f32.mrb[0].mxu0
    %v862 = vadd.f32 0.0, %v861
    %v863 = vpop.f32.mrb[0].mxu0
    %864 = vdwg.mxu0
    %v867 = vunpack.c.l.b16 %v615
    %v868 = vunpack.c.l.b16 %v616
    %v869 = vpack.c.b16 %v868, %v867
    %v872 = vsel %vm449, %v613, 0
    %v875 = vsel %vm449, %v614, 0
    %877 = vmatprep.subr.bf16.mxu0 0
    %878 = vmatpush1.bf16.msra.mxu0 %v869
    %879 = vmatprep.subr.bf16.mxu0 0
    %880 = vmatpush1.bf16.msra.mxu0 0
    %881 = vmatprep.subr.bf16.mxu0 0
    %882 = vmatpush1.bf16.msra.mxu0 0
    %883 = vmatprep.subr.bf16.mxu0 0
    %884 = vmatpush1.bf16.msra.mxu0 0
    %885 = vmatprep.subr.bf16.mxu0 0
    %886 = vmatpush1.bf16.msra.mxu0 0
    %887 = vmatprep.subr.bf16.mxu0 0
    %888 = vmatpush1.bf16.msra.mxu0 0
    %889 = vmatprep.subr.bf16.mxu0 0
    %890 = vmatpush1.bf16.msra.mxu0 0
    %891 = vmatprep.subr.bf16.mxu0 0
    %892 = vmatpush1.bf16.msra.mxu0 0
    %893 = vmatprep.subr.bf16.mxu0 0
    %894 = vmatpush1.bf16.msra.mxu0 0
    %895 = vmatprep.subr.bf16.mxu0 0
    %896 = vmatpush1.bf16.msra.mxu0 0
    %897 = vmatprep.subr.bf16.mxu0 0
    %898 = vmatpush1.bf16.msra.mxu0 0
    %899 = vmatprep.subr.bf16.mxu0 0
    %900 = vmatpush1.bf16.msra.mxu0 0
    %901 = vmatprep.subr.bf16.mxu0 0
    %902 = vmatpush1.bf16.msra.mxu0 0
    %903 = vmatprep.subr.bf16.mxu0 0
    %904 = vmatpush1.bf16.msra.mxu0 0
    %905 = vmatprep.subr.bf16.mxu0 0
    %906 = vmatpush1.bf16.msra.mxu0 0
    %907 = vmatprep.subr.bf16.mxu0 0
    %908 = vmatpush1.bf16.msra.mxu0 0
    %909 = vmatprep.mubr.bf16.mxu0 0
    %910 = vmatmul.mubr.bf16.gmra.mrb[0].mxu0 %v872
    %v911 = vpop.f32.mrb[0].mxu0
    %v912 = vadd.f32 %v851, %v911
    %v913 = vpop.f32.mrb[0].mxu0
    %v914 = vpop.f32.mrb[0].mxu0
    %v915 = vadd.f32 %v854, %v914
    %v916 = vpop.f32.mrb[0].mxu0
    %917 = vmatprep.mubr.bf16.mxu0 0
    %918 = vmatmul.mubr.bf16.gmra.mrb[0].mxu0 %v875
    %v919 = vpop.f32.mrb[0].mxu0
    %v920 = vadd.f32 %v859, %v919
    %v921 = vpop.f32.mrb[0].mxu0
    %v922 = vpop.f32.mrb[0].mxu0
    %v923 = vadd.f32 %v862, %v922
    %v924 = vpop.f32.mrb[0].mxu0
    %925 = vdwg.mxu0
    %926 = vrot.lane.b32.xlu0 %v443, 96
    %v927 = vpop.permute.xlu0 %926
    %928 = vrot.lane.b32.xlu0 %v444, 96
    %v929 = vpop.permute.xlu0 %928
    %930 = vrot.lane.b32.xlu0 %v445, 96
    %v931 = vpop.permute.xlu0 %930
    %932 = vrot.lane.b32.xlu0 %v446, 96
    %v933 = vpop.permute.xlu0 %932
    %v935 = vsel %vm449, %v927, 0
    %v938 = vsel %vm449, %v929, 0
    %v941 = vsel %vm449, %v931, 0
    %v944 = vsel %vm449, %v933, 0
    %946 = vmatprep.subr.bf16.mxu0 0
    %947 = vmatpush1.bf16.xpose.msra.mxu0 %v941
    %948 = vmatprep.subr.bf16.mxu0 0
    %949 = vmatpush1.bf16.xpose.msra.mxu0 %v944
    %950 = vmatprep.subr.bf16.mxu0 0
    %951 = vmatpush1.bf16.xpose.msra.mxu0 0
    %952 = vmatprep.subr.bf16.mxu0 0
    %953 = vmatpush1.bf16.xpose.msra.mxu0 0
    %954 = vmatprep.subr.bf16.mxu0 0
    %955 = vmatpush1.bf16.xpose.msra.mxu0 0
    %956 = vmatprep.subr.bf16.mxu0 0
    %957 = vmatpush1.bf16.xpose.msra.mxu0 0
    %958 = vmatprep.subr.bf16.mxu0 0
    %959 = vmatpush1.bf16.xpose.msra.mxu0 0
    %960 = vmatprep.subr.bf16.mxu0 0
    %961 = vmatpush1.bf16.xpose.msra.mxu0 0
    %962 = vmatprep.subr.bf16.mxu0 0
    %963 = vmatpush1.bf16.xpose.msra.mxu0 0
    %964 = vmatprep.subr.bf16.mxu0 0
    %965 = vmatpush1.bf16.xpose.msra.mxu0 0
    %966 = vmatprep.subr.bf16.mxu0 0
    %967 = vmatpush1.bf16.xpose.msra.mxu0 0
    %968 = vmatprep.subr.bf16.mxu0 0
    %969 = vmatpush1.bf16.xpose.msra.mxu0 0
    %970 = vmatprep.subr.bf16.mxu0 0
    %971 = vmatpush1.bf16.xpose.msra.mxu0 0
    %972 = vmatprep.subr.bf16.mxu0 0
    %973 = vmatpush1.bf16.xpose.msra.mxu0 0
    %974 = vmatprep.subr.bf16.mxu0 0
    %975 = vmatpush1.bf16.xpose.msra.mxu0 0
    %976 = vmatprep.subr.bf16.mxu0 0
    %977 = vmatpush1.bf16.xpose.msra.mxu0 0
    %978 = vmatprep.mubr.bf16.mxu0 0
    %979 = vmatmul.mubr.bf16.gmra.mrb[0].mxu0 %v935
    %v980 = vpop.f32.mrb[0].mxu0
    %v981 = vadd.f32 0.0, %v980
    %v982 = vpop.f32.mrb[0].mxu0
    %v983 = vpop.f32.mrb[0].mxu0
    %v984 = vadd.f32 0.0, %v983
    %v985 = vpop.f32.mrb[0].mxu0
    %986 = vmatprep.mubr.bf16.mxu0 0
    %987 = vmatmul.mubr.bf16.gmra.mrb[0].mxu0 %v938
    %v988 = vpop.f32.mrb[0].mxu0
    %v989 = vadd.f32 0.0, %v988
    %v990 = vpop.f32.mrb[0].mxu0
    %v991 = vpop.f32.mrb[0].mxu0
    %v992 = vadd.f32 0.0, %v991
    %v993 = vpop.f32.mrb[0].mxu0
    %994 = vdwg.mxu0
    %v995 = vsel %vm511, %v981, -inf
    %996 = vmax.xlane.f32.xlu0 %v995
    %v997 = vpop.xlane.xlu0 %996
    %v998 = vsel %vm511, %v984, -inf
    %999 = vmax.xlane.f32.xlu0 %v998
    %v1000 = vpop.xlane.xlu0 %999
    %v1001 = vsel %vm511, %v989, -inf
    %1002 = vmax.xlane.f32.xlu0 %v1001
    %v1003 = vpop.xlane.xlu0 %1002
    %v1004 = vsel %vm511, %v992, -inf
    %1005 = vmax.xlane.f32.xlu0 %v1004
    %v1006 = vpop.xlane.xlu0 %1005
    %v1007 = vsub.f32 %v981, %v997
    %v1008 = vsub.f32 %v984, %v1000
    %v1009 = vsub.f32 %v989, %v1003
    %v1010 = vsub.f32 %v992, %v1006
    %v1011 = vmul.f32 %v1007, 1.442695
    %v1012 = vpow.pop %v1011
    %v1013 = vmul.f32 %v1008, 1.442695
    %v1014 = vpow.pop %v1013
    %v1015 = vmul.f32 %v1009, 1.442695
    %v1016 = vpow.pop %v1015
    %v1017 = vmul.f32 %v1010, 1.442695
    %v1018 = vpow.pop %v1017
    %v1019 = vsel %vm511, %v1012, 0.0
    %1020 = vadd.xlane.f32.xlu0 %v1019
    %v1021 = vpop.xlane.xlu0 %1020
    %v1022 = vsel %vm511, %v1014, 0.0
    %1023 = vadd.xlane.f32.xlu0 %v1022
    %v1024 = vpop.xlane.xlu0 %1023
    %v1025 = vsel %vm511, %v1016, 0.0
    %1026 = vadd.xlane.f32.xlu0 %v1025
    %v1027 = vpop.xlane.xlu0 %1026
    %v1028 = vsel %vm511, %v1018, 0.0
    %1029 = vadd.xlane.f32.xlu0 %v1028
    %v1030 = vpop.xlane.xlu0 %1029
    %v1031 = vrcp.pop %v1021
    %v1032 = vrcp.pop %v1024
    %v1033 = vrcp.pop %v1027
    %v1034 = vrcp.pop %v1030
    %v1035 = vmul.f32 %v1012, %v1031
    %v1036 = vmul.f32 %v1014, %v1032
    %v1037 = vmul.f32 %v1016, %v1033
    %v1038 = vmul.f32 %v1018, %v1034
    %v1039 = vpack.c.bf16 %v1036, %v1035
    %v1040 = vpack.c.bf16 %v1038, %v1037
    %1041 = vrot.lane.b32.xlu0 %v447, 96
    %v1042 = vpop.permute.xlu0 %1041
    %1043 = vrot.lane.b32.xlu0 %v448, 96
    %v1044 = vpop.permute.xlu0 %1043
    %v1048 = vsel %vm511, %v1039, 0
    %v1051 = vsel %vm511, %v1040, 0
    %1053 = vmatprep.subr.bf16.mxu0 0
    %1054 = vmatpush1.bf16.msra.mxu0 %v1042
    %1055 = vmatprep.subr.bf16.mxu0 0
    %1056 = vmatpush1.bf16.msra.mxu0 %v1044
    %1057 = vmatprep.subr.bf16.mxu0 0
    %1058 = vmatpush1.bf16.msra.mxu0 0
    %1059 = vmatprep.subr.bf16.mxu0 0
    %1060 = vmatpush1.bf16.msra.mxu0 0
    %1061 = vmatprep.subr.bf16.mxu0 0
    %1062 = vmatpush1.bf16.msra.mxu0 0
    %1063 = vmatprep.subr.bf16.mxu0 0
    %1064 = vmatpush1.bf16.msra.mxu0 0
    %1065 = vmatprep.subr.bf16.mxu0 0
    %1066 = vmatpush1.bf16.msra.mxu0 0
    %1067 = vmatprep.subr.bf16.mxu0 0
    %1068 = vmatpush1.bf16.msra.mxu0 0
    %1069 = vmatprep.subr.bf16.mxu0 0
    %1070 = vmatpush1.bf16.msra.mxu0 0
    %1071 = vmatprep.subr.bf16.mxu0 0
    %1072 = vmatpush1.bf16.msra.mxu0 0
    %1073 = vmatprep.subr.bf16.mxu0 0
    %1074 = vmatpush1.bf16.msra.mxu0 0
    %1075 = vmatprep.subr.bf16.mxu0 0
    %1076 = vmatpush1.bf16.msra.mxu0 0
    %1077 = vmatprep.subr.bf16.mxu0 0
    %1078 = vmatpush1.bf16.msra.mxu0 0
    %1079 = vmatprep.subr.bf16.mxu0 0
    %1080 = vmatpush1.bf16.msra.mxu0 0
    %1081 = vmatprep.subr.bf16.mxu0 0
    %1082 = vmatpush1.bf16.msra.mxu0 0
    %1083 = vmatprep.subr.bf16.mxu0 0
    %1084 = vmatpush1.bf16.msra.mxu0 0
    %1085 = vmatprep.mubr.bf16.mxu0 0
    %1086 = vmatmul.mubr.bf16.gmra.mrb[0].mxu0 %v1048
    %v1087 = vpop.f32.mrb[0].mxu0
    %v1088 = vadd.f32 0.0, %v1087
    %v1089 = vpop.f32.mrb[0].mxu0
    %v1090 = vpop.f32.mrb[0].mxu0
    %v1091 = vadd.f32 0.0, %v1090
    %v1092 = vpop.f32.mrb[0].mxu0
    %1093 = vmatprep.mubr.bf16.mxu0 0
    %1094 = vmatmul.mubr.bf16.gmra.mrb[0].mxu0 %v1051
    %v1095 = vpop.f32.mrb[0].mxu0
    %v1096 = vadd.f32 0.0, %v1095
    %v1097 = vpop.f32.mrb[0].mxu0
    %v1098 = vpop.f32.mrb[0].mxu0
    %v1099 = vadd.f32 0.0, %v1098
    %v1100 = vpop.f32.mrb[0].mxu0
    %1101 = vdwg.mxu0
    %v1102 = vpack.c.bf16 %v1091, %v1088
    %v1103 = vpack.c.bf16 %v1099, %v1096
    %s1104 = scalar_lea.vmem [#allocation10], 16
    %v1105 = vld [vmem:[%s1104] sm:$0xf]
    %v1106 = vld [vmem:[%s1104 + $0x4] sm:$0xf]
    %v1109 = vunpack.c.l.b16 %v1105
    %v1110 = vunpack.c.l.b16 %v1106
    %v1111 = vpack.c.b16 %v1110, %v1109
    %v1114 = vsel %vm449, %v1102, 0
    %v1117 = vsel %vm449, %v1103, 0
    %1119 = vmatprep.subr.bf16.mxu0 0
    %1120 = vmatpush1.bf16.msra.mxu0 %v1111
    %1121 = vmatprep.subr.bf16.mxu0 0
    %1122 = vmatpush1.bf16.msra.mxu0 0
    %1123 = vmatprep.subr.bf16.mxu0 0
    %1124 = vmatpush1.bf16.msra.mxu0 0
    %1125 = vmatprep.subr.bf16.mxu0 0
    %1126 = vmatpush1.bf16.msra.mxu0 0
    %1127 = vmatprep.subr.bf16.mxu0 0
    %1128 = vmatpush1.bf16.msra.mxu0 0
    %1129 = vmatprep.subr.bf16.mxu0 0
    %1130 = vmatpush1.bf16.msra.mxu0 0
    %1131 = vmatprep.subr.bf16.mxu0 0
    %1132 = vmatpush1.bf16.msra.mxu0 0
    %1133 = vmatprep.subr.bf16.mxu0 0
    %1134 = vmatpush1.bf16.msra.mxu0 0
    %1135 = vmatprep.subr.bf16.mxu0 0
    %1136 = vmatpush1.bf16.msra.mxu0 0
    %1137 = vmatprep.subr.bf16.mxu0 0
    %1138 = vmatpush1.bf16.msra.mxu0 0
    %1139 = vmatprep.subr.bf16.mxu0 0
    %1140 = vmatpush1.bf16.msra.mxu0 0
    %1141 = vmatprep.subr.bf16.mxu0 0
    %1142 = vmatpush1.bf16.msra.mxu0 0
    %1143 = vmatprep.subr.bf16.mxu0 0
    %1144 = vmatpush1.bf16.msra.mxu0 0
    %1145 = vmatprep.subr.bf16.mxu0 0
    %1146 = vmatpush1.bf16.msra.mxu0 0
    %1147 = vmatprep.subr.bf16.mxu0 0
    %1148 = vmatpush1.bf16.msra.mxu0 0
    %1149 = vmatprep.subr.bf16.mxu0 0
    %1150 = vmatpush1.bf16.msra.mxu0 0
    %1151 = vmatprep.mubr.bf16.mxu0 0
    %1152 = vmatmul.mubr.bf16.gmra.mrb[0].mxu0 %v1114
    %v1153 = vpop.f32.mrb[0].mxu0
    %v1154 = vadd.f32 0.0, %v1153
    %v1155 = vpop.f32.mrb[0].mxu0
    %v1156 = vpop.f32.mrb[0].mxu0
    %v1157 = vadd.f32 0.0, %v1156
    %v1158 = vpop.f32.mrb[0].mxu0
    %1159 = vmatprep.mubr.bf16.mxu0 0
    %1160 = vmatmul.mubr.bf16.gmra.mrb[0].mxu0 %v1117
    %v1161 = vpop.f32.mrb[0].mxu0
    %v1162 = vadd.f32 0.0, %v1161
    %v1163 = vpop.f32.mrb[0].mxu0
    %v1164 = vpop.f32.mrb[0].mxu0
    %v1165 = vadd.f32 0.0, %v1164
    %v1166 = vpop.f32.mrb[0].mxu0
    %1167 = vdwg.mxu0
    %v1168 = vadd.f32 %v912, %v1154
    %v1169 = vadd.f32 %v915, %v1157
    %v1170 = vadd.f32 %v920, %v1162
    %v1171 = vadd.f32 %v923, %v1165
    %1172 = vrot.lane.b32.xlu0 %v443, 80
    %v1173 = vpop.permute.xlu0 %1172
    %1174 = vrot.lane.b32.xlu0 %v444, 80
    %v1175 = vpop.permute.xlu0 %1174
    %1176 = vrot.lane.b32.xlu0 %v445, 80
    %v1177 = vpop.permute.xlu0 %1176
    %1178 = vrot.lane.b32.xlu0 %v446, 80
    %v1179 = vpop.permute.xlu0 %1178
    %v1181 = vsel %vm449, %v1173, 0
    %v1184 = vsel %vm449, %v1175, 0
    %v1187 = vsel %vm449, %v1177, 0
    %v1190 = vsel %vm449, %v1179, 0
    %1192 = vmatprep.subr.bf16.mxu0 0
    %1193 = vmatpush1.bf16.xpose.msra.mxu0 %v1187
    %1194 = vmatprep.subr.bf16.mxu0 0
    %1195 = vmatpush1.bf16.xpose.msra.mxu0 %v1190
    %1196 = vmatprep.subr.bf16.mxu0 0
    %1197 = vmatpush1.bf16.xpose.msra.mxu0 0
    %1198 = vmatprep.subr.bf16.mxu0 0
    %1199 = vmatpush1.bf16.xpose.msra.mxu0 0
    %1200 = vmatprep.subr.bf16.mxu0 0
    %1201 = vmatpush1.bf16.xpose.msra.mxu0 0
    %1202 = vmatprep.subr.bf16.mxu0 0
    %1203 = vmatpush1.bf16.xpose.msra.mxu0 0
    %1204 = vmatprep.subr.bf16.mxu0 0
    %1205 = vmatpush1.bf16.xpose.msra.mxu0 0
    %1206 = vmatprep.subr.bf16.mxu0 0
    %1207 = vmatpush1.bf16.xpose.msra.mxu0 0
    %1208 = vmatprep.subr.bf16.mxu0 0
    %1209 = vmatpush1.bf16.xpose.msra.mxu0 0
    %1210 = vmatprep.subr.bf16.mxu0 0
    %1211 = vmatpush1.bf16.xpose.msra.mxu0 0
    %1212 = vmatprep.subr.bf16.mxu0 0
    %1213 = vmatpush1.bf16.xpose.msra.mxu0 0
    %1214 = vmatprep.subr.bf16.mxu0 0
    %1215 = vmatpush1.bf16.xpose.msra.mxu0 0
    %1216 = vmatprep.subr.bf16.mxu0 0
    %1217 = vmatpush1.bf16.xpose.msra.mxu0 0
    %1218 = vmatprep.subr.bf16.mxu0 0
    %1219 = vmatpush1.bf16.xpose.msra.mxu0 0
    %1220 = vmatprep.subr.bf16.mxu0 0
    %1221 = vmatpush1.bf16.xpose.msra.mxu0 0
    %1222 = vmatprep.subr.bf16.mxu0 0
    %1223 = vmatpush1.bf16.xpose.msra.mxu0 0
    %1224 = vmatprep.mubr.bf16.mxu0 0
    %1225 = vmatmul.mubr.bf16.gmra.mrb[0].mxu0 %v1181
    %v1226 = vpop.f32.mrb[0].mxu0
    %v1227 = vadd.f32 0.0, %v1226
    %v1228 = vpop.f32.mrb[0].mxu0
    %v1229 = vpop.f32.mrb[0].mxu0
    %v1230 = vadd.f32 0.0, %v1229
    %v1231 = vpop.f32.mrb[0].mxu0
    %1232 = vmatprep.mubr.bf16.mxu0 0
    %1233 = vmatmul.mubr.bf16.gmra.mrb[0].mxu0 %v1184
    %v1234 = vpop.f32.mrb[0].mxu0
    %v1235 = vadd.f32 0.0, %v1234
    %v1236 = vpop.f32.mrb[0].mxu0
    %v1237 = vpop.f32.mrb[0].mxu0
    %v1238 = vadd.f32 0.0, %v1237
    %v1239 = vpop.f32.mrb[0].mxu0
    %1240 = vdwg.mxu0
    %v1241 = vsel %vm511, %v1227, -inf
    %1242 = vmax.xlane.f32.xlu0 %v1241
    %v1243 = vpop.xlane.xlu0 %1242
    %v1244 = vsel %vm511, %v1230, -inf
    %1245 = vmax.xlane.f32.xlu0 %v1244
    %v1246 = vpop.xlane.xlu0 %1245
    %v1247 = vsel %vm511, %v1235, -inf
    %1248 = vmax.xlane.f32.xlu0 %v1247
    %v1249 = vpop.xlane.xlu0 %1248
    %v1250 = vsel %vm511, %v1238, -inf
    %1251 = vmax.xlane.f32.xlu0 %v1250
    %v1252 = vpop.xlane.xlu0 %1251
    %v1253 = vsub.f32 %v1227, %v1243
    %v1254 = vsub.f32 %v1230, %v1246
    %v1255 = vsub.f32 %v1235, %v1249
    %v1256 = vsub.f32 %v1238, %v1252
    %v1257 = vmul.f32 %v1253, 1.442695
    %v1258 = vpow.pop %v1257
    %v1259 = vmul.f32 %v1254, 1.442695
    %v1260 = vpow.pop %v1259
    %v1261 = vmul.f32 %v1255, 1.442695
    %v1262 = vpow.pop %v1261
    %v1263 = vmul.f32 %v1256, 1.442695
    %v1264 = vpow.pop %v1263
    %v1265 = vsel %vm511, %v1258, 0.0
    %1266 = vadd.xlane.f32.xlu0 %v1265
    %v1267 = vpop.xlane.xlu0 %1266
    %v1268 = vsel %vm511, %v1260, 0.0
    %1269 = vadd.xlane.f32.xlu0 %v1268
    %v1270 = vpop.xlane.xlu0 %1269
    %v1271 = vsel %vm511, %v1262, 0.0
    %1272 = vadd.xlane.f32.xlu0 %v1271
    %v1273 = vpop.xlane.xlu0 %1272
    %v1274 = vsel %vm511, %v1264, 0.0
    %1275 = vadd.xlane.f32.xlu0 %v1274
    %v1276 = vpop.xlane.xlu0 %1275
    %v1277 = vrcp.pop %v1267
    %v1278 = vrcp.pop %v1270
    %v1279 = vrcp.pop %v1273
    %v1280 = vrcp.pop %v1276
    %v1281 = vmul.f32 %v1258, %v1277
    %v1282 = vmul.f32 %v1260, %v1278
    %v1283 = vmul.f32 %v1262, %v1279
    %v1284 = vmul.f32 %v1264, %v1280
    %v1285 = vpack.c.bf16 %v1282, %v1281
    %v1286 = vpack.c.bf16 %v1284, %v1283
    %1287 = vrot.lane.b32.xlu0 %v447, 80
    %v1288 = vpop.permute.xlu0 %1287
    %1289 = vrot.lane.b32.xlu0 %v448, 80
    %v1290 = vpop.permute.xlu0 %1289
    %v1294 = vsel %vm511, %v1285, 0
    %v1297 = vsel %vm511, %v1286, 0
    %1299 = vmatprep.subr.bf16.mxu0 0
    %1300 = vmatpush1.bf16.msra.mxu0 %v1288
    %1301 = vmatprep.subr.bf16.mxu0 0
    %1302 = vmatpush1.bf16.msra.mxu0 %v1290
    %1303 = vmatprep.subr.bf16.mxu0 0
    %1304 = vmatpush1.bf16.msra.mxu0 0
    %1305 = vmatprep.subr.bf16.mxu0 0
    %1306 = vmatpush1.bf16.msra.mxu0 0
    %1307 = vmatprep.subr.bf16.mxu0 0
    %1308 = vmatpush1.bf16.msra.mxu0 0
    %1309 = vmatprep.subr.bf16.mxu0 0
    %1310 = vmatpush1.bf16.msra.mxu0 0
    %1311 = vmatprep.subr.bf16.mxu0 0
    %1312 = vmatpush1.bf16.msra.mxu0 0
    %1313 = vmatprep.subr.bf16.mxu0 0
    %1314 = vmatpush1.bf16.msra.mxu0 0
    %1315 = vmatprep.subr.bf16.mxu0 0
    %1316 = vmatpush1.bf16.msra.mxu0 0
    %1317 = vmatprep.subr.bf16.mxu0 0
    %1318 = vmatpush1.bf16.msra.mxu0 0
    %1319 = vmatprep.subr.bf16.mxu0 0
    %1320 = vmatpush1.bf16.msra.mxu0 0
    %1321 = vmatprep.subr.bf16.mxu0 0
    %1322 = vmatpush1.bf16.msra.mxu0 0
    %1323 = vmatprep.subr.bf16.mxu0 0
    %1324 = vmatpush1.bf16.msra.mxu0 0
    %1325 = vmatprep.subr.bf16.mxu0 0
    %1326 = vmatpush1.bf16.msra.mxu0 0
    %1327 = vmatprep.subr.bf16.mxu0 0
    %1328 = vmatpush1.bf16.msra.mxu0 0
    %1329 = vmatprep.subr.bf16.mxu0 0
    %1330 = vmatpush1.bf16.msra.mxu0 0
    %1331 = vmatprep.mubr.bf16.mxu0 0
    %1332 = vmatmul.mubr.bf16.gmra.mrb[0].mxu0 %v1294
    %v1333 = vpop.f32.mrb[0].mxu0
    %v1334 = vadd.f32 0.0, %v1333
    %v1335 = vpop.f32.mrb[0].mxu0
    %v1336 = vpop.f32.mrb[0].mxu0
    %v1337 = vadd.f32 0.0, %v1336
    %v1338 = vpop.f32.mrb[0].mxu0
    %1339 = vmatprep.mubr.bf16.mxu0 0
    %1340 = vmatmul.mubr.bf16.gmra.mrb[0].mxu0 %v1297
    %v1341 = vpop.f32.mrb[0].mxu0
    %v1342 = vadd.f32 0.0, %v1341
    %v1343 = vpop.f32.mrb[0].mxu0
    %v1344 = vpop.f32.mrb[0].mxu0
    %v1345 = vadd.f32 0.0, %v1344
    %v1346 = vpop.f32.mrb[0].mxu0
    %1347 = vdwg.mxu0
    %v1348 = vpack.c.bf16 %v1337, %v1334
    %v1349 = vpack.c.bf16 %v1345, %v1342
    %s1350 = scalar_lea.vmem [#allocation10], 24
    %v1351 = vld [vmem:[%s1350] sm:$0xf]
    %v1352 = vld [vmem:[%s1350 + $0x4] sm:$0xf]
    %v1355 = vunpack.c.l.b16 %v1351
    %v1356 = vunpack.c.l.b16 %v1352
    %v1357 = vpack.c.b16 %v1356, %v1355
    %v1360 = vsel %vm449, %v1348, 0
    %v1363 = vsel %vm449, %v1349, 0
    %1365 = vmatprep.subr.bf16.mxu0 0
    %1366 = vmatpush1.bf16.msra.mxu0 %v1357
    %1367 = vmatprep.subr.bf16.mxu0 0
    %1368 = vmatpush1.bf16.msra.mxu0 0
    %1369 = vmatprep.subr.bf16.mxu0 0
    %1370 = vmatpush1.bf16.msra.mxu0 0
    %1371 = vmatprep.subr.bf16.mxu0 0
    %1372 = vmatpush1.bf16.msra.mxu0 0
    %1373 = vmatprep.subr.bf16.mxu0 0
    %1374 = vmatpush1.bf16.msra.mxu0 0
    %1375 = vmatprep.subr.bf16.mxu0 0
    %1376 = vmatpush1.bf16.msra.mxu0 0
    %1377 = vmatprep.subr.bf16.mxu0 0
    %1378 = vmatpush1.bf16.msra.mxu0 0
    %1379 = vmatprep.subr.bf16.mxu0 0
    %1380 = vmatpush1.bf16.msra.mxu0 0
    %1381 = vmatprep.subr.bf16.mxu0 0
    %1382 = vmatpush1.bf16.msra.mxu0 0
    %1383 = vmatprep.subr.bf16.mxu0 0
    %1384 = vmatpush1.bf16.msra.mxu0 0
    %1385 = vmatprep.subr.bf16.mxu0 0
    %1386 = vmatpush1.bf16.msra.mxu0 0
    %1387 = vmatprep.subr.bf16.mxu0 0
    %1388 = vmatpush1.bf16.msra.mxu0 0
    %1389 = vmatprep.subr.bf16.mxu0 0
    %1390 = vmatpush1.bf16.msra.mxu0 0
    %1391 = vmatprep.subr.bf16.mxu0 0
    %1392 = vmatpush1.bf16.msra.mxu0 0
    %1393 = vmatprep.subr.bf16.mxu0 0
    %1394 = vmatpush1.bf16.msra.mxu0 0
    %1395 = vmatprep.subr.bf16.mxu0 0
    %1396 = vmatpush1.bf16.msra.mxu0 0
    %1397 = vmatprep.mubr.bf16.mxu0 0
    %1398 = vmatmul.mubr.bf16.gmra.mrb[0].mxu0 %v1360
    %v1399 = vpop.f32.mrb[0].mxu0
    %v1400 = vadd.f32 0.0, %v1399
    %v1401 = vpop.f32.mrb[0].mxu0
    %v1402 = vpop.f32.mrb[0].mxu0
    %v1403 = vadd.f32 0.0, %v1402
    %v1404 = vpop.f32.mrb[0].mxu0
    %1405 = vmatprep.mubr.bf16.mxu0 0
    %1406 = vmatmul.mubr.bf16.gmra.mrb[0].mxu0 %v1363
    %v1407 = vpop.f32.mrb[0].mxu0
    %v1408 = vadd.f32 0.0, %v1407
    %v1409 = vpop.f32.mrb[0].mxu0
    %v1410 = vpop.f32.mrb[0].mxu0
    %v1411 = vadd.f32 0.0, %v1410
    %v1412 = vpop.f32.mrb[0].mxu0
    %1413 = vdwg.mxu0
    %v1414 = vadd.f32 %v1168, %v1400
    %v1415 = vadd.f32 %v1169, %v1403
    %v1416 = vadd.f32 %v1170, %v1408
    %v1417 = vadd.f32 %v1171, %v1411
    %1418 = vrot.lane.b32.xlu0 %v443, 64
    %v1419 = vpop.permute.xlu0 %1418
    %1420 = vrot.lane.b32.xlu0 %v444, 64
    %v1421 = vpop.permute.xlu0 %1420
    %1422 = vrot.lane.b32.xlu0 %v445, 64
    %v1423 = vpop.permute.xlu0 %1422
    %1424 = vrot.lane.b32.xlu0 %v446, 64
    %v1425 = vpop.permute.xlu0 %1424
    %v1427 = vsel %vm449, %v1419, 0
    %v1430 = vsel %vm449, %v1421, 0
    %v1433 = vsel %vm449, %v1423, 0
    %v1436 = vsel %vm449, %v1425, 0
    %1438 = vmatprep.subr.bf16.mxu0 0
    %1439 = vmatpush1.bf16.xpose.msra.mxu0 %v1433
    %1440 = vmatprep.subr.bf16.mxu0 0
    %1441 = vmatpush1.bf16.xpose.msra.mxu0 %v1436
    %1442 = vmatprep.subr.bf16.mxu0 0
    %1443 = vmatpush1.bf16.xpose.msra.mxu0 0
    %1444 = vmatprep.subr.bf16.mxu0 0
    %1445 = vmatpush1.bf16.xpose.msra.mxu0 0
    %1446 = vmatprep.subr.bf16.mxu0 0
    %1447 = vmatpush1.bf16.xpose.msra.mxu0 0
    %1448 = vmatprep.subr.bf16.mxu0 0
    %1449 = vmatpush1.bf16.xpose.msra.mxu0 0
    %1450 = vmatprep.subr.bf16.mxu0 0
    %1451 = vmatpush1.bf16.xpose.msra.mxu0 0
    %1452 = vmatprep.subr.bf16.mxu0 0
    %1453 = vmatpush1.bf16.xpose.msra.mxu0 0
    %1454 = vmatprep.subr.bf16.mxu0 0
    %1455 = vmatpush1.bf16.xpose.msra.mxu0 0
    %1456 = vmatprep.subr.bf16.mxu0 0
    %1457 = vmatpush1.bf16.xpose.msra.mxu0 0
    %1458 = vmatprep.subr.bf16.mxu0 0
    %1459 = vmatpush1.bf16.xpose.msra.mxu0 0
    %1460 = vmatprep.subr.bf16.mxu0 0
    %1461 = vmatpush1.bf16.xpose.msra.mxu0 0
    %1462 = vmatprep.subr.bf16.mxu0 0
    %1463 = vmatpush1.bf16.xpose.msra.mxu0 0
    %1464 = vmatprep.subr.bf16.mxu0 0
    %1465 = vmatpush1.bf16.xpose.msra.mxu0 0
    %1466 = vmatprep.subr.bf16.mxu0 0
    %1467 = vmatpush1.bf16.xpose.msra.mxu0 0
    %1468 = vmatprep.subr.bf16.mxu0 0
    %1469 = vmatpush1.bf16.xpose.msra.mxu0 0
    %1470 = vmatprep.mubr.bf16.mxu0 0
    %1471 = vmatmul.mubr.bf16.gmra.mrb[0].mxu0 %v1427
    %v1472 = vpop.f32.mrb[0].mxu0
    %v1473 = vadd.f32 0.0, %v1472
    %v1474 = vpop.f32.mrb[0].mxu0
    %v1475 = vpop.f32.mrb[0].mxu0
    %v1476 = vadd.f32 0.0, %v1475
    %v1477 = vpop.f32.mrb[0].mxu0
    %1478 = vmatprep.mubr.bf16.mxu0 0
    %1479 = vmatmul.mubr.bf16.gmra.mrb[0].mxu0 %v1430
    %v1480 = vpop.f32.mrb[0].mxu0
    %v1481 = vadd.f32 0.0, %v1480
    %v1482 = vpop.f32.mrb[0].mxu0
    %v1483 = vpop.f32.mrb[0].mxu0
    %v1484 = vadd.f32 0.0, %v1483
    %v1485 = vpop.f32.mrb[0].mxu0
    %1486 = vdwg.mxu0
    %v1487 = vsel %vm511, %v1473, -inf
    %1488 = vmax.xlane.f32.xlu0 %v1487
    %v1489 = vpop.xlane.xlu0 %1488
    %v1490 = vsel %vm511, %v1476, -inf
    %1491 = vmax.xlane.f32.xlu0 %v1490
    %v1492 = vpop.xlane.xlu0 %1491
    %v1493 = vsel %vm511, %v1481, -inf
    %1494 = vmax.xlane.f32.xlu0 %v1493
    %v1495 = vpop.xlane.xlu0 %1494
    %v1496 = vsel %vm511, %v1484, -inf
    %1497 = vmax.xlane.f32.xlu0 %v1496
    %v1498 = vpop.xlane.xlu0 %1497
    %v1499 = vsub.f32 %v1473, %v1489
    %v1500 = vsub.f32 %v1476, %v1492
    %v1501 = vsub.f32 %v1481, %v1495
    %v1502 = vsub.f32 %v1484, %v1498
    %v1503 = vmul.f32 %v1499, 1.442695
    %v1504 = vpow.pop %v1503
    %v1505 = vmul.f32 %v1500, 1.442695
    %v1506 = vpow.pop %v1505
    %v1507 = vmul.f32 %v1501, 1.442695
    %v1508 = vpow.pop %v1507
    %v1509 = vmul.f32 %v1502, 1.442695
    %v1510 = vpow.pop %v1509
    %v1511 = vsel %vm511, %v1504, 0.0
    %1512 = vadd.xlane.f32.xlu0 %v1511
    %v1513 = vpop.xlane.xlu0 %1512
    %v1514 = vsel %vm511, %v1506, 0.0
    %1515 = vadd.xlane.f32.xlu0 %v1514
    %v1516 = vpop.xlane.xlu0 %1515
    %v1517 = vsel %vm511, %v1508, 0.0
    %1518 = vadd.xlane.f32.xlu0 %v1517
    %v1519 = vpop.xlane.xlu0 %1518
    %v1520 = vsel %vm511, %v1510, 0.0
    %1521 = vadd.xlane.f32.xlu0 %v1520
    %v1522 = vpop.xlane.xlu0 %1521
    %v1523 = vrcp.pop %v1513
    %v1524 = vrcp.pop %v1516
    %v1525 = vrcp.pop %v1519
    %v1526 = vrcp.pop %v1522
    %v1527 = vmul.f32 %v1504, %v1523
    %v1528 = vmul.f32 %v1506, %v1524
    %v1529 = vmul.f32 %v1508, %v1525
    %v1530 = vmul.f32 %v1510, %v1526
    %v1531 = vpack.c.bf16 %v1528, %v1527
    %v1532 = vpack.c.bf16 %v1530, %v1529
    %1533 = vrot.lane.b32.xlu0 %v447, 64
    %v1534 = vpop.permute.xlu0 %1533
    %1535 = vrot.lane.b32.xlu0 %v448, 64
    %v1536 = vpop.permute.xlu0 %1535
    %v1540 = vsel %vm511, %v1531, 0
    %v1543 = vsel %vm511, %v1532, 0
    %1545 = vmatprep.subr.bf16.mxu0 0
    %1546 = vmatpush1.bf16.msra.mxu0 %v1534
    %1547 = vmatprep.subr.bf16.mxu0 0
    %1548 = vmatpush1.bf16.msra.mxu0 %v1536
    %1549 = vmatprep.subr.bf16.mxu0 0
    %1550 = vmatpush1.bf16.msra.mxu0 0
    %1551 = vmatprep.subr.bf16.mxu0 0
    %1552 = vmatpush1.bf16.msra.mxu0 0
    %1553 = vmatprep.subr.bf16.mxu0 0
    %1554 = vmatpush1.bf16.msra.mxu0 0
    %1555 = vmatprep.subr.bf16.mxu0 0
    %1556 = vmatpush1.bf16.msra.mxu0 0
    %1557 = vmatprep.subr.bf16.mxu0 0
    %1558 = vmatpush1.bf16.msra.mxu0 0
    %1559 = vmatprep.subr.bf16.mxu0 0
    %1560 = vmatpush1.bf16.msra.mxu0 0
    %1561 = vmatprep.subr.bf16.mxu0 0
    %1562 = vmatpush1.bf16.msra.mxu0 0
    %1563 = vmatprep.subr.bf16.mxu0 0
    %1564 = vmatpush1.bf16.msra.mxu0 0
    %1565 = vmatprep.subr.bf16.mxu0 0
    %1566 = vmatpush1.bf16.msra.mxu0 0
    %1567 = vmatprep.subr.bf16.mxu0 0
    %1568 = vmatpush1.bf16.msra.mxu0 0
    %1569 = vmatprep.subr.bf16.mxu0 0
    %1570 = vmatpush1.bf16.msra.mxu0 0
    %1571 = vmatprep.subr.bf16.mxu0 0
    %1572 = vmatpush1.bf16.msra.mxu0 0
    %1573 = vmatprep.subr.bf16.mxu0 0
    %1574 = vmatpush1.bf16.msra.mxu0 0
    %1575 = vmatprep.subr.bf16.mxu0 0
    %1576 = vmatpush1.bf16.msra.mxu0 0
    %1577 = vmatprep.mubr.bf16.mxu0 0
    %1578 = vmatmul.mubr.bf16.gmra.mrb[0].mxu0 %v1540
    %v1579 = vpop.f32.mrb[0].mxu0
    %v1580 = vadd.f32 0.0, %v1579
    %v1581 = vpop.f32.mrb[0].mxu0
    %v1582 = vpop.f32.mrb[0].mxu0
    %v1583 = vadd.f32 0.0, %v1582
    %v1584 = vpop.f32.mrb[0].mxu0
    %1585 = vmatprep.mubr.bf16.mxu0 0
    %1586 = vmatmul.mubr.bf16.gmra.mrb[0].mxu0 %v1543
    %v1587 = vpop.f32.mrb[0].mxu0
    %v1588 = vadd.f32 0.0, %v1587
    %v1589 = vpop.f32.mrb[0].mxu0
    %v1590 = vpop.f32.mrb[0].mxu0
    %v1591 = vadd.f32 0.0, %v1590
    %v1592 = vpop.f32.mrb[0].mxu0
    %1593 = vdwg.mxu0
    %v1594 = vpack.c.bf16 %v1583, %v1580
    %v1595 = vpack.c.bf16 %v1591, %v1588
    %s1596 = scalar_lea.vmem [#allocation10], 32
    %v1597 = vld [vmem:[%s1596] sm:$0xf]
    %v1598 = vld [vmem:[%s1596 + $0x4] sm:$0xf]
    %v1601 = vunpack.c.l.b16 %v1597
    %v1602 = vunpack.c.l.b16 %v1598
    %v1603 = vpack.c.b16 %v1602, %v1601
    %v1606 = vsel %vm449, %v1594, 0
    %v1609 = vsel %vm449, %v1595, 0
    %1611 = vmatprep.subr.bf16.mxu0 0
    %1612 = vmatpush1.bf16.msra.mxu0 %v1603
    %1613 = vmatprep.subr.bf16.mxu0 0
    %1614 = vmatpush1.bf16.msra.mxu0 0
    %1615 = vmatprep.subr.bf16.mxu0 0
    %1616 = vmatpush1.bf16.msra.mxu0 0
    %1617 = vmatprep.subr.bf16.mxu0 0
    %1618 = vmatpush1.bf16.msra.mxu0 0
    %1619 = vmatprep.subr.bf16.mxu0 0
    %1620 = vmatpush1.bf16.msra.mxu0 0
    %1621 = vmatprep.subr.bf16.mxu0 0
    %1622 = vmatpush1.bf16.msra.mxu0 0
    %1623 = vmatprep.subr.bf16.mxu0 0
    %1624 = vmatpush1.bf16.msra.mxu0 0
    %1625 = vmatprep.subr.bf16.mxu0 0
    %1626 = vmatpush1.bf16.msra.mxu0 0
    %1627 = vmatprep.subr.bf16.mxu0 0
    %1628 = vmatpush1.bf16.msra.mxu0 0
    %1629 = vmatprep.subr.bf16.mxu0 0
    %1630 = vmatpush1.bf16.msra.mxu0 0
    %1631 = vmatprep.subr.bf16.mxu0 0
    %1632 = vmatpush1.bf16.msra.mxu0 0
    %1633 = vmatprep.subr.bf16.mxu0 0
    %1634 = vmatpush1.bf16.msra.mxu0 0
    %1635 = vmatprep.subr.bf16.mxu0 0
    %1636 = vmatpush1.bf16.msra.mxu0 0
    %1637 = vmatprep.subr.bf16.mxu0 0
    %1638 = vmatpush1.bf16.msra.mxu0 0
    %1639 = vmatprep.subr.bf16.mxu0 0
    %1640 = vmatpush1.bf16.msra.mxu0 0
    %1641 = vmatprep.subr.bf16.mxu0 0
    %1642 = vmatpush1.bf16.msra.mxu0 0
    %1643 = vmatprep.mubr.bf16.mxu0 0
    %1644 = vmatmul.mubr.bf16.gmra.mrb[0].mxu0 %v1606
    %v1645 = vpop.f32.mrb[0].mxu0
    %v1646 = vadd.f32 0.0, %v1645
    %v1647 = vpop.f32.mrb[0].mxu0
    %v1648 = vpop.f32.mrb[0].mxu0
    %v1649 = vadd.f32 0.0, %v1648
    %v1650 = vpop.f32.mrb[0].mxu0
    %1651 = vmatprep.mubr.bf16.mxu0 0
    %1652 = vmatmul.mubr.bf16.gmra.mrb[0].mxu0 %v1609
    %v1653 = vpop.f32.mrb[0].mxu0
    %v1654 = vadd.f32 0.0, %v1653
    %v1655 = vpop.f32.mrb[0].mxu0
    %v1656 = vpop.f32.mrb[0].mxu0
    %v1657 = vadd.f32 0.0, %v1656
    %v1658 = vpop.f32.mrb[0].mxu0
    %1659 = vdwg.mxu0
    %v1660 = vadd.f32 %v1414, %v1646
    %v1661 = vadd.f32 %v1415, %v1649
    %v1662 = vadd.f32 %v1416, %v1654
    %v1663 = vadd.f32 %v1417, %v1657
    %1664 = vrot.lane.b32.xlu0 %v443, 48
    %v1665 = vpop.permute.xlu0 %1664
    %1666 = vrot.lane.b32.xlu0 %v444, 48
    %v1667 = vpop.permute.xlu0 %1666
    %1668 = vrot.lane.b32.xlu0 %v445, 48
    %v1669 = vpop.permute.xlu0 %1668
    %1670 = vrot.lane.b32.xlu0 %v446, 48
    %v1671 = vpop.permute.xlu0 %1670
    %v1673 = vsel %vm449, %v1665, 0
    %v1676 = vsel %vm449, %v1667, 0
    %v1679 = vsel %vm449, %v1669, 0
    %v1682 = vsel %vm449, %v1671, 0
    %1684 = vmatprep.subr.bf16.mxu0 0
    %1685 = vmatpush1.bf16.xpose.msra.mxu0 %v1679
    %1686 = vmatprep.subr.bf16.mxu0 0
    %1687 = vmatpush1.bf16.xpose.msra.mxu0 %v1682
    %1688 = vmatprep.subr.bf16.mxu0 0
    %1689 = vmatpush1.bf16.xpose.msra.mxu0 0
    %1690 = vmatprep.subr.bf16.mxu0 0
    %1691 = vmatpush1.bf16.xpose.msra.mxu0 0
    %1692 = vmatprep.subr.bf16.mxu0 0
    %1693 = vmatpush1.bf16.xpose.msra.mxu0 0
    %1694 = vmatprep.subr.bf16.mxu0 0
    %1695 = vmatpush1.bf16.xpose.msra.mxu0 0
    %1696 = vmatprep.subr.bf16.mxu0 0
    %1697 = vmatpush1.bf16.xpose.msra.mxu0 0
    %1698 = vmatprep.subr.bf16.mxu0 0
    %1699 = vmatpush1.bf16.xpose.msra.mxu0 0
    %1700 = vmatprep.subr.bf16.mxu0 0
    %1701 = vmatpush1.bf16.xpose.msra.mxu0 0
    %1702 = vmatprep.subr.bf16.mxu0 0
    %1703 = vmatpush1.bf16.xpose.msra.mxu0 0
    %1704 = vmatprep.subr.bf16.mxu0 0
    %1705 = vmatpush1.bf16.xpose.msra.mxu0 0
    %1706 = vmatprep.subr.bf16.mxu0 0
    %1707 = vmatpush1.bf16.xpose.msra.mxu0 0
    %1708 = vmatprep.subr.bf16.mxu0 0
    %1709 = vmatpush1.bf16.xpose.msra.mxu0 0
    %1710 = vmatprep.subr.bf16.mxu0 0
    %1711 = vmatpush1.bf16.xpose.msra.mxu0 0
    %1712 = vmatprep.subr.bf16.mxu0 0
    %1713 = vmatpush1.bf16.xpose.msra.mxu0 0
    %1714 = vmatprep.subr.bf16.mxu0 0
    %1715 = vmatpush1.bf16.xpose.msra.mxu0 0
    %1716 = vmatprep.mubr.bf16.mxu0 0
    %1717 = vmatmul.mubr.bf16.gmra.mrb[0].mxu0 %v1673
    %v1718 = vpop.f32.mrb[0].mxu0
    %v1719 = vadd.f32 0.0, %v1718
    %v1720 = vpop.f32.mrb[0].mxu0
    %v1721 = vpop.f32.mrb[0].mxu0
    %v1722 = vadd.f32 0.0, %v1721
    %v1723 = vpop.f32.mrb[0].mxu0
    %1724 = vmatprep.mubr.bf16.mxu0 0
    %1725 = vmatmul.mubr.bf16.gmra.mrb[0].mxu0 %v1676
    %v1726 = vpop.f32.mrb[0].mxu0
    %v1727 = vadd.f32 0.0, %v1726
    %v1728 = vpop.f32.mrb[0].mxu0
    %v1729 = vpop.f32.mrb[0].mxu0
    %v1730 = vadd.f32 0.0, %v1729
    %v1731 = vpop.f32.mrb[0].mxu0
    %1732 = vdwg.mxu0
    %v1733 = vsel %vm511, %v1719, -inf
    %1734 = vmax.xlane.f32.xlu0 %v1733
    %v1735 = vpop.xlane.xlu0 %1734
    %v1736 = vsel %vm511, %v1722, -inf
    %1737 = vmax.xlane.f32.xlu0 %v1736
    %v1738 = vpop.xlane.xlu0 %1737
    %v1739 = vsel %vm511, %v1727, -inf
    %1740 = vmax.xlane.f32.xlu0 %v1739
    %v1741 = vpop.xlane.xlu0 %1740
    %v1742 = vsel %vm511, %v1730, -inf
    %1743 = vmax.xlane.f32.xlu0 %v1742
    %v1744 = vpop.xlane.xlu0 %1743
    %v1745 = vsub.f32 %v1719, %v1735
    %v1746 = vsub.f32 %v1722, %v1738
    %v1747 = vsub.f32 %v1727, %v1741
    %v1748 = vsub.f32 %v1730, %v1744
    %v1749 = vmul.f32 %v1745, 1.442695
    %v1750 = vpow.pop %v1749
    %v1751 = vmul.f32 %v1746, 1.442695
    %v1752 = vpow.pop %v1751
    %v1753 = vmul.f32 %v1747, 1.442695
    %v1754 = vpow.pop %v1753
    %v1755 = vmul.f32 %v1748, 1.442695
    %v1756 = vpow.pop %v1755
    %v1757 = vsel %vm511, %v1750, 0.0
    %1758 = vadd.xlane.f32.xlu0 %v1757
    %v1759 = vpop.xlane.xlu0 %1758
    %v1760 = vsel %vm511, %v1752, 0.0
    %1761 = vadd.xlane.f32.xlu0 %v1760
    %v1762 = vpop.xlane.xlu0 %1761
    %v1763 = vsel %vm511, %v1754, 0.0
    %1764 = vadd.xlane.f32.xlu0 %v1763
    %v1765 = vpop.xlane.xlu0 %1764
    %v1766 = vsel %vm511, %v1756, 0.0
    %1767 = vadd.xlane.f32.xlu0 %v1766
    %v1768 = vpop.xlane.xlu0 %1767
    %v1769 = vrcp.pop %v1759
    %v1770 = vrcp.pop %v1762
    %v1771 = vrcp.pop %v1765
    %v1772 = vrcp.pop %v1768
    %v1773 = vmul.f32 %v1750, %v1769
    %v1774 = vmul.f32 %v1752, %v1770
    %v1775 = vmul.f32 %v1754, %v1771
    %v1776 = vmul.f32 %v1756, %v1772
    %v1777 = vpack.c.bf16 %v1774, %v1773
    %v1778 = vpack.c.bf16 %v1776, %v1775
    %1779 = vrot.lane.b32.xlu0 %v447, 48
    %v1780 = vpop.permute.xlu0 %1779
    %1781 = vrot.lane.b32.xlu0 %v448, 48
    %v1782 = vpop.permute.xlu0 %1781
    %v1786 = vsel %vm511, %v1777, 0
    %v1789 = vsel %vm511, %v1778, 0
    %1791 = vmatprep.subr.bf16.mxu0 0
    %1792 = vmatpush1.bf16.msra.mxu0 %v1780
    %1793 = vmatprep.subr.bf16.mxu0 0
    %1794 = vmatpush1.bf16.msra.mxu0 %v1782
    %1795 = vmatprep.subr.bf16.mxu0 0
    %1796 = vmatpush1.bf16.msra.mxu0 0
    %1797 = vmatprep.subr.bf16.mxu0 0
    %1798 = vmatpush1.bf16.msra.mxu0 0
    %1799 = vmatprep.subr.bf16.mxu0 0
    %1800 = vmatpush1.bf16.msra.mxu0 0
    %1801 = vmatprep.subr.bf16.mxu0 0
    %1802 = vmatpush1.bf16.msra.mxu0 0
    %1803 = vmatprep.subr.bf16.mxu0 0
    %1804 = vmatpush1.bf16.msra.mxu0 0
    %1805 = vmatprep.subr.bf16.mxu0 0
    %1806 = vmatpush1.bf16.msra.mxu0 0
    %1807 = vmatprep.subr.bf16.mxu0 0
    %1808 = vmatpush1.bf16.msra.mxu0 0
    %1809 = vmatprep.subr.bf16.mxu0 0
    %1810 = vmatpush1.bf16.msra.mxu0 0
    %1811 = vmatprep.subr.bf16.mxu0 0
    %1812 = vmatpush1.bf16.msra.mxu0 0
    %1813 = vmatprep.subr.bf16.mxu0 0
    %1814 = vmatpush1.bf16.msra.mxu0 0
    %1815 = vmatprep.subr.bf16.mxu0 0
    %1816 = vmatpush1.bf16.msra.mxu0 0
    %1817 = vmatprep.subr.bf16.mxu0 0
    %1818 = vmatpush1.bf16.msra.mxu0 0
    %1819 = vmatprep.subr.bf16.mxu0 0
    %1820 = vmatpush1.bf16.msra.mxu0 0
    %1821 = vmatprep.subr.bf16.mxu0 0
    %1822 = vmatpush1.bf16.msra.mxu0 0
    %1823 = vmatprep.mubr.bf16.mxu0 0
    %1824 = vmatmul.mubr.bf16.gmra.mrb[0].mxu0 %v1786
    %v1825 = vpop.f32.mrb[0].mxu0
    %v1826 = vadd.f32 0.0, %v1825
    %v1827 = vpop.f32.mrb[0].mxu0
    %v1828 = vpop.f32.mrb[0].mxu0
    %v1829 = vadd.f32 0.0, %v1828
    %v1830 = vpop.f32.mrb[0].mxu0
    %1831 = vmatprep.mubr.bf16.mxu0 0
    %1832 = vmatmul.mubr.bf16.gmra.mrb[0].mxu0 %v1789
    %v1833 = vpop.f32.mrb[0].mxu0
    %v1834 = vadd.f32 0.0, %v1833
    %v1835 = vpop.f32.mrb[0].mxu0
    %v1836 = vpop.f32.mrb[0].mxu0
    %v1837 = vadd.f32 0.0, %v1836
    %v1838 = vpop.f32.mrb[0].mxu0
    %1839 = vdwg.mxu0
    %v1840 = vpack.c.bf16 %v1829, %v1826
    %v1841 = vpack.c.bf16 %v1837, %v1834
    %s1842 = scalar_lea.vmem [#allocation10], 40
    %v1843 = vld [vmem:[%s1842] sm:$0xf]
    %v1844 = vld [vmem:[%s1842 + $0x4] sm:$0xf]
    %v1847 = vunpack.c.l.b16 %v1843
    %v1848 = vunpack.c.l.b16 %v1844
    %v1849 = vpack.c.b16 %v1848, %v1847
    %v1852 = vsel %vm449, %v1840, 0
    %v1855 = vsel %vm449, %v1841, 0
    %1857 = vmatprep.subr.bf16.mxu0 0
    %1858 = vmatpush1.bf16.msra.mxu0 %v1849
    %1859 = vmatprep.subr.bf16.mxu0 0
    %1860 = vmatpush1.bf16.msra.mxu0 0
    %1861 = vmatprep.subr.bf16.mxu0 0
    %1862 = vmatpush1.bf16.msra.mxu0 0
    %1863 = vmatprep.subr.bf16.mxu0 0
    %1864 = vmatpush1.bf16.msra.mxu0 0
    %1865 = vmatprep.subr.bf16.mxu0 0
    %1866 = vmatpush1.bf16.msra.mxu0 0
    %1867 = vmatprep.subr.bf16.mxu0 0
    %1868 = vmatpush1.bf16.msra.mxu0 0
    %1869 = vmatprep.subr.bf16.mxu0 0
    %1870 = vmatpush1.bf16.msra.mxu0 0
    %1871 = vmatprep.subr.bf16.mxu0 0
    %1872 = vmatpush1.bf16.msra.mxu0 0
    %1873 = vmatprep.subr.bf16.mxu0 0
    %1874 = vmatpush1.bf16.msra.mxu0 0
    %1875 = vmatprep.subr.bf16.mxu0 0
    %1876 = vmatpush1.bf16.msra.mxu0 0
    %1877 = vmatprep.subr.bf16.mxu0 0
    %1878 = vmatpush1.bf16.msra.mxu0 0
    %1879 = vmatprep.subr.bf16.mxu0 0
    %1880 = vmatpush1.bf16.msra.mxu0 0
    %1881 = vmatprep.subr.bf16.mxu0 0
    %1882 = vmatpush1.bf16.msra.mxu0 0
    %1883 = vmatprep.subr.bf16.mxu0 0
    %1884 = vmatpush1.bf16.msra.mxu0 0
    %1885 = vmatprep.subr.bf16.mxu0 0
    %1886 = vmatpush1.bf16.msra.mxu0 0
    %1887 = vmatprep.subr.bf16.mxu0 0
    %1888 = vmatpush1.bf16.msra.mxu0 0
    %1889 = vmatprep.mubr.bf16.mxu0 0
    %1890 = vmatmul.mubr.bf16.gmra.mrb[0].mxu0 %v1852
    %v1891 = vpop.f32.mrb[0].mxu0
    %v1892 = vadd.f32 0.0, %v1891
    %v1893 = vpop.f32.mrb[0].mxu0
    %v1894 = vpop.f32.mrb[0].mxu0
    %v1895 = vadd.f32 0.0, %v1894
    %v1896 = vpop.f32.mrb[0].mxu0
    %1897 = vmatprep.mubr.bf16.mxu0 0
    %1898 = vmatmul.mubr.bf16.gmra.mrb[0].mxu0 %v1855
    %v1899 = vpop.f32.mrb[0].mxu0
    %v1900 = vadd.f32 0.0, %v1899
    %v1901 = vpop.f32.mrb[0].mxu0
    %v1902 = vpop.f32.mrb[0].mxu0
    %v1903 = vadd.f32 0.0, %v1902
    %v1904 = vpop.f32.mrb[0].mxu0
    %1905 = vdwg.mxu0
    %v1906 = vadd.f32 %v1660, %v1892
    %v1907 = vadd.f32 %v1661, %v1895
    %v1908 = vadd.f32 %v1662, %v1900
    %v1909 = vadd.f32 %v1663, %v1903
    %1910 = vrot.lane.b32.xlu0 %v443, 32
    %v1911 = vpop.permute.xlu0 %1910
    %1912 = vrot.lane.b32.xlu0 %v444, 32
    %v1913 = vpop.permute.xlu0 %1912
    %1914 = vrot.lane.b32.xlu0 %v445, 32
    %v1915 = vpop.permute.xlu0 %1914
    %1916 = vrot.lane.b32.xlu0 %v446, 32
    %v1917 = vpop.permute.xlu0 %1916
    %v1919 = vsel %vm449, %v1911, 0
    %v1922 = vsel %vm449, %v1913, 0
    %v1925 = vsel %vm449, %v1915, 0
    %v1928 = vsel %vm449, %v1917, 0
    %1930 = vmatprep.subr.bf16.mxu0 0
    %1931 = vmatpush1.bf16.xpose.msra.mxu0 %v1925
    %1932 = vmatprep.subr.bf16.mxu0 0
    %1933 = vmatpush1.bf16.xpose.msra.mxu0 %v1928
    %1934 = vmatprep.subr.bf16.mxu0 0
    %1935 = vmatpush1.bf16.xpose.msra.mxu0 0
    %1936 = vmatprep.subr.bf16.mxu0 0
    %1937 = vmatpush1.bf16.xpose.msra.mxu0 0
    %1938 = vmatprep.subr.bf16.mxu0 0
    %1939 = vmatpush1.bf16.xpose.msra.mxu0 0
    %1940 = vmatprep.subr.bf16.mxu0 0
    %1941 = vmatpush1.bf16.xpose.msra.mxu0 0
    %1942 = vmatprep.subr.bf16.mxu0 0
    %1943 = vmatpush1.bf16.xpose.msra.mxu0 0
    %1944 = vmatprep.subr.bf16.mxu0 0
    %1945 = vmatpush1.bf16.xpose.msra.mxu0 0
    %1946 = vmatprep.subr.bf16.mxu0 0
    %1947 = vmatpush1.bf16.xpose.msra.mxu0 0
    %1948 = vmatprep.subr.bf16.mxu0 0
    %1949 = vmatpush1.bf16.xpose.msra.mxu0 0
    %1950 = vmatprep.subr.bf16.mxu0 0
    %1951 = vmatpush1.bf16.xpose.msra.mxu0 0
    %1952 = vmatprep.subr.bf16.mxu0 0
    %1953 = vmatpush1.bf16.xpose.msra.mxu0 0
    %1954 = vmatprep.subr.bf16.mxu0 0
    %1955 = vmatpush1.bf16.xpose.msra.mxu0 0
    %1956 = vmatprep.subr.bf16.mxu0 0
    %1957 = vmatpush1.bf16.xpose.msra.mxu0 0
    %1958 = vmatprep.subr.bf16.mxu0 0
    %1959 = vmatpush1.bf16.xpose.msra.mxu0 0
    %1960 = vmatprep.subr.bf16.mxu0 0
    %1961 = vmatpush1.bf16.xpose.msra.mxu0 0
    %1962 = vmatprep.mubr.bf16.mxu0 0
    %1963 = vmatmul.mubr.bf16.gmra.mrb[0].mxu0 %v1919
    %v1964 = vpop.f32.mrb[0].mxu0
    %v1965 = vadd.f32 0.0, %v1964
    %v1966 = vpop.f32.mrb[0].mxu0
    %v1967 = vpop.f32.mrb[0].mxu0
    %v1968 = vadd.f32 0.0, %v1967
    %v1969 = vpop.f32.mrb[0].mxu0
    %1970 = vmatprep.mubr.bf16.mxu0 0
    %1971 = vmatmul.mubr.bf16.gmra.mrb[0].mxu0 %v1922
    %v1972 = vpop.f32.mrb[0].mxu0
    %v1973 = vadd.f32 0.0, %v1972
    %v1974 = vpop.f32.mrb[0].mxu0
    %v1975 = vpop.f32.mrb[0].mxu0
    %v1976 = vadd.f32 0.0, %v1975
    %v1977 = vpop.f32.mrb[0].mxu0
    %1978 = vdwg.mxu0
    %v1979 = vsel %vm511, %v1965, -inf
    %1980 = vmax.xlane.f32.xlu0 %v1979
    %v1981 = vpop.xlane.xlu0 %1980
    %v1982 = vsel %vm511, %v1968, -inf
    %1983 = vmax.xlane.f32.xlu0 %v1982
    %v1984 = vpop.xlane.xlu0 %1983
    %v1985 = vsel %vm511, %v1973, -inf
    %1986 = vmax.xlane.f32.xlu0 %v1985
    %v1987 = vpop.xlane.xlu0 %1986
    %v1988 = vsel %vm511, %v1976, -inf
    %1989 = vmax.xlane.f32.xlu0 %v1988
    %v1990 = vpop.xlane.xlu0 %1989
    %v1991 = vsub.f32 %v1965, %v1981
    %v1992 = vsub.f32 %v1968, %v1984
    %v1993 = vsub.f32 %v1973, %v1987
    %v1994 = vsub.f32 %v1976, %v1990
    %v1995 = vmul.f32 %v1991, 1.442695
    %v1996 = vpow.pop %v1995
    %v1997 = vmul.f32 %v1992, 1.442695
    %v1998 = vpow.pop %v1997
    %v1999 = vmul.f32 %v1993, 1.442695
    %v2000 = vpow.pop %v1999
    %v2001 = vmul.f32 %v1994, 1.442695
    %v2002 = vpow.pop %v2001
    %v2003 = vsel %vm511, %v1996, 0.0
    %2004 = vadd.xlane.f32.xlu0 %v2003
    %v2005 = vpop.xlane.xlu0 %2004
    %v2006 = vsel %vm511, %v1998, 0.0
    %2007 = vadd.xlane.f32.xlu0 %v2006
    %v2008 = vpop.xlane.xlu0 %2007
    %v2009 = vsel %vm511, %v2000, 0.0
    %2010 = vadd.xlane.f32.xlu0 %v2009
    %v2011 = vpop.xlane.xlu0 %2010
    %v2012 = vsel %vm511, %v2002, 0.0
    %2013 = vadd.xlane.f32.xlu0 %v2012
    %v2014 = vpop.xlane.xlu0 %2013
    %v2015 = vrcp.pop %v2005
    %v2016 = vrcp.pop %v2008
    %v2017 = vrcp.pop %v2011
    %v2018 = vrcp.pop %v2014
    %v2019 = vmul.f32 %v1996, %v2015
    %v2020 = vmul.f32 %v1998, %v2016
    %v2021 = vmul.f32 %v2000, %v2017
    %v2022 = vmul.f32 %v2002, %v2018
    %v2023 = vpack.c.bf16 %v2020, %v2019
    %v2024 = vpack.c.bf16 %v2022, %v2021
    %2025 = vrot.lane.b32.xlu0 %v447, 32
    %v2026 = vpop.permute.xlu0 %2025
    %2027 = vrot.lane.b32.xlu0 %v448, 32
    %v2028 = vpop.permute.xlu0 %2027
    %v2032 = vsel %vm511, %v2023, 0
    %v2035 = vsel %vm511, %v2024, 0
    %2037 = vmatprep.subr.bf16.mxu0 0
    %2038 = vmatpush1.bf16.msra.mxu0 %v2026
    %2039 = vmatprep.subr.bf16.mxu0 0
    %2040 = vmatpush1.bf16.msra.mxu0 %v2028
    %2041 = vmatprep.subr.bf16.mxu0 0
    %2042 = vmatpush1.bf16.msra.mxu0 0
    %2043 = vmatprep.subr.bf16.mxu0 0
    %2044 = vmatpush1.bf16.msra.mxu0 0
    %2045 = vmatprep.subr.bf16.mxu0 0
    %2046 = vmatpush1.bf16.msra.mxu0 0
    %2047 = vmatprep.subr.bf16.mxu0 0
    %2048 = vmatpush1.bf16.msra.mxu0 0
    %2049 = vmatprep.subr.bf16.mxu0 0
    %2050 = vmatpush1.bf16.msra.mxu0 0
    %2051 = vmatprep.subr.bf16.mxu0 0
    %2052 = vmatpush1.bf16.msra.mxu0 0
    %2053 = vmatprep.subr.bf16.mxu0 0
    %2054 = vmatpush1.bf16.msra.mxu0 0
    %2055 = vmatprep.subr.bf16.mxu0 0
    %2056 = vmatpush1.bf16.msra.mxu0 0
    %2057 = vmatprep.subr.bf16.mxu0 0
    %2058 = vmatpush1.bf16.msra.mxu0 0
    %2059 = vmatprep.subr.bf16.mxu0 0
    %2060 = vmatpush1.bf16.msra.mxu0 0
    %2061 = vmatprep.subr.bf16.mxu0 0
    %2062 = vmatpush1.bf16.msra.mxu0 0
    %2063 = vmatprep.subr.bf16.mxu0 0
    %2064 = vmatpush1.bf16.msra.mxu0 0
    %2065 = vmatprep.subr.bf16.mxu0 0
    %2066 = vmatpush1.bf16.msra.mxu0 0
    %2067 = vmatprep.subr.bf16.mxu0 0
    %2068 = vmatpush1.bf16.msra.mxu0 0
    %2069 = vmatprep.mubr.bf16.mxu0 0
    %2070 = vmatmul.mubr.bf16.gmra.mrb[0].mxu0 %v2032
    %v2071 = vpop.f32.mrb[0].mxu0
    %v2072 = vadd.f32 0.0, %v2071
    %v2073 = vpop.f32.mrb[0].mxu0
    %v2074 = vpop.f32.mrb[0].mxu0
    %v2075 = vadd.f32 0.0, %v2074
    %v2076 = vpop.f32.mrb[0].mxu0
    %2077 = vmatprep.mubr.bf16.mxu0 0
    %2078 = vmatmul.mubr.bf16.gmra.mrb[0].mxu0 %v2035
    %v2079 = vpop.f32.mrb[0].mxu0
    %v2080 = vadd.f32 0.0, %v2079
    %v2081 = vpop.f32.mrb[0].mxu0
    %v2082 = vpop.f32.mrb[0].mxu0
    %v2083 = vadd.f32 0.0, %v2082
    %v2084 = vpop.f32.mrb[0].mxu0
    %2085 = vdwg.mxu0
    %v2086 = vpack.c.bf16 %v2075, %v2072
    %v2087 = vpack.c.bf16 %v2083, %v2080
    %s2088 = scalar_lea.vmem [#allocation10], 48
    %v2089 = vld [vmem:[%s2088] sm:$0xf]
    %v2090 = vld [vmem:[%s2088 + $0x4] sm:$0xf]
    %v2093 = vunpack.c.l.b16 %v2089
    %v2094 = vunpack.c.l.b16 %v2090
    %v2095 = vpack.c.b16 %v2094, %v2093
    %v2098 = vsel %vm449, %v2086, 0
    %v2101 = vsel %vm449, %v2087, 0
    %2103 = vmatprep.subr.bf16.mxu0 0
    %2104 = vmatpush1.bf16.msra.mxu0 %v2095
    %2105 = vmatprep.subr.bf16.mxu0 0
    %2106 = vmatpush1.bf16.msra.mxu0 0
    %2107 = vmatprep.subr.bf16.mxu0 0
    %2108 = vmatpush1.bf16.msra.mxu0 0
    %2109 = vmatprep.subr.bf16.mxu0 0
    %2110 = vmatpush1.bf16.msra.mxu0 0
    %2111 = vmatprep.subr.bf16.mxu0 0
    %2112 = vmatpush1.bf16.msra.mxu0 0
    %2113 = vmatprep.subr.bf16.mxu0 0
    %2114 = vmatpush1.bf16.msra.mxu0 0
    %2115 = vmatprep.subr.bf16.mxu0 0
    %2116 = vmatpush1.bf16.msra.mxu0 0
    %2117 = vmatprep.subr.bf16.mxu0 0
    %2118 = vmatpush1.bf16.msra.mxu0 0
    %2119 = vmatprep.subr.bf16.mxu0 0
    %2120 = vmatpush1.bf16.msra.mxu0 0
    %2121 = vmatprep.subr.bf16.mxu0 0
    %2122 = vmatpush1.bf16.msra.mxu0 0
    %2123 = vmatprep.subr.bf16.mxu0 0
    %2124 = vmatpush1.bf16.msra.mxu0 0
    %2125 = vmatprep.subr.bf16.mxu0 0
    %2126 = vmatpush1.bf16.msra.mxu0 0
    %2127 = vmatprep.subr.bf16.mxu0 0
    %2128 = vmatpush1.bf16.msra.mxu0 0
    %2129 = vmatprep.subr.bf16.mxu0 0
    %2130 = vmatpush1.bf16.msra.mxu0 0
    %2131 = vmatprep.subr.bf16.mxu0 0
    %2132 = vmatpush1.bf16.msra.mxu0 0
    %2133 = vmatprep.subr.bf16.mxu0 0
    %2134 = vmatpush1.bf16.msra.mxu0 0
    %2135 = vmatprep.mubr.bf16.mxu0 0
    %2136 = vmatmul.mubr.bf16.gmra.mrb[0].mxu0 %v2098
    %v2137 = vpop.f32.mrb[0].mxu0
    %v2138 = vadd.f32 0.0, %v2137
    %v2139 = vpop.f32.mrb[0].mxu0
    %v2140 = vpop.f32.mrb[0].mxu0
    %v2141 = vadd.f32 0.0, %v2140
    %v2142 = vpop.f32.mrb[0].mxu0
    %2143 = vmatprep.mubr.bf16.mxu0 0
    %2144 = vmatmul.mubr.bf16.gmra.mrb[0].mxu0 %v2101
    %v2145 = vpop.f32.mrb[0].mxu0
    %v2146 = vadd.f32 0.0, %v2145
    %v2147 = vpop.f32.mrb[0].mxu0
    %v2148 = vpop.f32.mrb[0].mxu0
    %v2149 = vadd.f32 0.0, %v2148
    %v2150 = vpop.f32.mrb[0].mxu0
    %2151 = vdwg.mxu0
    %v2152 = vadd.f32 %v1906, %v2138
    %v2153 = vadd.f32 %v1907, %v2141
    %v2154 = vadd.f32 %v1908, %v2146
    %v2155 = vadd.f32 %v1909, %v2149
    %2156 = vrot.lane.b32.xlu0 %v443, 16
    %v2157 = vpop.permute.xlu0 %2156
    %2158 = vrot.lane.b32.xlu0 %v444, 16
    %v2159 = vpop.permute.xlu0 %2158
    %2160 = vrot.lane.b32.xlu0 %v445, 16
    %v2161 = vpop.permute.xlu0 %2160
    %2162 = vrot.lane.b32.xlu0 %v446, 16
    %v2163 = vpop.permute.xlu0 %2162
    %v2165 = vsel %vm449, %v2157, 0
    %v2168 = vsel %vm449, %v2159, 0
    %v2171 = vsel %vm449, %v2161, 0
    %v2174 = vsel %vm449, %v2163, 0
    %2176 = vmatprep.subr.bf16.mxu0 0
    %2177 = vmatpush1.bf16.xpose.msra.mxu0 %v2171
    %2178 = vmatprep.subr.bf16.mxu0 0
    %2179 = vmatpush1.bf16.xpose.msra.mxu0 %v2174
    %2180 = vmatprep.subr.bf16.mxu0 0
    %2181 = vmatpush1.bf16.xpose.msra.mxu0 0
    %2182 = vmatprep.subr.bf16.mxu0 0
    %2183 = vmatpush1.bf16.xpose.msra.mxu0 0
    %2184 = vmatprep.subr.bf16.mxu0 0
    %2185 = vmatpush1.bf16.xpose.msra.mxu0 0
    %2186 = vmatprep.subr.bf16.mxu0 0
    %2187 = vmatpush1.bf16.xpose.msra.mxu0 0
    %2188 = vmatprep.subr.bf16.mxu0 0
    %2189 = vmatpush1.bf16.xpose.msra.mxu0 0
    %2190 = vmatprep.subr.bf16.mxu0 0
    %2191 = vmatpush1.bf16.xpose.msra.mxu0 0
    %2192 = vmatprep.subr.bf16.mxu0 0
    %2193 = vmatpush1.bf16.xpose.msra.mxu0 0
    %2194 = vmatprep.subr.bf16.mxu0 0
    %2195 = vmatpush1.bf16.xpose.msra.mxu0 0
    %2196 = vmatprep.subr.bf16.mxu0 0
    %2197 = vmatpush1.bf16.xpose.msra.mxu0 0
    %2198 = vmatprep.subr.bf16.mxu0 0
    %2199 = vmatpush1.bf16.xpose.msra.mxu0 0
    %2200 = vmatprep.subr.bf16.mxu0 0
    %2201 = vmatpush1.bf16.xpose.msra.mxu0 0
    %2202 = vmatprep.subr.bf16.mxu0 0
    %2203 = vmatpush1.bf16.xpose.msra.mxu0 0
    %2204 = vmatprep.subr.bf16.mxu0 0
    %2205 = vmatpush1.bf16.xpose.msra.mxu0 0
    %2206 = vmatprep.subr.bf16.mxu0 0
    %2207 = vmatpush1.bf16.xpose.msra.mxu0 0
    %2208 = vmatprep.mubr.bf16.mxu0 0
    %2209 = vmatmul.mubr.bf16.gmra.mrb[0].mxu0 %v2165
    %v2210 = vpop.f32.mrb[0].mxu0
    %v2211 = vadd.f32 0.0, %v2210
    %v2212 = vpop.f32.mrb[0].mxu0
    %v2213 = vpop.f32.mrb[0].mxu0
    %v2214 = vadd.f32 0.0, %v2213
    %v2215 = vpop.f32.mrb[0].mxu0
    %2216 = vmatprep.mubr.bf16.mxu0 0
    %2217 = vmatmul.mubr.bf16.gmra.mrb[0].mxu0 %v2168
    %v2218 = vpop.f32.mrb[0].mxu0
    %v2219 = vadd.f32 0.0, %v2218
    %v2220 = vpop.f32.mrb[0].mxu0
    %v2221 = vpop.f32.mrb[0].mxu0
    %v2222 = vadd.f32 0.0, %v2221
    %v2223 = vpop.f32.mrb[0].mxu0
    %2224 = vdwg.mxu0
    %v2225 = vsel %vm511, %v2211, -inf
    %2226 = vmax.xlane.f32.xlu0 %v2225
    %v2227 = vpop.xlane.xlu0 %2226
    %v2228 = vsel %vm511, %v2214, -inf
    %2229 = vmax.xlane.f32.xlu0 %v2228
    %v2230 = vpop.xlane.xlu0 %2229
    %v2231 = vsel %vm511, %v2219, -inf
    %2232 = vmax.xlane.f32.xlu0 %v2231
    %v2233 = vpop.xlane.xlu0 %2232
    %v2234 = vsel %vm511, %v2222, -inf
    %2235 = vmax.xlane.f32.xlu0 %v2234
    %v2236 = vpop.xlane.xlu0 %2235
    %v2237 = vsub.f32 %v2211, %v2227
    %v2238 = vsub.f32 %v2214, %v2230
    %v2239 = vsub.f32 %v2219, %v2233
    %v2240 = vsub.f32 %v2222, %v2236
    %v2241 = vmul.f32 %v2237, 1.442695
    %v2242 = vpow.pop %v2241
    %v2243 = vmul.f32 %v2238, 1.442695
    %v2244 = vpow.pop %v2243
    %v2245 = vmul.f32 %v2239, 1.442695
    %v2246 = vpow.pop %v2245
    %v2247 = vmul.f32 %v2240, 1.442695
    %v2248 = vpow.pop %v2247
    %v2249 = vsel %vm511, %v2242, 0.0
    %2250 = vadd.xlane.f32.xlu0 %v2249
    %v2251 = vpop.xlane.xlu0 %2250
    %v2252 = vsel %vm511, %v2244, 0.0
    %2253 = vadd.xlane.f32.xlu0 %v2252
    %v2254 = vpop.xlane.xlu0 %2253
    %v2255 = vsel %vm511, %v2246, 0.0
    %2256 = vadd.xlane.f32.xlu0 %v2255
    %v2257 = vpop.xlane.xlu0 %2256
    %v2258 = vsel %vm511, %v2248, 0.0
    %2259 = vadd.xlane.f32.xlu0 %v2258
    %v2260 = vpop.xlane.xlu0 %2259
    %v2261 = vrcp.pop %v2251
    %v2262 = vrcp.pop %v2254
    %v2263 = vrcp.pop %v2257
    %v2264 = vrcp.pop %v2260
    %v2265 = vmul.f32 %v2242, %v2261
    %v2266 = vmul.f32 %v2244, %v2262
    %v2267 = vmul.f32 %v2246, %v2263
    %v2268 = vmul.f32 %v2248, %v2264
    %v2269 = vpack.c.bf16 %v2266, %v2265
    %v2270 = vpack.c.bf16 %v2268, %v2267
    %2271 = vrot.lane.b32.xlu0 %v447, 16
    %v2272 = vpop.permute.xlu0 %2271
    %2273 = vrot.lane.b32.xlu0 %v448, 16
    %v2274 = vpop.permute.xlu0 %2273
    %v2278 = vsel %vm511, %v2269, 0
    %v2281 = vsel %vm511, %v2270, 0
    %2283 = vmatprep.subr.bf16.mxu0 0
    %2284 = vmatpush1.bf16.msra.mxu0 %v2272
    %2285 = vmatprep.subr.bf16.mxu0 0
    %2286 = vmatpush1.bf16.msra.mxu0 %v2274
    %2287 = vmatprep.subr.bf16.mxu0 0
    %2288 = vmatpush1.bf16.msra.mxu0 0
    %2289 = vmatprep.subr.bf16.mxu0 0
    %2290 = vmatpush1.bf16.msra.mxu0 0
    %2291 = vmatprep.subr.bf16.mxu0 0
    %2292 = vmatpush1.bf16.msra.mxu0 0
    %2293 = vmatprep.subr.bf16.mxu0 0
    %2294 = vmatpush1.bf16.msra.mxu0 0
    %2295 = vmatprep.subr.bf16.mxu0 0
    %2296 = vmatpush1.bf16.msra.mxu0 0
    %2297 = vmatprep.subr.bf16.mxu0 0
    %2298 = vmatpush1.bf16.msra.mxu0 0
    %2299 = vmatprep.subr.bf16.mxu0 0
    %2300 = vmatpush1.bf16.msra.mxu0 0
    %2301 = vmatprep.subr.bf16.mxu0 0
    %2302 = vmatpush1.bf16.msra.mxu0 0
    %2303 = vmatprep.subr.bf16.mxu0 0
    %2304 = vmatpush1.bf16.msra.mxu0 0
    %2305 = vmatprep.subr.bf16.mxu0 0
    %2306 = vmatpush1.bf16.msra.mxu0 0
    %2307 = vmatprep.subr.bf16.mxu0 0
    %2308 = vmatpush1.bf16.msra.mxu0 0
    %2309 = vmatprep.subr.bf16.mxu0 0
    %2310 = vmatpush1.bf16.msra.mxu0 0
    %2311 = vmatprep.subr.bf16.mxu0 0
    %2312 = vmatpush1.bf16.msra.mxu0 0
    %2313 = vmatprep.subr.bf16.mxu0 0
    %2314 = vmatpush1.bf16.msra.mxu0 0
    %2315 = vmatprep.mubr.bf16.mxu0 0
    %2316 = vmatmul.mubr.bf16.gmra.mrb[0].mxu0 %v2278
    %v2317 = vpop.f32.mrb[0].mxu0
    %v2318 = vadd.f32 0.0, %v2317
    %v2319 = vpop.f32.mrb[0].mxu0
    %v2320 = vpop.f32.mrb[0].mxu0
    %v2321 = vadd.f32 0.0, %v2320
    %v2322 = vpop.f32.mrb[0].mxu0
    %2323 = vmatprep.mubr.bf16.mxu0 0
    %2324 = vmatmul.mubr.bf16.gmra.mrb[0].mxu0 %v2281
    %v2325 = vpop.f32.mrb[0].mxu0
    %v2326 = vadd.f32 0.0, %v2325
    %v2327 = vpop.f32.mrb[0].mxu0
    %v2328 = vpop.f32.mrb[0].mxu0
    %v2329 = vadd.f32 0.0, %v2328
    %v2330 = vpop.f32.mrb[0].mxu0
    %2331 = vdwg.mxu0
    %v2332 = vpack.c.bf16 %v2321, %v2318
    %v2333 = vpack.c.bf16 %v2329, %v2326
    %s2334 = scalar_lea.vmem [#allocation10], 56
    %v2335 = vld [vmem:[%s2334] sm:$0xf]
    %v2336 = vld [vmem:[%s2334 + $0x4] sm:$0xf]
    %v2339 = vunpack.c.l.b16 %v2335
    %v2340 = vunpack.c.l.b16 %v2336
    %v2341 = vpack.c.b16 %v2340, %v2339
    %v2344 = vsel %vm449, %v2332, 0
    %v2347 = vsel %vm449, %v2333, 0
    %2349 = vmatprep.subr.bf16.mxu0 0
    %2350 = vmatpush1.bf16.msra.mxu0 %v2341
    %2351 = vmatprep.subr.bf16.mxu0 0
    %2352 = vmatpush1.bf16.msra.mxu0 0
    %2353 = vmatprep.subr.bf16.mxu0 0
    %2354 = vmatpush1.bf16.msra.mxu0 0
    %2355 = vmatprep.subr.bf16.mxu0 0
    %2356 = vmatpush1.bf16.msra.mxu0 0
    %2357 = vmatprep.subr.bf16.mxu0 0
    %2358 = vmatpush1.bf16.msra.mxu0 0
    %2359 = vmatprep.subr.bf16.mxu0 0
    %2360 = vmatpush1.bf16.msra.mxu0 0
    %2361 = vmatprep.subr.bf16.mxu0 0
    %2362 = vmatpush1.bf16.msra.mxu0 0
    %2363 = vmatprep.subr.bf16.mxu0 0
    %2364 = vmatpush1.bf16.msra.mxu0 0
    %2365 = vmatprep.subr.bf16.mxu0 0
    %2366 = vmatpush1.bf16.msra.mxu0 0
    %2367 = vmatprep.subr.bf16.mxu0 0
    %2368 = vmatpush1.bf16.msra.mxu0 0
    %2369 = vmatprep.subr.bf16.mxu0 0
    %2370 = vmatpush1.bf16.msra.mxu0 0
    %2371 = vmatprep.subr.bf16.mxu0 0
    %2372 = vmatpush1.bf16.msra.mxu0 0
    %2373 = vmatprep.subr.bf16.mxu0 0
    %2374 = vmatpush1.bf16.msra.mxu0 0
    %2375 = vmatprep.subr.bf16.mxu0 0
    %2376 = vmatpush1.bf16.msra.mxu0 0
    %2377 = vmatprep.subr.bf16.mxu0 0
    %2378 = vmatpush1.bf16.msra.mxu0 0
    %2379 = vmatprep.subr.bf16.mxu0 0
    %2380 = vmatpush1.bf16.msra.mxu0 0
    %2381 = vmatprep.mubr.bf16.mxu0 0
    %2382 = vmatmul.mubr.bf16.gmra.mrb[0].mxu0 %v2344
    %v2383 = vpop.f32.mrb[0].mxu0
    %v2384 = vadd.f32 0.0, %v2383
    %v2385 = vpop.f32.mrb[0].mxu0
    %v2386 = vpop.f32.mrb[0].mxu0
    %v2387 = vadd.f32 0.0, %v2386
    %v2388 = vpop.f32.mrb[0].mxu0
    %2389 = vmatprep.mubr.bf16.mxu0 0
    %2390 = vmatmul.mubr.bf16.gmra.mrb[0].mxu0 %v2347
    %v2391 = vpop.f32.mrb[0].mxu0
    %v2392 = vadd.f32 0.0, %v2391
    %v2393 = vpop.f32.mrb[0].mxu0
    %v2394 = vpop.f32.mrb[0].mxu0
    %v2395 = vadd.f32 0.0, %v2394
    %v2396 = vpop.f32.mrb[0].mxu0
    %2397 = vdwg.mxu0
    %v2398 = vadd.f32 %v2152, %v2384
    %v2399 = vadd.f32 %v2153, %v2387
    %v2400 = vadd.f32 %v2154, %v2392
    %v2401 = vadd.f32 %v2155, %v2395
    %v2402 = vld [vmem:[%s7] sm:$0x1]
    %v2404 = vlaneseq
    %v2405 = vshrl.u32 %v2404, 7
    %v2406 = vsub.s32 0, %v2405
    %v2407 = vrot.slane %v2402, %v2406
    %v2409 = vadd.f32 %v2398, %v2407
    %v2410 = vadd.f32 %v2399, %v2407
    %v2411 = vadd.f32 %v2400, %v2407
    %v2412 = vadd.f32 %v2401, %v2407
    %v2413 = vadd.f32 %v150, %v2409
    %v2414 = vadd.f32 %v151, %v2410
    %v2415 = vadd.f32 %v152, %v2411
    %v2416 = vadd.f32 %v153, %v2412
    %2417 = vadd.xlane.f32.xlu0 %v2413
    %v2418 = vpop.xlane.xlu0 %2417
    %2419 = vadd.xlane.f32.xlu0 %v2414
    %v2420 = vpop.xlane.xlu0 %2419
    %2421 = vadd.xlane.f32.xlu0 %v2415
    %v2422 = vpop.xlane.xlu0 %2421
    %2423 = vadd.xlane.f32.xlu0 %v2416
    %v2424 = vpop.xlane.xlu0 %2423
    %v2425 = vrcp.pop 128.0
    %v2426 = vmul.f32 %v2418, %v2425
    %v2427 = vmul.f32 %v2420, %v2425
    %v2428 = vmul.f32 %v2422, %v2425
    %v2429 = vmul.f32 %v2424, %v2425
    %v2430 = vsub.f32 %v2413, %v2426
    %v2431 = vsub.f32 %v2414, %v2427
    %v2432 = vsub.f32 %v2415, %v2428
    %v2433 = vsub.f32 %v2416, %v2429
    %v2434 = vmul.f32 %v2430, %v2430
    %v2435 = vmul.f32 %v2431, %v2431
    %v2436 = vmul.f32 %v2432, %v2432
    %v2437 = vmul.f32 %v2433, %v2433
    %2438 = vadd.xlane.f32.xlu0 %v2434
    %v2439 = vpop.xlane.xlu0 %2438
    %2440 = vadd.xlane.f32.xlu0 %v2435
    %v2441 = vpop.xlane.xlu0 %2440
    %2442 = vadd.xlane.f32.xlu0 %v2436
    %v2443 = vpop.xlane.xlu0 %2442
    %2444 = vadd.xlane.f32.xlu0 %v2437
    %v2445 = vpop.xlane.xlu0 %2444
    %v2446 = vmul.f32 %v2439, %v2425
    %v2447 = vmul.f32 %v2441, %v2425
    %v2448 = vmul.f32 %v2443, %v2425
    %v2449 = vmul.f32 %v2445, %v2425
    %v2450 = vadd.f32 %v2446, 1e-05
    %v2451 = vadd.f32 %v2447, 1e-05
    %v2452 = vadd.f32 %v2448, 1e-05
    %v2453 = vadd.f32 %v2449, 1e-05
    %v2454 = vrsqrt.pop %v2450
    %v2455 = vrsqrt.pop %v2451
    %v2456 = vrsqrt.pop %v2452
    %v2457 = vrsqrt.pop %v2453
    %v2458 = vmul.f32 %v2430, %v2454
    %v2459 = vmul.f32 %v2431, %v2455
    %v2460 = vmul.f32 %v2432, %v2456
    %v2461 = vmul.f32 %v2433, %v2457
    %v2462 = vld [vmem:[%s8] sm:$0x1]
    %v2464 = vlaneseq
    %v2465 = vshrl.u32 %v2464, 7
    %v2466 = vsub.s32 0, %v2465
    %v2467 = vrot.slane %v2462, %v2466
    %v2469 = vmul.f32 %v2458, %v2467
    %v2470 = vmul.f32 %v2459, %v2467
    %v2471 = vmul.f32 %v2460, %v2467
    %v2472 = vmul.f32 %v2461, %v2467
    %v2473 = vld [vmem:[%s9] sm:$0x1]
    %v2475 = vlaneseq
    %v2476 = vshrl.u32 %v2475, 7
    %v2477 = vsub.s32 0, %v2476
    %v2478 = vrot.slane %v2473, %v2477
    %v2480 = vadd.f32 %v2469, %v2478
    %v2481 = vadd.f32 %v2470, %v2478
    %v2482 = vadd.f32 %v2471, %v2478
    %v2483 = vadd.f32 %v2472, %v2478
    %v2484 = vpack.c.bf16 %v2481, %v2480
    %v2485 = vpack.c.bf16 %v2483, %v2482
    %v2486 = vld [vmem:[#allocation11] sm:$0xff]
    %v2487 = vld [vmem:[#allocation11 + $0x8] sm:$0xff]
    %v2488 = vld [vmem:[#allocation11 + $0x10] sm:$0xff]
    %v2489 = vld [vmem:[#allocation11 + $0x18] sm:$0xff]
    %v2490 = vld [vmem:[#allocation11 + $0x20] sm:$0xff]
    %v2491 = vld [vmem:[#allocation11 + $0x28] sm:$0xff]
    %v2492 = vld [vmem:[#allocation11 + $0x30] sm:$0xff]
    %v2493 = vld [vmem:[#allocation11 + $0x38] sm:$0xff]
    %v2494 = vld [vmem:[#allocation11 + $0x40] sm:$0xff]
    %v2495 = vld [vmem:[#allocation11 + $0x48] sm:$0xff]
    %v2496 = vld [vmem:[#allocation11 + $0x50] sm:$0xff]
    %v2497 = vld [vmem:[#allocation11 + $0x58] sm:$0xff]
    %v2498 = vld [vmem:[#allocation11 + $0x60] sm:$0xff]
    %v2499 = vld [vmem:[#allocation11 + $0x68] sm:$0xff]
    %v2500 = vld [vmem:[#allocation11 + $0x70] sm:$0xff]
    %v2501 = vld [vmem:[#allocation11 + $0x78] sm:$0xff]
    %v2502 = vld [vmem:[%s11] sm:$0x3]
    %v2504 = vlaneseq
    %v2505 = vshrl.u32 %v2504, 7
    %v2506 = vsub.s32 0, %v2505
    %v2507 = vrot.slane %v2502, %v2506
    %v2508 = vlaneseq
    %v2509 = vshrl.u32 %v2508, 7
    %v2510 = vsub.s32 1, %v2509
    %v2511 = vrot.slane %v2502, %v2510
    %v2530 = vunpack.c.l.b16 %v2486
    %v2531 = vunpack.c.h.b16 %v2486
    %v2532 = vunpack.c.l.b16 %v2487
    %v2533 = vunpack.c.h.b16 %v2487
    %v2534 = vunpack.c.l.b16 %v2488
    %v2535 = vunpack.c.h.b16 %v2488
    %v2536 = vunpack.c.l.b16 %v2489
    %v2537 = vunpack.c.h.b16 %v2489
    %v2538 = vunpack.c.l.b16 %v2490
    %v2539 = vunpack.c.h.b16 %v2490
    %v2540 = vunpack.c.l.b16 %v2491
    %v2541 = vunpack.c.h.b16 %v2491
    %v2542 = vunpack.c.l.b16 %v2492
    %v2543 = vunpack.c.h.b16 %v2492
    %v2544 = vunpack.c.l.b16 %v2493
    %v2545 = vunpack.c.h.b16 %v2493
    %v2546 = vunpack.c.l.b16 %v2494
    %v2547 = vunpack.c.h.b16 %v2494
    %v2548 = vunpack.c.l.b16 %v2495
    %v2549 = vunpack.c.h.b16 %v2495
    %v2550 = vunpack.c.l.b16 %v2496
    %v2551 = vunpack.c.h.b16 %v2496
    %v2552 = vunpack.c.l.b16 %v2497
    %v2553 = vunpack.c.h.b16 %v2497
    %v2554 = vunpack.c.l.b16 %v2498
    %v2555 = vunpack.c.h.b16 %v2498
    %v2556 = vunpack.c.l.b16 %v2499
    %v2557 = vunpack.c.h.b16 %v2499
    %v2558 = vunpack.c.l.b16 %v2500
    %v2559 = vunpack.c.h.b16 %v2500
    %v2560 = vunpack.c.l.b16 %v2501
    %v2561 = vunpack.c.h.b16 %v2501
    %v2562 = vpack.c.b16 %v2532, %v2530
    %v2563 = vpack.c.b16 %v2533, %v2531
    %v2564 = vpack.c.b16 %v2536, %v2534
    %v2565 = vpack.c.b16 %v2537, %v2535
    %v2566 = vpack.c.b16 %v2540, %v2538
    %v2567 = vpack.c.b16 %v2541, %v2539
    %v2568 = vpack.c.b16 %v2544, %v2542
    %v2569 = vpack.c.b16 %v2545, %v2543
    %v2570 = vpack.c.b16 %v2548, %v2546
    %v2571 = vpack.c.b16 %v2549, %v2547
    %v2572 = vpack.c.b16 %v2552, %v2550
    %v2573 = vpack.c.b16 %v2553, %v2551
    %v2574 = vpack.c.b16 %v2556, %v2554
    %v2575 = vpack.c.b16 %v2557, %v2555
    %v2576 = vpack.c.b16 %v2560, %v2558
    %v2577 = vpack.c.b16 %v2561, %v2559
    %2594 = vmatprep.subr.bf16.mxu0 %v2563
    %2595 = vmatpush1.bf16.msra.mxu0 %v2562
    %2596 = vmatprep.subr.bf16.mxu0 %v2565
    %2597 = vmatpush1.bf16.msra.mxu0 %v2564
    %2598 = vmatprep.subr.bf16.mxu0 %v2567
    %2599 = vmatpush1.bf16.msra.mxu0 %v2566
    %2600 = vmatprep.subr.bf16.mxu0 %v2569
    %2601 = vmatpush1.bf16.msra.mxu0 %v2568
    %2602 = vmatprep.subr.bf16.mxu0 %v2571
    %2603 = vmatpush1.bf16.msra.mxu0 %v2570
    %2604 = vmatprep.subr.bf16.mxu0 %v2573
    %2605 = vmatpush1.bf16.msra.mxu0 %v2572
    %2606 = vmatprep.subr.bf16.mxu0 %v2575
    %2607 = vmatpush1.bf16.msra.mxu0 %v2574
    %2608 = vmatprep.subr.bf16.mxu0 %v2577
    %2609 = vmatpush1.bf16.msra.mxu0 %v2576
    %2610 = vmatprep.subr.bf16.mxu0 0
    %2611 = vmatpush1.bf16.msra.mxu0 0
    %2612 = vmatprep.subr.bf16.mxu0 0
    %2613 = vmatpush1.bf16.msra.mxu0 0
    %2614 = vmatprep.subr.bf16.mxu0 0
    %2615 = vmatpush1.bf16.msra.mxu0 0
    %2616 = vmatprep.subr.bf16.mxu0 0
    %2617 = vmatpush1.bf16.msra.mxu0 0
    %2618 = vmatprep.subr.bf16.mxu0 0
    %2619 = vmatpush1.bf16.msra.mxu0 0
    %2620 = vmatprep.subr.bf16.mxu0 0
    %2621 = vmatpush1.bf16.msra.mxu0 0
    %2622 = vmatprep.subr.bf16.mxu0 0
    %2623 = vmatpush1.bf16.msra.mxu0 0
    %2624 = vmatprep.subr.bf16.mxu0 0
    %2625 = vmatpush1.bf16.msra.mxu0 0
    %2626 = vmatprep.mubr.bf16.mxu0 0
    %2627 = vmatmul.mubr.bf16.gmra.mrb[0].mxu0 %v2484
    %v2628 = vpop.f32.mrb[0].mxu0
    %v2629 = vadd.f32 %v2507, %v2628
    %v2630 = vpop.f32.mrb[0].mxu0
    %v2631 = vadd.f32 %v2511, %v2630
    %v2632 = vpop.f32.mrb[0].mxu0
    %v2633 = vadd.f32 %v2507, %v2632
    %v2634 = vpop.f32.mrb[0].mxu0
    %v2635 = vadd.f32 %v2511, %v2634
    %2636 = vmatprep.mubr.bf16.mxu0 0
    %2637 = vmatmul.mubr.bf16.gmra.mrb[0].mxu0 %v2485
    %v2638 = vpop.f32.mrb[0].mxu0
    %v2639 = vadd.f32 %v2507, %v2638
    %v2640 = vpop.f32.mrb[0].mxu0
    %v2641 = vadd.f32 %v2511, %v2640
    %v2642 = vpop.f32.mrb[0].mxu0
    %v2643 = vadd.f32 %v2507, %v2642
    %v2644 = vpop.f32.mrb[0].mxu0
    %v2645 = vadd.f32 %v2511, %v2644
    %2646 = vdwg.mxu0
    %v2647 = vmax.f32 %v2629, 0.0
    %v2648 = vmax.f32 %v2631, 0.0
    %v2649 = vmax.f32 %v2633, 0.0
    %v2650 = vmax.f32 %v2635, 0.0
    %v2651 = vmax.f32 %v2639, 0.0
    %v2652 = vmax.f32 %v2641, 0.0
    %v2653 = vmax.f32 %v2643, 0.0
    %v2654 = vmax.f32 %v2645, 0.0
    %v2655 = vpack.c.bf16 %v2649, %v2647
    %v2656 = vpack.c.bf16 %v2650, %v2648
    %v2657 = vpack.c.bf16 %v2653, %v2651
    %v2658 = vpack.c.bf16 %v2654, %v2652
    %v2659 = vld [vmem:[#allocation13] sm:$0xf]
    %v2660 = vld [vmem:[#allocation13 + $0x4] sm:$0xf]
    %v2661 = vld [vmem:[#allocation13 + $0x8] sm:$0xf]
    %v2662 = vld [vmem:[#allocation13 + $0xc] sm:$0xf]
    %v2663 = vld [vmem:[#allocation13 + $0x10] sm:$0xf]
    %v2664 = vld [vmem:[#allocation13 + $0x14] sm:$0xf]
    %v2665 = vld [vmem:[#allocation13 + $0x18] sm:$0xf]
    %v2666 = vld [vmem:[#allocation13 + $0x1c] sm:$0xf]
    %v2667 = vld [vmem:[#allocation13 + $0x20] sm:$0xf]
    %v2668 = vld [vmem:[#allocation13 + $0x24] sm:$0xf]
    %v2669 = vld [vmem:[#allocation13 + $0x28] sm:$0xf]
    %v2670 = vld [vmem:[#allocation13 + $0x2c] sm:$0xf]
    %v2671 = vld [vmem:[#allocation13 + $0x30] sm:$0xf]
    %v2672 = vld [vmem:[#allocation13 + $0x34] sm:$0xf]
    %v2673 = vld [vmem:[#allocation13 + $0x38] sm:$0xf]
    %v2674 = vld [vmem:[#allocation13 + $0x3c] sm:$0xf]
    %v2675 = vld [vmem:[#allocation13 + $0x40] sm:$0xf]
    %v2676 = vld [vmem:[#allocation13 + $0x44] sm:$0xf]
    %v2677 = vld [vmem:[#allocation13 + $0x48] sm:$0xf]
    %v2678 = vld [vmem:[#allocation13 + $0x4c] sm:$0xf]
    %v2679 = vld [vmem:[#allocation13 + $0x50] sm:$0xf]
    %v2680 = vld [vmem:[#allocation13 + $0x54] sm:$0xf]
    %v2681 = vld [vmem:[#allocation13 + $0x58] sm:$0xf]
    %v2682 = vld [vmem:[#allocation13 + $0x5c] sm:$0xf]
    %v2683 = vld [vmem:[#allocation13 + $0x60] sm:$0xf]
    %v2684 = vld [vmem:[#allocation13 + $0x64] sm:$0xf]
    %v2685 = vld [vmem:[#allocation13 + $0x68] sm:$0xf]
    %v2686 = vld [vmem:[#allocation13 + $0x6c] sm:$0xf]
    %v2687 = vld [vmem:[#allocation13 + $0x70] sm:$0xf]
    %v2688 = vld [vmem:[#allocation13 + $0x74] sm:$0xf]
    %v2689 = vld [vmem:[#allocation13 + $0x78] sm:$0xf]
    %v2690 = vld [vmem:[#allocation13 + $0x7c] sm:$0xf]
    %v2691 = vld [vmem:[%s13] sm:$0x1]
    %v2693 = vlaneseq
    %v2694 = vshrl.u32 %v2693, 7
    %v2695 = vsub.s32 0, %v2694
    %v2696 = vrot.slane %v2691, %v2695
    %v2730 = vunpack.c.l.b16 %v2659
    %v2731 = vunpack.c.l.b16 %v2660
    %v2732 = vunpack.c.l.b16 %v2661
    %v2733 = vunpack.c.l.b16 %v2662
    %v2734 = vunpack.c.l.b16 %v2663
    %v2735 = vunpack.c.l.b16 %v2664
    %v2736 = vunpack.c.l.b16 %v2665
    %v2737 = vunpack.c.l.b16 %v2666
    %v2738 = vunpack.c.l.b16 %v2667
    %v2739 = vunpack.c.l.b16 %v2668
    %v2740 = vunpack.c.l.b16 %v2669
    %v2741 = vunpack.c.l.b16 %v2670
    %v2742 = vunpack.c.l.b16 %v2671
    %v2743 = vunpack.c.l.b16 %v2672
    %v2744 = vunpack.c.l.b16 %v2673
    %v2745 = vunpack.c.l.b16 %v2674
    %v2746 = vunpack.c.l.b16 %v2675
    %v2747 = vunpack.c.l.b16 %v2676
    %v2748 = vunpack.c.l.b16 %v2677
    %v2749 = vunpack.c.l.b16 %v2678
    %v2750 = vunpack.c.l.b16 %v2679
    %v2751 = vunpack.c.l.b16 %v2680
    %v2752 = vunpack.c.l.b16 %v2681
    %v2753 = vunpack.c.l.b16 %v2682
    %v2754 = vunpack.c.l.b16 %v2683
    %v2755 = vunpack.c.l.b16 %v2684
    %v2756 = vunpack.c.l.b16 %v2685
    %v2757 = vunpack.c.l.b16 %v2686
    %v2758 = vunpack.c.l.b16 %v2687
    %v2759 = vunpack.c.l.b16 %v2688
    %v2760 = vunpack.c.l.b16 %v2689
    %v2761 = vunpack.c.l.b16 %v2690
    %v2762 = vpack.c.b16 %v2731, %v2730
    %v2763 = vpack.c.b16 %v2733, %v2732
    %v2764 = vpack.c.b16 %v2735, %v2734
    %v2765 = vpack.c.b16 %v2737, %v2736
    %v2766 = vpack.c.b16 %v2739, %v2738
    %v2767 = vpack.c.b16 %v2741, %v2740
    %v2768 = vpack.c.b16 %v2743, %v2742
    %v2769 = vpack.c.b16 %v2745, %v2744
    %v2770 = vpack.c.b16 %v2747, %v2746
    %v2771 = vpack.c.b16 %v2749, %v2748
    %v2772 = vpack.c.b16 %v2751, %v2750
    %v2773 = vpack.c.b16 %v2753, %v2752
    %v2774 = vpack.c.b16 %v2755, %v2754
    %v2775 = vpack.c.b16 %v2757, %v2756
    %v2776 = vpack.c.b16 %v2759, %v2758
    %v2777 = vpack.c.b16 %v2761, %v2760
    %2794 = vmatprep.subr.bf16.mxu0 0
    %2795 = vmatpush1.bf16.msra.mxu0 %v2762
    %2796 = vmatprep.subr.bf16.mxu0 0
    %2797 = vmatpush1.bf16.msra.mxu0 %v2763
    %2798 = vmatprep.subr.bf16.mxu0 0
    %2799 = vmatpush1.bf16.msra.mxu0 %v2764
    %2800 = vmatprep.subr.bf16.mxu0 0
    %2801 = vmatpush1.bf16.msra.mxu0 %v2765
    %2802 = vmatprep.subr.bf16.mxu0 0
    %2803 = vmatpush1.bf16.msra.mxu0 %v2766
    %2804 = vmatprep.subr.bf16.mxu0 0
    %2805 = vmatpush1.bf16.msra.mxu0 %v2767
    %2806 = vmatprep.subr.bf16.mxu0 0
    %2807 = vmatpush1.bf16.msra.mxu0 %v2768
    %2808 = vmatprep.subr.bf16.mxu0 0
    %2809 = vmatpush1.bf16.msra.mxu0 %v2769
    %2810 = vmatprep.subr.bf16.mxu0 0
    %2811 = vmatpush1.bf16.msra.mxu0 %v2770
    %2812 = vmatprep.subr.bf16.mxu0 0
    %2813 = vmatpush1.bf16.msra.mxu0 %v2771
    %2814 = vmatprep.subr.bf16.mxu0 0
    %2815 = vmatpush1.bf16.msra.mxu0 %v2772
    %2816 = vmatprep.subr.bf16.mxu0 0
    %2817 = vmatpush1.bf16.msra.mxu0 %v2773
    %2818 = vmatprep.subr.bf16.mxu0 0
    %2819 = vmatpush1.bf16.msra.mxu0 %v2774
    %2820 = vmatprep.subr.bf16.mxu0 0
    %2821 = vmatpush1.bf16.msra.mxu0 %v2775
    %2822 = vmatprep.subr.bf16.mxu0 0
    %2823 = vmatpush1.bf16.msra.mxu0 %v2776
    %2824 = vmatprep.subr.bf16.mxu0 0
    %2825 = vmatpush1.bf16.msra.mxu0 %v2777
    %2826 = vmatprep.mubr.bf16.mxu0 %v2656
    %2827 = vmatmul.mubr.bf16.gmra.mrb[0].mxu0 %v2655
    %v2828 = vpop.f32.mrb[0].mxu0
    %v2829 = vadd.f32 %v2696, %v2828
    %v2830 = vpop.f32.mrb[0].mxu0
    %v2831 = vpop.f32.mrb[0].mxu0
    %v2832 = vadd.f32 %v2696, %v2831
    %v2833 = vpop.f32.mrb[0].mxu0
    %2834 = vmatprep.mubr.bf16.mxu0 %v2658
    %2835 = vmatmul.mubr.bf16.gmra.mrb[0].mxu0 %v2657
    %v2836 = vpop.f32.mrb[0].mxu0
    %v2837 = vadd.f32 %v2696, %v2836
    %v2838 = vpop.f32.mrb[0].mxu0
    %v2839 = vpop.f32.mrb[0].mxu0
    %v2840 = vadd.f32 %v2696, %v2839
    %v2841 = vpop.f32.mrb[0].mxu0
    %2842 = vdwg.mxu0
    %v2843 = vadd.f32 %v2480, %v2829
    %v2844 = vadd.f32 %v2481, %v2832
    %v2845 = vadd.f32 %v2482, %v2837
    %v2846 = vadd.f32 %v2483, %v2840
    %2847 = vadd.xlane.f32.xlu0 %v2843
    %v2848 = vpop.xlane.xlu0 %2847
    %2849 = vadd.xlane.f32.xlu0 %v2844
    %v2850 = vpop.xlane.xlu0 %2849
    %2851 = vadd.xlane.f32.xlu0 %v2845
    %v2852 = vpop.xlane.xlu0 %2851
    %2853 = vadd.xlane.f32.xlu0 %v2846
    %v2854 = vpop.xlane.xlu0 %2853
    %v2855 = vmul.f32 %v2848, %v2425
    %v2856 = vmul.f32 %v2850, %v2425
    %v2857 = vmul.f32 %v2852, %v2425
    %v2858 = vmul.f32 %v2854, %v2425
    %v2859 = vsub.f32 %v2843, %v2855
    %v2860 = vsub.f32 %v2844, %v2856
    %v2861 = vsub.f32 %v2845, %v2857
    %v2862 = vsub.f32 %v2846, %v2858
    %v2863 = vmul.f32 %v2859, %v2859
    %v2864 = vmul.f32 %v2860, %v2860
    %v2865 = vmul.f32 %v2861, %v2861
    %v2866 = vmul.f32 %v2862, %v2862
    %2867 = vadd.xlane.f32.xlu0 %v2863
    %v2868 = vpop.xlane.xlu0 %2867
    %2869 = vadd.xlane.f32.xlu0 %v2864
    %v2870 = vpop.xlane.xlu0 %2869
    %2871 = vadd.xlane.f32.xlu0 %v2865
    %v2872 = vpop.xlane.xlu0 %2871
    %2873 = vadd.xlane.f32.xlu0 %v2866
    %v2874 = vpop.xlane.xlu0 %2873
    %v2875 = vmul.f32 %v2868, %v2425
    %v2876 = vmul.f32 %v2870, %v2425
    %v2877 = vmul.f32 %v2872, %v2425
    %v2878 = vmul.f32 %v2874, %v2425
    %v2879 = vadd.f32 %v2875, 1e-05
    %v2880 = vadd.f32 %v2876, 1e-05
    %v2881 = vadd.f32 %v2877, 1e-05
    %v2882 = vadd.f32 %v2878, 1e-05
    %v2883 = vrsqrt.pop %v2879
    %v2884 = vrsqrt.pop %v2880
    %v2885 = vrsqrt.pop %v2881
    %v2886 = vrsqrt.pop %v2882
    %v2887 = vmul.f32 %v2859, %v2883
    %v2888 = vmul.f32 %v2860, %v2884
    %v2889 = vmul.f32 %v2861, %v2885
    %v2890 = vmul.f32 %v2862, %v2886
    %v2891 = vld [vmem:[%s14] sm:$0x1]
    %v2893 = vlaneseq
    %v2894 = vshrl.u32 %v2893, 7
    %v2895 = vsub.s32 0, %v2894
    %v2896 = vrot.slane %v2891, %v2895
    %v2898 = vmul.f32 %v2887, %v2896
    %v2899 = vmul.f32 %v2888, %v2896
    %v2900 = vmul.f32 %v2889, %v2896
    %v2901 = vmul.f32 %v2890, %v2896
    %v2902 = vld [vmem:[%s15] sm:$0x1]
    %v2904 = vlaneseq
    %v2905 = vshrl.u32 %v2904, 7
    %v2906 = vsub.s32 0, %v2905
    %v2907 = vrot.slane %v2902, %v2906
    %v2909 = vadd.f32 %v2898, %v2907
    %v2910 = vadd.f32 %v2899, %v2907
    %v2911 = vadd.f32 %v2900, %v2907
    %v2912 = vadd.f32 %v2901, %v2907
    %2913 = vst [vmem:[#allocation14] sm:$0xff] %v2909
    %2914 = vst [vmem:[#allocation14 + $0x8] sm:$0xff] %v2910
    %2915 = vst [vmem:[#allocation14 + $0x10] sm:$0xff] %v2911
    %2916 = vst [vmem:[#allocation14 + $0x18] sm:$0xff] %v2912
    // Predicated region
    $region94: #{tpu_custom_call.1} parent=1 // pred_check
      _
    $region95: #{tpu_custom_call.1} parent=1 // pred_check_branch
      %2918 = sbr.rel (0) target = $region97
    $region96: #{tpu_custom_call.1} parent=1 // pred_region
      %s2920 = ssub.s32 512, 512
      %2921 = vsyncadd [#allocation4], %s2920
      %s2922 = sshll.u32 [#allocation14], 4
      %s2923 = int_to_ptr.vmem [resolvable:$true] %s2922
      %2928 = dma.vmem_to_hbm [thread:$0]  %s2923, 512, %s16, [#allocation4], 128, 128, 8
    $region97: #{tpu_custom_call.1} parent=1 // pred_fallthru
      _
    // Predicated region
    $region98: #{tpu_custom_call.1} parent=1 // pred_check
      _
    $region99: #{tpu_custom_call.1} parent=1 // pred_check_branch
      %2930 = sbr.rel (0) target = $region101
    $region100: #{tpu_custom_call.1} parent=1 // pred_region
      %2931 = dma.done [#allocation4], 512
    $region101: #{tpu_custom_call.1} parent=1 // pred_fallthru
      _
    %2932 = vsyncpa [#allocation3], 1
    %2933 = vsyncpa [#allocation6], 1
    %2934 = vsyncpa [#allocation9], 1
    %2935 = vsyncpa [#allocation12], 1
    %2936 = vsyncpa [#allocation4], 1

</llo_original>
